<compile_context>
chip_gen: v7x
topology: tpu7x:2x2x1
jax: 0.10.0
libtpu: 0.0.40
codegen_flags: <defaults>
</compile_context>

<pallas_src>
import jax
import jax.numpy as jnp
import numpy as np
from jax.experimental import pallas as pl
from jax.experimental.pallas import tpu as pltpu


def _round_up(x, m):
    return ((x + m - 1) // m) * m


# --------------------------------------------------------------------------
# Kernel: one grid step == the whole T-step recurrence for one sequence group
# --------------------------------------------------------------------------
def _mtrnn_seq_kernel(x_ref, wx_ref, wh_ref, inv_tau_ref, h0_ref, u0_ref,
                      h_out_ref, u_out_ref, dx_scr, h_scr, u_scr):
    seq_len, m_rows, n_pad = dx_scr.shape
    input_dim = x_ref.shape[-1]

    # ---- hoisted input projection: one MXU pass over all T*M rows ---------
    xm = x_ref[...].reshape(seq_len * m_rows, input_dim)
    dx = jnp.dot(xm, wx_ref[...],
                 preferred_element_type=jnp.float32,
                 precision=jax.lax.Precision.HIGHEST)
    dx_scr[...] = dx.reshape(seq_len, m_rows, n_pad)

    # ---- seed the recurrent carry ------------------------------------------
    h_scr[...] = h0_ref[...]
    u_scr[...] = u0_ref[...]

    wh = wh_ref[...]                # (n_pad, n_pad), resident in VMEM
    inv_tau = inv_tau_ref[...]      # (1, n_pad), broadcasts over the M rows
    decay = 1.0 - inv_tau

    # TODO(synk): optional bias / pb terms (module defaults: use_bias=False,
    # use_pb=False) would be extra per-lane adds folded into `drive` here.

    # ---- serial recurrence, entirely in VMEM -------------------------------
    def step(t, carry):
        drive = dx_scr[t] + jnp.dot(h_scr[...], wh,
                                    preferred_element_type=jnp.float32,
                                    precision=jax.lax.Precision.HIGHEST)
        new_u = decay * u_scr[...] + inv_tau * drive
        new_h = jnp.tanh(new_u)
        h_scr[...] = new_h
        u_scr[...] = new_u
        h_out_ref[t] = new_h        # 128-lane-dense -> unmasked stores
        u_out_ref[t] = new_u
        return carry

    jax.lax.fori_loop(0, seq_len, step, 0,
                      unroll=True if seq_len <= 32 else False)


# --------------------------------------------------------------------------
# Parameter packing (done once, not per step)
# --------------------------------------------------------------------------
def pack_params(weights, input_dim, fast_dim, slow_dim, fast_tau, slow_tau):
    """Pack the five (in, out) matrices into lane-dense padded blocks.

    W_x : (input_dim, n_pad)  -- x->fast, x->slow block is exactly zero
    W_h : (n_pad, n_pad)      -- [[f2f, f2s], [s2f, s2s]] with zero padding
    inv_tau : (1, n_pad)      -- 1/fast_tau | 1/slow_tau | 0 on pad lanes
    """
    n = fast_dim + slow_dim
    n_pad = _round_up(n, 128)

    wx = jnp.zeros((input_dim, n_pad), jnp.float32)
    wx = wx.at[:, :fast_dim].set(weights["i2f"].astype(jnp.float32))

    wh = jnp.zeros((n_pad, n_pad), jnp.float32)
    wh = wh.at[:fast_dim, :fast_dim].set(weights["f2f"].astype(jnp.float32))
    wh = wh.at[:fast_dim, fast_dim:n].set(weights["f2s"].astype(jnp.float32))
    wh = wh.at[fast_dim:n, :fast_dim].set(weights["s2f"].astype(jnp.float32))
    wh = wh.at[fast_dim:n, fast_dim:n].set(weights["s2s"].astype(jnp.float32))

    inv_tau = jnp.concatenate([
        jnp.full((fast_dim,), 1.0 / float(fast_tau), jnp.float32),
        jnp.full((slow_dim,), 1.0 / float(slow_tau), jnp.float32),
        jnp.zeros((n_pad - n,), jnp.float32),
    ]).reshape(1, n_pad)
    return wx, wh, inv_tau, n_pad


# --------------------------------------------------------------------------
# Public wrappers
# --------------------------------------------------------------------------
def mtrnn_scan(xs, state0, weights, *, fast_tau, slow_tau, num_groups=None):
    """Run the MTRNN cell over full sequences with a single pallas_call.

    xs:      (S, T, B, input_dim) f32 -- S independent sequences
    state0:  None or tuple (h_fast, h_slow, u_fast, u_slow), each (S, B, dim)
    returns: tuple (h_fast, h_slow, u_fast, u_slow), each (S, T, B, dim)
    """
    S, T, B, input_dim = xs.shape
    fast_dim = weights["f2f"].shape[0]
    slow_dim = weights["s2s"].shape[0]
    n = fast_dim + slow_dim

    if num_groups is None:
        num_groups = 2 if (S % 2 == 0 and S >= 2) else 1
    G = num_groups
    assert S % G == 0, "num_groups must divide the number of sequences"
    sg = S // G                       # sequences folded into each group's batch
    M = sg * B
    M_pad = _round_up(M, 8)

    wx, wh, inv_tau, n_pad = pack_params(
        weights, input_dim, fast_dim, slow_dim, fast_tau, slow_tau)

    if state0 is None:
        h_f = jnp.zeros((S, B, fast_dim), jnp.float32)
        h_s = jnp.zeros((S, B, slow_dim), jnp.float32)
        u_f = jnp.zeros((S, B, fast_dim), jnp.float32)
        u_s = jnp.zeros((S, B, slow_dim), jnp.float32)
    else:
        h_f, h_s, u_f, u_s = state0

    # ---- layout plumbing (cheap XLA ops, once per call) ---------------------
    def group_x(a):                   # (S, T, B, I) -> (G, T, M_pad, I)
        a = a.reshape(G, sg, T, B, input_dim).transpose(0, 2, 1, 3, 4)
        a = a.reshape(G, T, M, input_dim)
        if M_pad != M:
            a = jnp.pad(a, ((0, 0), (0, 0), (0, M_pad - M), (0, 0)))
        return a

    def group_state(fast_part, slow_part):   # -> (G, M_pad, n_pad), lane-padded
        pad = jnp.zeros((S, B, n_pad - n), jnp.float32)
        full = jnp.concatenate(
            [fast_part.astype(jnp.float32), slow_part.astype(jnp.float32), pad],
            axis=-1)                                            # (S, B, n_pad)
        full = full.reshape(G, sg, B, n_pad).reshape(G, M, n_pad)
        if M_pad != M:
            full = jnp.pad(full, ((0, 0), (0, M_pad - M), (0, 0)))
        return full

    xg = group_x(xs.astype(jnp.float32))
    h0 = group_state(h_f, h_s)
    u0 = group_state(u_f, u_s)

    # TODO(synk): for very long sequences add a time-chunk grid axis so the
    # x / drive_x / output slabs stay under ~32 MiB scoped VMEM (v7x).
    h_out, u_out = pl.pallas_call(
        _mtrnn_seq_kernel,
        out_shape=(jax.ShapeDtypeStruct((G, T, M_pad, n_pad), jnp.float32),
                   jax.ShapeDtypeStruct((G, T, M_pad, n_pad), jnp.float32)),
        grid_spec=pltpu.PrefetchScalarGridSpec(
            num_scalar_prefetch=0,
            grid=(G,),
            in_specs=[
                # per-group whole-sequence input slab
                pl.BlockSpec((None, T, M_pad, input_dim), lambda g: (g, 0, 0, 0)),
                # packed weights / inv_tau: constant index_map -> VMEM-resident
                pl.BlockSpec((input_dim, n_pad), lambda g: (0, 0)),
                pl.BlockSpec((n_pad, n_pad), lambda g: (0, 0)),
                pl.BlockSpec((1, n_pad), lambda g: (0, 0)),
                # per-group initial state (lane-padded h and u blocks)
                pl.BlockSpec((None, M_pad, n_pad), lambda g: (g, 0, 0)),
                pl.BlockSpec((None, M_pad, n_pad), lambda g: (g, 0, 0)),
            ],
            out_specs=[
                pl.BlockSpec((None, T, M_pad, n_pad), lambda g: (g, 0, 0, 0)),
                pl.BlockSpec((None, T, M_pad, n_pad), lambda g: (g, 0, 0, 0)),
            ],
            scratch_shapes=[
                pltpu.VMEM((T, M_pad, n_pad), jnp.float32),   # drive_x, all t
                pltpu.VMEM((M_pad, n_pad), jnp.float32),      # h carry
                pltpu.VMEM((M_pad, n_pad), jnp.float32),      # u carry
            ],
        ),
        compiler_params=pltpu.CompilerParams(
            dimension_semantics=("parallel",)),   # groups -> v7x 2nd TC
    )(xg, wx, wh, inv_tau, h0, u0)

    def ungroup(a):                   # (G, T, M_pad, n_pad) -> (S, T, B, n_pad)
        a = a[:, :, :M, :].reshape(G, T, sg, B, n_pad)
        return a.transpose(0, 2, 1, 3, 4).reshape(S, T, B, n_pad)

    h_all = ungroup(h_out)
    u_all = ungroup(u_out)
    return (h_all[..., :fast_dim], h_all[..., fast_dim:n],
            u_all[..., :fast_dim], u_all[..., fast_dim:n])


def mtrnn_cell(x, state, weights, *, fast_tau, slow_tau):
    """Single-step API matching MTRNNCell.forward (the S=1, T=1 case)."""
    state0 = None if state is None else tuple(s[None] for s in state)
    outs = mtrnn_scan(x[None, None], state0, weights,
                      fast_tau=fast_tau, slow_tau=slow_tau, num_groups=1)
    return tuple(o[0, 0] for o in outs)


# --------------------------------------------------------------------------
# Pure-JAX reference (mirrors the PyTorch forward, step by step)
# --------------------------------------------------------------------------
def _reference_seq(xs, state0, weights, fast_tau, slow_tau):
    hi = jax.lax.Precision.HIGHEST
    h_f, h_s, u_f, u_s = state0
    hf, hs, uf, us = [], [], [], []
    for t in range(xs.shape[0]):
        x = xs[t]
        fast_in = (jnp.dot(x, weights["i2f"], precision=hi)
                   + jnp.dot(h_f, weights["f2f"], precision=hi)
                   + jnp.dot(h_s, weights["s2f"], precision=hi))
        slow_in = (jnp.dot(h_f, weights["f2s"], precision=hi)
                   + jnp.dot(h_s, weights["s2s"], precision=hi))
        u_f = (1.0 - 1.0 / fast_tau) * u_f + (1.0 / fast_tau) * fast_in
        u_s = (1.0 - 1.0 / slow_tau) * u_s + (1.0 / slow_tau) * slow_in
        h_f = jnp.tanh(u_f)
        h_s = jnp.tanh(u_s)
        hf.append(h_f); hs.append(h_s); uf.append(u_f); us.append(u_s)
    return (jnp.stack(hf), jnp.stack(hs), jnp.stack(uf), jnp.stack(us))


if __name__ == "__main__":
    # Small, module-consistent shapes.
    num_seqs = 4       # folded into matmul M dim; 2 groups -> v7x core split
    seq_len = 6
    batch = 8
    input_dim = 32
    fast_dim = 64
    slow_dim = 32
    fast_tau = 2.0
    slow_tau = 12.0

    key = jax.random.PRNGKey(0)
    keys = jax.random.split(key, 10)

    xs = jax.random.normal(keys[0], (num_seqs, seq_len, batch, input_dim), jnp.float32)
    h_fast = jax.random.normal(keys[1], (num_seqs, batch, fast_dim), jnp.float32)
    h_slow = jax.random.normal(keys[2], (num_seqs, batch, slow_dim), jnp.float32)
    u_fast = jax.random.normal(keys[3], (num_seqs, batch, fast_dim), jnp.float32)
    u_slow = jax.random.normal(keys[4], (num_seqs, batch, slow_dim), jnp.float32)

    def init_w(k, fan_in, fan_out):
        bound = 1.0 / np.sqrt(fan_in)
        return jax.random.uniform(k, (fan_in, fan_out), jnp.float32, -bound, bound)

    weights = {
        "i2f": init_w(keys[5], input_dim, fast_dim),
        "f2f": init_w(keys[6], fast_dim, fast_dim),
        "f2s": init_w(keys[7], fast_dim, slow_dim),
        "s2s": init_w(keys[8], slow_dim, slow_dim),
        "s2f": init_w(keys[9], slow_dim, fast_dim),
    }

    # ---- fused, batch-folded, in-kernel-scanned Pallas run ------------------
    outs = mtrnn_scan(xs, (h_fast, h_slow, u_fast, u_slow), weights,
                      fast_tau=fast_tau, slow_tau=slow_tau, num_groups=2)
    outs = jax.block_until_ready(outs)

    # ---- reference: plain JAX recurrence, sequence by sequence --------------
    for s in range(num_seqs):
        ref = _reference_seq(
            xs[s], (h_fast[s], h_slow[s], u_fast[s], u_slow[s]),
            weights, fast_tau, slow_tau)
        for got, want in zip(outs, ref):
            np.testing.assert_allclose(np.asarray(got[s]), np.asarray(want),
                                       rtol=2e-5, atol=2e-5)

    # ---- single-step API with explicit state (matches MTRNNCell.forward) ----
    step_out = mtrnn_cell(xs[0, 0], (h_fast[0], h_slow[0], u_fast[0], u_slow[0]),
                          weights, fast_tau=fast_tau, slow_tau=slow_tau)
    step_out = jax.block_until_ready(step_out)
    ref1 = _reference_seq(xs[0, :1],
                          (h_fast[0], h_slow[0], u_fast[0], u_slow[0]),
                          weights, fast_tau, slow_tau)
    for got, want in zip(step_out, ref1):
        np.testing.assert_allclose(np.asarray(got), np.asarray(want[0]),
                                   rtol=2e-5, atol=2e-5)

    # ---- single-step API with state=None (zero init, as in the module) ------
    step_out0 = mtrnn_cell(xs[0, 0], None, weights,
                           fast_tau=fast_tau, slow_tau=slow_tau)
    step_out0 = jax.block_until_ready(step_out0)
    zeros = (jnp.zeros((batch, fast_dim), jnp.float32),
             jnp.zeros((batch, slow_dim), jnp.float32),
             jnp.zeros((batch, fast_dim), jnp.float32),
             jnp.zeros((batch, slow_dim), jnp.float32))
    ref0 = _reference_seq(xs[0, :1], zeros, weights, fast_tau, slow_tau)
    for got, want in zip(step_out0, ref0):
        np.testing.assert_allclose(np.asarray(got), np.asarray(want[0]),
                                   rtol=2e-5, atol=2e-5)

    print("KERNEL_OK")
</pallas_src>

<mosaic_0001>
module attributes {stable_mosaic.version = 11 : i64} {
  func.func @_mtrnn_seq_kernel(%arg0: i32, %arg1: memref<1x6x16x32xf32, #tpu.memory_space<vmem>>, %arg2: memref<32x128xf32, #tpu.memory_space<vmem>>, %arg3: memref<128x128xf32, #tpu.memory_space<vmem>>, %arg4: memref<1x128xf32, #tpu.memory_space<vmem>>, %arg5: memref<1x16x128xf32, #tpu.memory_space<vmem>>, %arg6: memref<1x16x128xf32, #tpu.memory_space<vmem>>, %arg7: memref<1x6x16x128xf32, #tpu.memory_space<vmem>>, %arg8: memref<1x6x16x128xf32, #tpu.memory_space<vmem>>, %arg9: memref<6x16x128xf32, #tpu.memory_space<vmem>>, %arg10: memref<16x128xf32, #tpu.memory_space<vmem>>, %arg11: memref<16x128xf32, #tpu.memory_space<vmem>>) attributes {dimension_semantics = [#tpu.dimension_semantics<parallel>], iteration_bounds = array<i64: 2>, scalar_prefetch = 0 : i64, scratch_operands = 3 : i64, tpu.core_type = #tpu.core_type<tc>, window_params = [{transform_indices = @transform_0, window_bounds = array<i64: 1, 6, 16, 32>}, {pipeline_mode = #tpu.pipeline_mode<synchronous>, transform_indices = @transform_1, window_bounds = array<i64: 32, 128>}, {pipeline_mode = #tpu.pipeline_mode<synchronous>, transform_indices = @transform_2, window_bounds = array<i64: 128, 128>}, {pipeline_mode = #tpu.pipeline_mode<synchronous>, transform_indices = @transform_3, window_bounds = array<i64: 1, 128>}, {transform_indices = @transform_4, window_bounds = array<i64: 1, 16, 128>}, {transform_indices = @transform_5, window_bounds = array<i64: 1, 16, 128>}, {transform_indices = @transform_6, window_bounds = array<i64: 1, 6, 16, 128>}, {transform_indices = @transform_7, window_bounds = array<i64: 1, 6, 16, 128>}]} {
    %c0 = arith.constant 0 : index
    %c0_0 = arith.constant 0 : index
    %c0_1 = arith.constant 0 : index
    %c0_2 = arith.constant 0 : index
    %0 = vector.load %arg1[%c0, %c0_0, %c0_1, %c0_2] : memref<1x6x16x32xf32, #tpu.memory_space<vmem>>, vector<1x6x16x32xf32>
    %1 = vector.shape_cast %0 : vector<1x6x16x32xf32> to vector<6x16x32xf32>
    %2 = vector.shape_cast %1 : vector<6x16x32xf32> to vector<96x32xf32>
    %c0_3 = arith.constant 0 : index
    %c0_4 = arith.constant 0 : index
    %3 = vector.load %arg2[%c0_3, %c0_4] : memref<32x128xf32, #tpu.memory_space<vmem>>, vector<32x128xf32>
    %cst = arith.constant dense<0.000000e+00> : vector<96x128xf32>
    %4 = tpu.matmul %2, %3, %cst {dimension_numbers = #tpu.dot_dimension_numbers<[1], [0], [0], [1], [0, 0, 1, 1], [], []>, precision = #tpu.contract_precision<fp32>} : vector<96x32xf32>, vector<32x128xf32>, vector<96x128xf32> -> vector<96x128xf32>
    %5 = vector.shape_cast %4 : vector<96x128xf32> to vector<6x16x128xf32>
    %c0_5 = arith.constant 0 : index
    %c0_6 = arith.constant 0 : index
    %c0_7 = arith.constant 0 : index
    %6 = vector.load %arg9[%c0_5, %c0_6, %c0_7] : memref<6x16x128xf32, #tpu.memory_space<vmem>>, vector<6x16x128xf32>
    tpu.vector_store %arg9[%c0_5, %c0_6, %c0_7], %5 {strides = array<i32>} : memref<6x16x128xf32, #tpu.memory_space<vmem>>, vector<6x16x128xf32>,
    %c0_8 = arith.constant 0 : index
    %c0_9 = arith.constant 0 : index
    %c0_10 = arith.constant 0 : index
    %7 = vector.load %arg5[%c0_8, %c0_9, %c0_10] : memref<1x16x128xf32, #tpu.memory_space<vmem>>, vector<1x16x128xf32>
    %8 = vector.shape_cast %7 : vector<1x16x128xf32> to vector<16x128xf32>
    %c0_11 = arith.constant 0 : index
    %c0_12 = arith.constant 0 : index
    %9 = vector.load %arg10[%c0_11, %c0_12] : memref<16x128xf32, #tpu.memory_space<vmem>>, vector<16x128xf32>
    tpu.vector_store %arg10[%c0_11, %c0_12], %8 {strides = array<i32>} : memref<16x128xf32, #tpu.memory_space<vmem>>, vector<16x128xf32>,
    %c0_13 = arith.constant 0 : index
    %c0_14 = arith.constant 0 : index
    %c0_15 = arith.constant 0 : index
    %10 = vector.load %arg6[%c0_13, %c0_14, %c0_15] : memref<1x16x128xf32, #tpu.memory_space<vmem>>, vector<1x16x128xf32>
    %11 = vector.shape_cast %10 : vector<1x16x128xf32> to vector<16x128xf32>
    %c0_16 = arith.constant 0 : index
    %c0_17 = arith.constant 0 : index
    %12 = vector.load %arg11[%c0_16, %c0_17] : memref<16x128xf32, #tpu.memory_space<vmem>>, vector<16x128xf32>
    tpu.vector_store %arg11[%c0_16, %c0_17], %11 {strides = array<i32>} : memref<16x128xf32, #tpu.memory_space<vmem>>, vector<16x128xf32>,
    %c0_18 = arith.constant 0 : index
    %c0_19 = arith.constant 0 : index
    %13 = vector.load %arg3[%c0_18, %c0_19] : memref<128x128xf32, #tpu.memory_space<vmem>>, vector<128x128xf32>
    %c0_20 = arith.constant 0 : index
    %c0_21 = arith.constant 0 : index
    %14 = vector.load %arg4[%c0_20, %c0_21] : memref<1x128xf32, #tpu.memory_space<vmem>>, vector<1x128xf32>
    %cst_22 = arith.constant 1.000000e+00 : f32
    %15 = vector.broadcast %cst_22 : f32 to vector<1x128xf32>
    %16 = arith.subf %15, %14 : vector<1x128xf32>
    %c0_i32 = arith.constant 0 : i32
    %17 = arith.index_cast %c0_i32 : i32 to index
    %c0_23 = arith.constant 0 : index
    %c0_24 = arith.constant 0 : index
    %18 = vector.load %arg9[%17, %c0_23, %c0_24] : memref<6x16x128xf32, #tpu.memory_space<vmem>>, vector<1x16x128xf32>
    %19 = vector.shape_cast %18 : vector<1x16x128xf32> to vector<16x128xf32>
    %c0_25 = arith.constant 0 : index
    %c0_26 = arith.constant 0 : index
    %20 = vector.load %arg10[%c0_25, %c0_26] : memref<16x128xf32, #tpu.memory_space<vmem>>, vector<16x128xf32>
    %cst_27 = arith.constant dense<0.000000e+00> : vector<16x128xf32>
    %21 = tpu.matmul %20, %13, %cst_27 {dimension_numbers = #tpu.dot_dimension_numbers<[1], [0], [0], [1], [0, 0, 1, 1], [], []>, precision = #tpu.contract_precision<fp32>} : vector<16x128xf32>, vector<128x128xf32>, vector<16x128xf32> -> vector<16x128xf32>
    %22 = arith.addf %19, %21 : vector<16x128xf32>
    %c0_28 = arith.constant 0 : index
    %c0_29 = arith.constant 0 : index
    %23 = vector.load %arg11[%c0_28, %c0_29] : memref<16x128xf32, #tpu.memory_space<vmem>>, vector<16x128xf32>
    %24 = vector.broadcast %16 : vector<1x128xf32> to vector<16x128xf32>
    %25 = arith.mulf %24, %23 : vector<16x128xf32>
    %26 = vector.broadcast %14 : vector<1x128xf32> to vector<16x128xf32>
    %27 = arith.mulf %26, %22 : vector<16x128xf32>
    %28 = arith.addf %25, %27 : vector<16x128xf32>
    %29 = math.tanh %28 : vector<16x128xf32>
    %c0_30 = arith.constant 0 : index
    %c0_31 = arith.constant 0 : index
    %30 = vector.load %arg10[%c0_30, %c0_31] : memref<16x128xf32, #tpu.memory_space<vmem>>, vector<16x128xf32>
    tpu.vector_store %arg10[%c0_30, %c0_31], %29 {strides = array<i32>} : memref<16x128xf32, #tpu.memory_space<vmem>>, vector<16x128xf32>,
    %c0_32 = arith.constant 0 : index
    %c0_33 = arith.constant 0 : index
    %31 = vector.load %arg11[%c0_32, %c0_33] : memref<16x128xf32, #tpu.memory_space<vmem>>, vector<16x128xf32>
    tpu.vector_store %arg11[%c0_32, %c0_33], %28 {strides = array<i32>} : memref<16x128xf32, #tpu.memory_space<vmem>>, vector<16x128xf32>,
    %c0_34 = arith.constant 0 : index
    %32 = arith.index_cast %c0_i32 : i32 to index
    %c0_35 = arith.constant 0 : index
    %c0_36 = arith.constant 0 : index
    %33 = vector.load %arg7[%c0_34, %32, %c0_35, %c0_36] : memref<1x6x16x128xf32, #tpu.memory_space<vmem>>, vector<1x1x16x128xf32>
    %34 = vector.shape_cast %33 : vector<1x1x16x128xf32> to vector<16x128xf32>
    %35 = vector.shape_cast %29 : vector<16x128xf32> to vector<1x1x16x128xf32>
    tpu.vector_store %arg7[%c0_34, %32, %c0_35, %c0_36], %35 {strides = array<i32>} : memref<1x6x16x128xf32, #tpu.memory_space<vmem>>, vector<1x1x16x128xf32>,
    %c0_37 = arith.constant 0 : index
    %36 = arith.index_cast %c0_i32 : i32 to index
    %c0_38 = arith.constant 0 : index
    %c0_39 = arith.constant 0 : index
    %37 = vector.load %arg8[%c0_37, %36, %c0_38, %c0_39] : memref<1x6x16x128xf32, #tpu.memory_space<vmem>>, vector<1x1x16x128xf32>
    %38 = vector.shape_cast %37 : vector<1x1x16x128xf32> to vector<16x128xf32>
    %39 = vector.shape_cast %28 : vector<16x128xf32> to vector<1x1x16x128xf32>
    tpu.vector_store %arg8[%c0_37, %36, %c0_38, %c0_39], %39 {strides = array<i32>} : memref<1x6x16x128xf32, #tpu.memory_space<vmem>>, vector<1x1x16x128xf32>,
    %c1_i32 = arith.constant 1 : i32
    %40 = arith.index_cast %c1_i32 : i32 to index
    %c0_40 = arith.constant 0 : index
    %c0_41 = arith.constant 0 : index
    %41 = vector.load %arg9[%40, %c0_40, %c0_41] : memref<6x16x128xf32, #tpu.memory_space<vmem>>, vector<1x16x128xf32>
    %42 = vector.shape_cast %41 : vector<1x16x128xf32> to vector<16x128xf32>
    %c0_42 = arith.constant 0 : index
    %c0_43 = arith.constant 0 : index
    %43 = vector.load %arg10[%c0_42, %c0_43] : memref<16x128xf32, #tpu.memory_space<vmem>>, vector<16x128xf32>
    %cst_44 = arith.constant dense<0.000000e+00> : vector<16x128xf32>
    %44 = tpu.matmul %43, %13, %cst_44 {dimension_numbers = #tpu.dot_dimension_numbers<[1], [0], [0], [1], [0, 0, 1, 1], [], []>, precision = #tpu.contract_precision<fp32>} : vector<16x128xf32>, vector<128x128xf32>, vector<16x128xf32> -> vector<16x128xf32>
    %45 = arith.addf %42, %44 : vector<16x128xf32>
    %c0_45 = arith.constant 0 : index
    %c0_46 = arith.constant 0 : index
    %46 = vector.load %arg11[%c0_45, %c0_46] : memref<16x128xf32, #tpu.memory_space<vmem>>, vector<16x128xf32>
    %47 = vector.broadcast %16 : vector<1x128xf32> to vector<16x128xf32>
    %48 = arith.mulf %47, %46 : vector<16x128xf32>
    %49 = vector.broadcast %14 : vector<1x128xf32> to vector<16x128xf32>
    %50 = arith.mulf %49, %45 : vector<16x128xf32>
    %51 = arith.addf %48, %50 : vector<16x128xf32>
    %52 = math.tanh %51 : vector<16x128xf32>
    %c0_47 = arith.constant 0 : index
    %c0_48 = arith.constant 0 : index
    %53 = vector.load %arg10[%c0_47, %c0_48] : memref<16x128xf32, #tpu.memory_space<vmem>>, vector<16x128xf32>
    tpu.vector_store %arg10[%c0_47, %c0_48], %52 {strides = array<i32>} : memref<16x128xf32, #tpu.memory_space<vmem>>, vector<16x128xf32>,
    %c0_49 = arith.constant 0 : index
    %c0_50 = arith.constant 0 : index
    %54 = vector.load %arg11[%c0_49, %c0_50] : memref<16x128xf32, #tpu.memory_space<vmem>>, vector<16x128xf32>
    tpu.vector_store %arg11[%c0_49, %c0_50], %51 {strides = array<i32>} : memref<16x128xf32, #tpu.memory_space<vmem>>, vector<16x128xf32>,
    %c0_51 = arith.constant 0 : index
    %55 = arith.index_cast %c1_i32 : i32 to index
    %c0_52 = arith.constant 0 : index
    %c0_53 = arith.constant 0 : index
    %56 = vector.load %arg7[%c0_51, %55, %c0_52, %c0_53] : memref<1x6x16x128xf32, #tpu.memory_space<vmem>>, vector<1x1x16x128xf32>
    %57 = vector.shape_cast %56 : vector<1x1x16x128xf32> to vector<16x128xf32>
    %58 = vector.shape_cast %52 : vector<16x128xf32> to vector<1x1x16x128xf32>
    tpu.vector_store %arg7[%c0_51, %55, %c0_52, %c0_53], %58 {strides = array<i32>} : memref<1x6x16x128xf32, #tpu.memory_space<vmem>>, vector<1x1x16x128xf32>,
    %c0_54 = arith.constant 0 : index
    %59 = arith.index_cast %c1_i32 : i32 to index
    %c0_55 = arith.constant 0 : index
    %c0_56 = arith.constant 0 : index
    %60 = vector.load %arg8[%c0_54, %59, %c0_55, %c0_56] : memref<1x6x16x128xf32, #tpu.memory_space<vmem>>, vector<1x1x16x128xf32>
    %61 = vector.shape_cast %60 : vector<1x1x16x128xf32> to vector<16x128xf32>
    %62 = vector.shape_cast %51 : vector<16x128xf32> to vector<1x1x16x128xf32>
    tpu.vector_store %arg8[%c0_54, %59, %c0_55, %c0_56], %62 {strides = array<i32>} : memref<1x6x16x128xf32, #tpu.memory_space<vmem>>, vector<1x1x16x128xf32>,
    %c2_i32 = arith.constant 2 : i32
    %63 = arith.index_cast %c2_i32 : i32 to index
    %c0_57 = arith.constant 0 : index
    %c0_58 = arith.constant 0 : index
    %64 = vector.load %arg9[%63, %c0_57, %c0_58] : memref<6x16x128xf32, #tpu.memory_space<vmem>>, vector<1x16x128xf32>
    %65 = vector.shape_cast %64 : vector<1x16x128xf32> to vector<16x128xf32>
    %c0_59 = arith.constant 0 : index
    %c0_60 = arith.constant 0 : index
    %66 = vector.load %arg10[%c0_59, %c0_60] : memref<16x128xf32, #tpu.memory_space<vmem>>, vector<16x128xf32>
    %cst_61 = arith.constant dense<0.000000e+00> : vector<16x128xf32>
    %67 = tpu.matmul %66, %13, %cst_61 {dimension_numbers = #tpu.dot_dimension_numbers<[1], [0], [0], [1], [0, 0, 1, 1], [], []>, precision = #tpu.contract_precision<fp32>} : vector<16x128xf32>, vector<128x128xf32>, vector<16x128xf32> -> vector<16x128xf32>
    %68 = arith.addf %65, %67 : vector<16x128xf32>
    %c0_62 = arith.constant 0 : index
    %c0_63 = arith.constant 0 : index
    %69 = vector.load %arg11[%c0_62, %c0_63] : memref<16x128xf32, #tpu.memory_space<vmem>>, vector<16x128xf32>
    %70 = vector.broadcast %16 : vector<1x128xf32> to vector<16x128xf32>
    %71 = arith.mulf %70, %69 : vector<16x128xf32>
    %72 = vector.broadcast %14 : vector<1x128xf32> to vector<16x128xf32>
    %73 = arith.mulf %72, %68 : vector<16x128xf32>
    %74 = arith.addf %71, %73 : vector<16x128xf32>
    %75 = math.tanh %74 : vector<16x128xf32>
    %c0_64 = arith.constant 0 : index
    %c0_65 = arith.constant 0 : index
    %76 = vector.load %arg10[%c0_64, %c0_65] : memref<16x128xf32, #tpu.memory_space<vmem>>, vector<16x128xf32>
    tpu.vector_store %arg10[%c0_64, %c0_65], %75 {strides = array<i32>} : memref<16x128xf32, #tpu.memory_space<vmem>>, vector<16x128xf32>,
    %c0_66 = arith.constant 0 : index
    %c0_67 = arith.constant 0 : index
    %77 = vector.load %arg11[%c0_66, %c0_67] : memref<16x128xf32, #tpu.memory_space<vmem>>, vector<16x128xf32>
    tpu.vector_store %arg11[%c0_66, %c0_67], %74 {strides = array<i32>} : memref<16x128xf32, #tpu.memory_space<vmem>>, vector<16x128xf32>,
    %c0_68 = arith.constant 0 : index
    %78 = arith.index_cast %c2_i32 : i32 to index
    %c0_69 = arith.constant 0 : index
    %c0_70 = arith.constant 0 : index
    %79 = vector.load %arg7[%c0_68, %78, %c0_69, %c0_70] : memref<1x6x16x128xf32, #tpu.memory_space<vmem>>, vector<1x1x16x128xf32>
    %80 = vector.shape_cast %79 : vector<1x1x16x128xf32> to vector<16x128xf32>
    %81 = vector.shape_cast %75 : vector<16x128xf32> to vector<1x1x16x128xf32>
    tpu.vector_store %arg7[%c0_68, %78, %c0_69, %c0_70], %81 {strides = array<i32>} : memref<1x6x16x128xf32, #tpu.memory_space<vmem>>, vector<1x1x16x128xf32>,
    %c0_71 = arith.constant 0 : index
    %82 = arith.index_cast %c2_i32 : i32 to index
    %c0_72 = arith.constant 0 : index
    %c0_73 = arith.constant 0 : index
    %83 = vector.load %arg8[%c0_71, %82, %c0_72, %c0_73] : memref<1x6x16x128xf32, #tpu.memory_space<vmem>>, vector<1x1x16x128xf32>
    %84 = vector.shape_cast %83 : vector<1x1x16x128xf32> to vector<16x128xf32>
    %85 = vector.shape_cast %74 : vector<16x128xf32> to vector<1x1x16x128xf32>
    tpu.vector_store %arg8[%c0_71, %82, %c0_72, %c0_73], %85 {strides = array<i32>} : memref<1x6x16x128xf32, #tpu.memory_space<vmem>>, vector<1x1x16x128xf32>,
    %c3_i32 = arith.constant 3 : i32
    %86 = arith.index_cast %c3_i32 : i32 to index
    %c0_74 = arith.constant 0 : index
    %c0_75 = arith.constant 0 : index
    %87 = vector.load %arg9[%86, %c0_74, %c0_75] : memref<6x16x128xf32, #tpu.memory_space<vmem>>, vector<1x16x128xf32>
    %88 = vector.shape_cast %87 : vector<1x16x128xf32> to vector<16x128xf32>
    %c0_76 = arith.constant 0 : index
    %c0_77 = arith.constant 0 : index
    %89 = vector.load %arg10[%c0_76, %c0_77] : memref<16x128xf32, #tpu.memory_space<vmem>>, vector<16x128xf32>
    %cst_78 = arith.constant dense<0.000000e+00> : vector<16x128xf32>
    %90 = tpu.matmul %89, %13, %cst_78 {dimension_numbers = #tpu.dot_dimension_numbers<[1], [0], [0], [1], [0, 0, 1, 1], [], []>, precision = #tpu.contract_precision<fp32>} : vector<16x128xf32>, vector<128x128xf32>, vector<16x128xf32> -> vector<16x128xf32>
    %91 = arith.addf %88, %90 : vector<16x128xf32>
    %c0_79 = arith.constant 0 : index
    %c0_80 = arith.constant 0 : index
    %92 = vector.load %arg11[%c0_79, %c0_80] : memref<16x128xf32, #tpu.memory_space<vmem>>, vector<16x128xf32>
    %93 = vector.broadcast %16 : vector<1x128xf32> to vector<16x128xf32>
    %94 = arith.mulf %93, %92 : vector<16x128xf32>
    %95 = vector.broadcast %14 : vector<1x128xf32> to vector<16x128xf32>
    %96 = arith.mulf %95, %91 : vector<16x128xf32>
    %97 = arith.addf %94, %96 : vector<16x128xf32>
    %98 = math.tanh %97 : vector<16x128xf32>
    %c0_81 = arith.constant 0 : index
    %c0_82 = arith.constant 0 : index
    %99 = vector.load %arg10[%c0_81, %c0_82] : memref<16x128xf32, #tpu.memory_space<vmem>>, vector<16x128xf32>
    tpu.vector_store %arg10[%c0_81, %c0_82], %98 {strides = array<i32>} : memref<16x128xf32, #tpu.memory_space<vmem>>, vector<16x128xf32>,
    %c0_83 = arith.constant 0 : index
    %c0_84 = arith.constant 0 : index
    %100 = vector.load %arg11[%c0_83, %c0_84] : memref<16x128xf32, #tpu.memory_space<vmem>>, vector<16x128xf32>
    tpu.vector_store %arg11[%c0_83, %c0_84], %97 {strides = array<i32>} : memref<16x128xf32, #tpu.memory_space<vmem>>, vector<16x128xf32>,
    %c0_85 = arith.constant 0 : index
    %101 = arith.index_cast %c3_i32 : i32 to index
    %c0_86 = arith.constant 0 : index
    %c0_87 = arith.constant 0 : index
    %102 = vector.load %arg7[%c0_85, %101, %c0_86, %c0_87] : memref<1x6x16x128xf32, #tpu.memory_space<vmem>>, vector<1x1x16x128xf32>
    %103 = vector.shape_cast %102 : vector<1x1x16x128xf32> to vector<16x128xf32>
    %104 = vector.shape_cast %98 : vector<16x128xf32> to vector<1x1x16x128xf32>
    tpu.vector_store %arg7[%c0_85, %101, %c0_86, %c0_87], %104 {strides = array<i32>} : memref<1x6x16x128xf32, #tpu.memory_space<vmem>>, vector<1x1x16x128xf32>,
    %c0_88 = arith.constant 0 : index
    %105 = arith.index_cast %c3_i32 : i32 to index
    %c0_89 = arith.constant 0 : index
    %c0_90 = arith.constant 0 : index
    %106 = vector.load %arg8[%c0_88, %105, %c0_89, %c0_90] : memref<1x6x16x128xf32, #tpu.memory_space<vmem>>, vector<1x1x16x128xf32>
    %107 = vector.shape_cast %106 : vector<1x1x16x128xf32> to vector<16x128xf32>
    %108 = vector.shape_cast %97 : vector<16x128xf32> to vector<1x1x16x128xf32>
    tpu.vector_store %arg8[%c0_88, %105, %c0_89, %c0_90], %108 {strides = array<i32>} : memref<1x6x16x128xf32, #tpu.memory_space<vmem>>, vector<1x1x16x128xf32>,
    %c4_i32 = arith.constant 4 : i32
    %109 = arith.index_cast %c4_i32 : i32 to index
    %c0_91 = arith.constant 0 : index
    %c0_92 = arith.constant 0 : index
    %110 = vector.load %arg9[%109, %c0_91, %c0_92] : memref<6x16x128xf32, #tpu.memory_space<vmem>>, vector<1x16x128xf32>
    %111 = vector.shape_cast %110 : vector<1x16x128xf32> to vector<16x128xf32>
    %c0_93 = arith.constant 0 : index
    %c0_94 = arith.constant 0 : index
    %112 = vector.load %arg10[%c0_93, %c0_94] : memref<16x128xf32, #tpu.memory_space<vmem>>, vector<16x128xf32>
    %cst_95 = arith.constant dense<0.000000e+00> : vector<16x128xf32>
    %113 = tpu.matmul %112, %13, %cst_95 {dimension_numbers = #tpu.dot_dimension_numbers<[1], [0], [0], [1], [0, 0, 1, 1], [], []>, precision = #tpu.contract_precision<fp32>} : vector<16x128xf32>, vector<128x128xf32>, vector<16x128xf32> -> vector<16x128xf32>
    %114 = arith.addf %111, %113 : vector<16x128xf32>
    %c0_96 = arith.constant 0 : index
    %c0_97 = arith.constant 0 : index
    %115 = vector.load %arg11[%c0_96, %c0_97] : memref<16x128xf32, #tpu.memory_space<vmem>>, vector<16x128xf32>
    %116 = vector.broadcast %16 : vector<1x128xf32> to vector<16x128xf32>
    %117 = arith.mulf %116, %115 : vector<16x128xf32>
    %118 = vector.broadcast %14 : vector<1x128xf32> to vector<16x128xf32>
    %119 = arith.mulf %118, %114 : vector<16x128xf32>
    %120 = arith.addf %117, %119 : vector<16x128xf32>
    %121 = math.tanh %120 : vector<16x128xf32>
    %c0_98 = arith.constant 0 : index
    %c0_99 = arith.constant 0 : index
    %122 = vector.load %arg10[%c0_98, %c0_99] : memref<16x128xf32, #tpu.memory_space<vmem>>, vector<16x128xf32>
    tpu.vector_store %arg10[%c0_98, %c0_99], %121 {strides = array<i32>} : memref<16x128xf32, #tpu.memory_space<vmem>>, vector<16x128xf32>,
    %c0_100 = arith.constant 0 : index
    %c0_101 = arith.constant 0 : index
    %123 = vector.load %arg11[%c0_100, %c0_101] : memref<16x128xf32, #tpu.memory_space<vmem>>, vector<16x128xf32>
    tpu.vector_store %arg11[%c0_100, %c0_101], %120 {strides = array<i32>} : memref<16x128xf32, #tpu.memory_space<vmem>>, vector<16x128xf32>,
    %c0_102 = arith.constant 0 : index
    %124 = arith.index_cast %c4_i32 : i32 to index
    %c0_103 = arith.constant 0 : index
    %c0_104 = arith.constant 0 : index
    %125 = vector.load %arg7[%c0_102, %124, %c0_103, %c0_104] : memref<1x6x16x128xf32, #tpu.memory_space<vmem>>, vector<1x1x16x128xf32>
    %126 = vector.shape_cast %125 : vector<1x1x16x128xf32> to vector<16x128xf32>
    %127 = vector.shape_cast %121 : vector<16x128xf32> to vector<1x1x16x128xf32>
    tpu.vector_store %arg7[%c0_102, %124, %c0_103, %c0_104], %127 {strides = array<i32>} : memref<1x6x16x128xf32, #tpu.memory_space<vmem>>, vector<1x1x16x128xf32>,
    %c0_105 = arith.constant 0 : index
    %128 = arith.index_cast %c4_i32 : i32 to index
    %c0_106 = arith.constant 0 : index
    %c0_107 = arith.constant 0 : index
    %129 = vector.load %arg8[%c0_105, %128, %c0_106, %c0_107] : memref<1x6x16x128xf32, #tpu.memory_space<vmem>>, vector<1x1x16x128xf32>
    %130 = vector.shape_cast %129 : vector<1x1x16x128xf32> to vector<16x128xf32>
    %131 = vector.shape_cast %120 : vector<16x128xf32> to vector<1x1x16x128xf32>
    tpu.vector_store %arg8[%c0_105, %128, %c0_106, %c0_107], %131 {strides = array<i32>} : memref<1x6x16x128xf32, #tpu.memory_space<vmem>>, vector<1x1x16x128xf32>,
    %c5_i32 = arith.constant 5 : i32
    %132 = arith.index_cast %c5_i32 : i32 to index
    %c0_108 = arith.constant 0 : index
    %c0_109 = arith.constant 0 : index
    %133 = vector.load %arg9[%132, %c0_108, %c0_109] : memref<6x16x128xf32, #tpu.memory_space<vmem>>, vector<1x16x128xf32>
    %134 = vector.shape_cast %133 : vector<1x16x128xf32> to vector<16x128xf32>
    %c0_110 = arith.constant 0 : index
    %c0_111 = arith.constant 0 : index
    %135 = vector.load %arg10[%c0_110, %c0_111] : memref<16x128xf32, #tpu.memory_space<vmem>>, vector<16x128xf32>
    %cst_112 = arith.constant dense<0.000000e+00> : vector<16x128xf32>
    %136 = tpu.matmul %135, %13, %cst_112 {dimension_numbers = #tpu.dot_dimension_numbers<[1], [0], [0], [1], [0, 0, 1, 1], [], []>, precision = #tpu.contract_precision<fp32>} : vector<16x128xf32>, vector<128x128xf32>, vector<16x128xf32> -> vector<16x128xf32>
    %137 = arith.addf %134, %136 : vector<16x128xf32>
    %c0_113 = arith.constant 0 : index
    %c0_114 = arith.constant 0 : index
    %138 = vector.load %arg11[%c0_113, %c0_114] : memref<16x128xf32, #tpu.memory_space<vmem>>, vector<16x128xf32>
    %139 = vector.broadcast %16 : vector<1x128xf32> to vector<16x128xf32>
    %140 = arith.mulf %139, %138 : vector<16x128xf32>
    %141 = vector.broadcast %14 : vector<1x128xf32> to vector<16x128xf32>
    %142 = arith.mulf %141, %137 : vector<16x128xf32>
    %143 = arith.addf %140, %142 : vector<16x128xf32>
    %144 = math.tanh %143 : vector<16x128xf32>
    %c0_115 = arith.constant 0 : index
    %c0_116 = arith.constant 0 : index
    %145 = vector.load %arg10[%c0_115, %c0_116] : memref<16x128xf32, #tpu.memory_space<vmem>>, vector<16x128xf32>
    tpu.vector_store %arg10[%c0_115, %c0_116], %144 {strides = array<i32>} : memref<16x128xf32, #tpu.memory_space<vmem>>, vector<16x128xf32>,
    %c0_117 = arith.constant 0 : index
    %c0_118 = arith.constant 0 : index
    %146 = vector.load %arg11[%c0_117, %c0_118] : memref<16x128xf32, #tpu.memory_space<vmem>>, vector<16x128xf32>
    tpu.vector_store %arg11[%c0_117, %c0_118], %143 {strides = array<i32>} : memref<16x128xf32, #tpu.memory_space<vmem>>, vector<16x128xf32>,
    %c0_119 = arith.constant 0 : index
    %147 = arith.index_cast %c5_i32 : i32 to index
    %c0_120 = arith.constant 0 : index
    %c0_121 = arith.constant 0 : index
    %148 = vector.load %arg7[%c0_119, %147, %c0_120, %c0_121] : memref<1x6x16x128xf32, #tpu.memory_space<vmem>>, vector<1x1x16x128xf32>
    %149 = vector.shape_cast %148 : vector<1x1x16x128xf32> to vector<16x128xf32>
    %150 = vector.shape_cast %144 : vector<16x128xf32> to vector<1x1x16x128xf32>
    tpu.vector_store %arg7[%c0_119, %147, %c0_120, %c0_121], %150 {strides = array<i32>} : memref<1x6x16x128xf32, #tpu.memory_space<vmem>>, vector<1x1x16x128xf32>,
    %c0_122 = arith.constant 0 : index
    %151 = arith.index_cast %c5_i32 : i32 to index
    %c0_123 = arith.constant 0 : index
    %c0_124 = arith.constant 0 : index
    %152 = vector.load %arg8[%c0_122, %151, %c0_123, %c0_124] : memref<1x6x16x128xf32, #tpu.memory_space<vmem>>, vector<1x1x16x128xf32>
    %153 = vector.shape_cast %152 : vector<1x1x16x128xf32> to vector<16x128xf32>
    %154 = vector.shape_cast %143 : vector<16x128xf32> to vector<1x1x16x128xf32>
    tpu.vector_store %arg8[%c0_122, %151, %c0_123, %c0_124], %154 {strides = array<i32>} : memref<1x6x16x128xf32, #tpu.memory_space<vmem>>, vector<1x1x16x128xf32>,
    %c6_i32 = arith.constant 6 : i32
    return
  }
  func.func @transform_0(%arg0: i32) -> (i32, i32, i32, i32) {
    %c0_i32 = arith.constant 0 : i32
    %c0_i32_0 = arith.constant 0 : i32
    %c0_i32_1 = arith.constant 0 : i32
    %c0_i32_2 = arith.constant 0 : i32
    return %arg0, %c0_i32, %c0_i32_0, %c0_i32_1 : i32, i32, i32, i32
  }
  func.func @transform_1(%arg0: i32) -> (i32, i32) {
    %c0_i32 = arith.constant 0 : i32
    %c0_i32_0 = arith.constant 0 : i32
    %c0_i32_1 = arith.constant 0 : i32
    return %c0_i32, %c0_i32_0 : i32, i32
  }
  func.func @transform_2(%arg0: i32) -> (i32, i32) {
    %c0_i32 = arith.constant 0 : i32
    %c0_i32_0 = arith.constant 0 : i32
    %c0_i32_1 = arith.constant 0 : i32
    return %c0_i32, %c0_i32_0 : i32, i32
  }
  func.func @transform_3(%arg0: i32) -> (i32, i32) {
    %c0_i32 = arith.constant 0 : i32
    %c0_i32_0 = arith.constant 0 : i32
    %c0_i32_1 = arith.constant 0 : i32
    return %c0_i32, %c0_i32_0 : i32, i32
  }
  func.func @transform_4(%arg0: i32) -> (i32, i32, i32) {
    %c0_i32 = arith.constant 0 : i32
    %c0_i32_0 = arith.constant 0 : i32
    %c0_i32_1 = arith.constant 0 : i32
    return %arg0, %c0_i32, %c0_i32_0 : i32, i32, i32
  }
  func.func @transform_5(%arg0: i32) -> (i32, i32, i32) {
    %c0_i32 = arith.constant 0 : i32
    %c0_i32_0 = arith.constant 0 : i32
    %c0_i32_1 = arith.constant 0 : i32
    return %arg0, %c0_i32, %c0_i32_0 : i32, i32, i32
  }
  func.func @transform_6(%arg0: i32) -> (i32, i32, i32, i32) {
    %c0_i32 = arith.constant 0 : i32
    %c0_i32_0 = arith.constant 0 : i32
    %c0_i32_1 = arith.constant 0 : i32
    %c0_i32_2 = arith.constant 0 : i32
    return %arg0, %c0_i32, %c0_i32_0, %c0_i32_1 : i32, i32, i32, i32
  }
  func.func @transform_7(%arg0: i32) -> (i32, i32, i32, i32) {
    %c0_i32 = arith.constant 0 : i32
    %c0_i32_0 = arith.constant 0 : i32
    %c0_i32_1 = arith.constant 0 : i32
    %c0_i32_2 = arith.constant 0 : i32
    return %arg0, %c0_i32, %c0_i32_0, %c0_i32_1 : i32, i32, i32, i32
  }
}

</mosaic_0001>

<llo_original>
// kernel: tpu_custom_call.1
$region0: #{tpu_custom_call.1}
  #allocation0 [shape = 'u32[]', space=smem, size = 0x4, offset = 0x4, fixed_abs, tag = 'smem constant byte address 0x4 - core index']
  #allocation1 [shape = 'u32[144,128]{1,0:T(1,128)}', space=vmem, size = 0x12000, scoped, tag = 'internal scratch']
  #allocation2 [shape = 'f32[6,16,128]{2,1,0:T(8,128)}', space=vmem, size = 0xc000, scoped, tag = 'scratch operand']
  #allocation3 [shape = 'f32[16,128]{1,0:T(8,128)}', space=vmem, size = 0x2000, scoped, tag = 'scratch operand']
  #allocation4 [shape = 'f32[16,128]{1,0:T(8,128)}', space=vmem, size = 0x2000, scoped, tag = 'scratch operand']
  %s0 = inlined_call_operand.hbm [shape: f32[2,6,16,32], index: 0, kind: input, shape index: {}]
  %s1 = inlined_call_operand.hbm [shape: f32[32,128], index: 1, kind: input, shape index: {}]
  %s2 = inlined_call_operand.hbm [shape: f32[128,128], index: 2, kind: input, shape index: {}]
  %s3 = inlined_call_operand.vmem [shape: f32[1,128], index: 3, kind: input, shape index: {}]
  %s4 = inlined_call_operand.hbm [shape: f32[2,16,128], index: 4, kind: input, shape index: {}]
  %s5 = inlined_call_operand.hbm [shape: f32[2,16,128], index: 5, kind: input, shape index: {}]
  %s6 = inlined_call_operand.hbm [shape: f32[2,6,16,128], index: 6, kind: output, shape index: {0}]
  %s7 = inlined_call_operand.hbm [shape: f32[2,6,16,128], index: 7, kind: output, shape index: {1}]
  %8 = xla_tuple %s6, %s7
  %s9 = sld [smem:[#allocation0]]
  $region85: #{tpu_custom_call.1} parent=0
    _
  %s11 = ssub.s32 1, %s9
  %s12 = scalar_select 0, %s11, %s9
  $region1: #{tpu_custom_call.1} parent=0
    #allocation5 [shape = 'u8[98304]{0}', space=vmem, size = 0x18000, scoped, tag = 'input window, operand 0']
    #allocation6 [shape = 's32[2]{0}', space=sflag, size = 0x8, scoped, tag = 'scoped memory for tpu_custom_call.1']
    #allocation7 [shape = 's32[2]{0}', space=sflag, size = 0x8, scoped, tag = 'scoped memory for tpu_custom_call.1']
    #allocation8 [shape = 'u8[16384]{0}', space=vmem, size = 0x4000, scoped, tag = 'input window, operand 1, single buffered']
    #allocation9 [shape = 's32[1]{0}', space=sflag, size = 0x4, scoped, tag = 'scoped memory for tpu_custom_call.1']
    #allocation10 [shape = 'u8[65536]{0}', space=vmem, size = 0x10000, scoped, tag = 'input window, operand 2, single buffered']
    #allocation11 [shape = 'u8[16384]{0}', space=vmem, size = 0x4000, scoped, tag = 'input window, operand 4']
    #allocation12 [shape = 's32[2]{0}', space=sflag, size = 0x8, scoped, tag = 'scoped memory for tpu_custom_call.1']
    #allocation13 [shape = 'u8[16384]{0}', space=vmem, size = 0x4000, scoped, tag = 'input window, operand 5']
    #allocation14 [shape = 'u8[98304]{0}', space=vmem, size = 0x18000, scoped, tag = 'output window, operand 0']
    #allocation15 [shape = 'u8[98304]{0}', space=vmem, size = 0x18000, scoped, tag = 'output window, operand 1']
    #allocation16 [shape = 's32[2]{0}', space=sflag, size = 0x8, scoped, tag = 'scoped memory for tpu_custom_call.1']
    %13 = vsyncpa [#allocation6], 0
    %s14 = scalar_lea.sflag [#allocation6], 1
    %15 = vsyncpa %s14, 0
    %16 = vsyncpa [#allocation9], 0
    %17 = vsyncpa [#allocation12], 0
    %s18 = scalar_lea.sflag [#allocation12], 1
    %19 = vsyncpa %s18, 0
    %20 = vsyncpa [#allocation7], 0
    %s21 = scalar_lea.sflag [#allocation7], 1
    %22 = vsyncpa %s21, 0
    %23 = vsyncpa [#allocation16], 0
    %s24 = scalar_lea.sflag [#allocation16], 1
    %25 = vsyncpa %s24, 0
    loop: start=0, step=1, limit=4
    $region2: #{tpu_custom_call.1} parent=1 // loop_pre_header
      _
    $region3: #{tpu_custom_call.1} parent=1 // loop_header
      %s27 = sphi 0, %s31
      %p28 = scmp.ge.s32.totalorder %s27, 4
      %s37 = sphi 0, %s39
      %s40 = sphi 0, %s37
      %s41 = sphi 0, %s40
      %s57 = sphi 0, %s41
      %s61 = sphi 0, %s61
      %s63 = sphi 0, %s61
      %s64 = sphi 0, %s63
      %s78 = sphi 0, %s64
      %s82 = sphi 0, %s82
      %s84 = sphi 0, %s82
      %s85 = sphi 0, %s84
      %s99 = sphi 0, %s85
      %s103 = sphi 0, %s103
      %s105 = sphi 0, %s103
      %s106 = sphi 0, %s105
      %s120 = sphi 0, %s106
      %s126 = sphi 0, %s128
      %s129 = sphi 0, %s126
      %s130 = sphi 0, %s129
      %s146 = sphi 0, %s130
      %s152 = sphi 0, %s154
      %s155 = sphi 0, %s152
      %s156 = sphi 0, %s155
      %s172 = sphi 0, %s156
      %s178 = sphi 0, %s180
      %s181 = sphi 0, %s178
      %s182 = sphi 0, %s181
      %s198 = sphi 0, %s182
      %s204 = sphi 0, %s206
      %s207 = sphi 0, %s204
      %s208 = sphi 0, %s207
      %s224 = sphi 0, %s208
    $region4: #{tpu_custom_call.1} parent=1 // loop_header_branch
      %30 = sbr.rel (%p28) target = $region8
    $region5: #{tpu_custom_call.1} parent=1 // loop_body
      %s32 = ssub.s32 %s27, 1
      %s33 = ssub.s32 %s27, 2
      %s34 = sadd.s32 %s27, 1
      %s35 = ssub.s32 %s27, %s34
      %p36 = scmp.eq.s32.totalorder %s35, 0
      %s38 = sadd.s32 %s37, 1
      %s39 = scalar_select %p36, %s37, %s38
      %p42 = pneg %p36
      %p43 = scmp.eq.s32.totalorder %s27, 1
      %p44 = por %p42, %p43
      %p45 = scmp.ne.s32.totalorder %s37, %s40
      %p46 = scmp.eq.s32.totalorder %s27, 0
      %p47 = por %p45, %p46
      %p48 = scmp.ne.s32.totalorder %s37, %s40
      %p49 = scmp.eq.s32.totalorder %s32, 1
      %p50 = por %p48, %p49
      %p51 = scmp.ne.s32.totalorder %s40, %s41
      %p52 = scmp.eq.s32.totalorder %s32, 0
      %p53 = por %p51, %p52
      %p54 = scmp.ne.s32.totalorder %s40, %s41
      %p55 = scmp.eq.s32.totalorder %s33, 1
      %p56 = por %p54, %p55
      %p58 = scmp.ne.s32.totalorder %s41, %s57
      %p59 = scmp.eq.s32.totalorder %s33, 0
      %p60 = por %p58, %p59
      %s62 = sadd.s32 %s61, 1
      %p65 = scmp.eq.s32.totalorder %s27, 1
      %p66 = scmp.ne.s32.totalorder %s61, %s63
      %p67 = scmp.eq.s32.totalorder %s27, 0
      %p68 = por %p66, %p67
      %p69 = scmp.ne.s32.totalorder %s61, %s63
      %p70 = scmp.eq.s32.totalorder %s32, 1
      %p71 = por %p69, %p70
      %p72 = scmp.ne.s32.totalorder %s63, %s64
      %p73 = scmp.eq.s32.totalorder %s32, 0
      %p74 = por %p72, %p73
      %p75 = scmp.ne.s32.totalorder %s63, %s64
      %p76 = scmp.eq.s32.totalorder %s33, 1
      %p77 = por %p75, %p76
      %p79 = scmp.ne.s32.totalorder %s64, %s78
      %p80 = scmp.eq.s32.totalorder %s33, 0
      %p81 = por %p79, %p80
      %s83 = sadd.s32 %s82, 1
      %p86 = scmp.eq.s32.totalorder %s27, 1
      %p87 = scmp.ne.s32.totalorder %s82, %s84
      %p88 = scmp.eq.s32.totalorder %s27, 0
      %p89 = por %p87, %p88
      %p90 = scmp.ne.s32.totalorder %s82, %s84
      %p91 = scmp.eq.s32.totalorder %s32, 1
      %p92 = por %p90, %p91
      %p93 = scmp.ne.s32.totalorder %s84, %s85
      %p94 = scmp.eq.s32.totalorder %s32, 0
      %p95 = por %p93, %p94
      %p96 = scmp.ne.s32.totalorder %s84, %s85
      %p97 = scmp.eq.s32.totalorder %s33, 1
      %p98 = por %p96, %p97
      %p100 = scmp.ne.s32.totalorder %s85, %s99
      %p101 = scmp.eq.s32.totalorder %s33, 0
      %p102 = por %p100, %p101
      %s104 = sadd.s32 %s103, 1
      %p107 = scmp.eq.s32.totalorder %s27, 1
      %p108 = scmp.ne.s32.totalorder %s103, %s105
      %p109 = scmp.eq.s32.totalorder %s27, 0
      %p110 = por %p108, %p109
      %p111 = scmp.ne.s32.totalorder %s103, %s105
      %p112 = scmp.eq.s32.totalorder %s32, 1
      %p113 = por %p111, %p112
      %p114 = scmp.ne.s32.totalorder %s105, %s106
      %p115 = scmp.eq.s32.totalorder %s32, 0
      %p116 = por %p114, %p115
      %p117 = scmp.ne.s32.totalorder %s105, %s106
      %p118 = scmp.eq.s32.totalorder %s33, 1
      %p119 = por %p117, %p118
      %p121 = scmp.ne.s32.totalorder %s106, %s120
      %p122 = scmp.eq.s32.totalorder %s33, 0
      %p123 = por %p121, %p122
      %s124 = ssub.s32 %s27, %s34
      %p125 = scmp.eq.s32.totalorder %s124, 0
      %s127 = sadd.s32 %s126, 1
      %s128 = scalar_select %p125, %s126, %s127
      %p131 = pneg %p125
      %p132 = scmp.eq.s32.totalorder %s27, 1
      %p133 = por %p131, %p132
      %p134 = scmp.ne.s32.totalorder %s126, %s129
      %p135 = scmp.eq.s32.totalorder %s27, 0
      %p136 = por %p134, %p135
      %p137 = scmp.ne.s32.totalorder %s126, %s129
      %p138 = scmp.eq.s32.totalorder %s32, 1
      %p139 = por %p137, %p138
      %p140 = scmp.ne.s32.totalorder %s129, %s130
      %p141 = scmp.eq.s32.totalorder %s32, 0
      %p142 = por %p140, %p141
      %p143 = scmp.ne.s32.totalorder %s129, %s130
      %p144 = scmp.eq.s32.totalorder %s33, 1
      %p145 = por %p143, %p144
      %p147 = scmp.ne.s32.totalorder %s130, %s146
      %p148 = scmp.eq.s32.totalorder %s33, 0
      %p149 = por %p147, %p148
      %s150 = ssub.s32 %s27, %s34
      %p151 = scmp.eq.s32.totalorder %s150, 0
      %s153 = sadd.s32 %s152, 1
      %s154 = scalar_select %p151, %s152, %s153
      %p157 = pneg %p151
      %p158 = scmp.eq.s32.totalorder %s27, 1
      %p159 = por %p157, %p158
      %p160 = scmp.ne.s32.totalorder %s152, %s155
      %p161 = scmp.eq.s32.totalorder %s27, 0
      %p162 = por %p160, %p161
      %p163 = scmp.ne.s32.totalorder %s152, %s155
      %p164 = scmp.eq.s32.totalorder %s32, 1
      %p165 = por %p163, %p164
      %p166 = scmp.ne.s32.totalorder %s155, %s156
      %p167 = scmp.eq.s32.totalorder %s32, 0
      %p168 = por %p166, %p167
      %p169 = scmp.ne.s32.totalorder %s155, %s156
      %p170 = scmp.eq.s32.totalorder %s33, 1
      %p171 = por %p169, %p170
      %p173 = scmp.ne.s32.totalorder %s156, %s172
      %p174 = scmp.eq.s32.totalorder %s33, 0
      %p175 = por %p173, %p174
      %s176 = ssub.s32 %s27, %s34
      %p177 = scmp.eq.s32.totalorder %s176, 0
      %s179 = sadd.s32 %s178, 1
      %s180 = scalar_select %p177, %s178, %s179
      %p183 = pneg %p177
      %p184 = scmp.eq.s32.totalorder %s27, 1
      %p185 = por %p183, %p184
      %p186 = scmp.ne.s32.totalorder %s178, %s181
      %p187 = scmp.eq.s32.totalorder %s27, 0
      %p188 = por %p186, %p187
      %p189 = scmp.ne.s32.totalorder %s178, %s181
      %p190 = scmp.eq.s32.totalorder %s32, 1
      %p191 = por %p189, %p190
      %p192 = scmp.ne.s32.totalorder %s181, %s182
      %p193 = scmp.eq.s32.totalorder %s32, 0
      %p194 = por %p192, %p193
      %p195 = scmp.ne.s32.totalorder %s181, %s182
      %p196 = scmp.eq.s32.totalorder %s33, 1
      %p197 = por %p195, %p196
      %p199 = scmp.ne.s32.totalorder %s182, %s198
      %p200 = scmp.eq.s32.totalorder %s33, 0
      %p201 = por %p199, %p200
      %s202 = ssub.s32 %s27, %s34
      %p203 = scmp.eq.s32.totalorder %s202, 0
      %s205 = sadd.s32 %s204, 1
      %s206 = scalar_select %p203, %s204, %s205
      %p209 = pneg %p203
      %p210 = scmp.eq.s32.totalorder %s27, 1
      %p211 = por %p209, %p210
      %p212 = scmp.ne.s32.totalorder %s204, %s207
      %p213 = scmp.eq.s32.totalorder %s27, 0
      %p214 = por %p212, %p213
      %p215 = scmp.ne.s32.totalorder %s204, %s207
      %p216 = scmp.eq.s32.totalorder %s32, 1
      %p217 = por %p215, %p216
      %p218 = scmp.ne.s32.totalorder %s207, %s208
      %p219 = scmp.eq.s32.totalorder %s32, 0
      %p220 = por %p218, %p219
      %p221 = scmp.ne.s32.totalorder %s207, %s208
      %p222 = scmp.eq.s32.totalorder %s33, 1
      %p223 = por %p221, %p222
      %p225 = scmp.ne.s32.totalorder %s208, %s224
      %p226 = scmp.eq.s32.totalorder %s33, 0
      %p227 = por %p225, %p226
      %p228 = scmp.le.s32.totalorder 1, %s27
      %p229 = scmp.lt.s32.totalorder %s27, 3
      %p230 = pnand %p228, %p229
      %p231 = pneg %p230
      // Predicated region
      $region9: #{tpu_custom_call.1} parent=5 // pred_check
        _
      $region10: #{tpu_custom_call.1} parent=5 // pred_check_branch
        %233 = sbr.rel (%p230) target = $region12
      $region11: #{tpu_custom_call.1} parent=5 // pred_region
        %s234 = ssub.s32 %s27, 1
        // Predicated region
        $region13: #{tpu_custom_call.1} parent=11 // pred_check
          %p235 = pneg %p74
        $region14: #{tpu_custom_call.1} parent=11 // pred_check_branch
          %237 = sbr.rel (%p235) target = $region16
        $region15: #{tpu_custom_call.1} parent=11 // pred_region
          %s239 = ssub.s32 512, 512
          %240 = vsyncadd [#allocation9], %s239
          %s241 = sshll.u32 [#allocation8], 4
          %s242 = int_to_ptr.vmem [resolvable:$true] %s241
          %247 = dma.hbm_to_vmem [thread:$0]  %s1, 512, %s242, [#allocation9], 128, 128, 8
        $region16: #{tpu_custom_call.1} parent=11 // pred_fallthru
          _
        // Predicated region
        $region17: #{tpu_custom_call.1} parent=11 // pred_check
          %p248 = pneg %p95
        $region18: #{tpu_custom_call.1} parent=11 // pred_check_branch
          %250 = sbr.rel (%p248) target = $region20
        $region19: #{tpu_custom_call.1} parent=11 // pred_region
          %s252 = ssub.s32 2048, 2048
          %253 = vsyncadd [#allocation9], %s252
          %s254 = sshll.u32 [#allocation10], 4
          %s255 = int_to_ptr.vmem [resolvable:$true] %s254
          %260 = dma.hbm_to_vmem [thread:$0]  %s2, 2048, %s255, [#allocation9], 128, 128, 8
        $region20: #{tpu_custom_call.1} parent=11 // pred_fallthru
          _
        // Predicated region
        $region21: #{tpu_custom_call.1} parent=11 // pred_check
          %p261 = pneg %p116
        $region22: #{tpu_custom_call.1} parent=11 // pred_check_branch
          %263 = sbr.rel (%p261) target = $region24
        $region23: #{tpu_custom_call.1} parent=11 // pred_region
          _
        $region24: #{tpu_custom_call.1} parent=11 // pred_fallthru
          _
      $region12: #{tpu_custom_call.1} parent=5 // pred_fallthru
        _
      %p264 = scmp.lt.s32.totalorder %s27, 2
      // Predicated region
      $region25: #{tpu_custom_call.1} parent=5 // pred_check
        %p265 = pneg %p264
      $region26: #{tpu_custom_call.1} parent=5 // pred_check_branch
        %267 = sbr.rel (%p265) target = $region28
      $region27: #{tpu_custom_call.1} parent=5 // pred_region
        // Predicated region
        $region29: #{tpu_custom_call.1} parent=27 // pred_check
          %p268 = pneg %p47
        $region30: #{tpu_custom_call.1} parent=27 // pred_check_branch
          %270 = sbr.rel (%p268) target = $region32
        $region31: #{tpu_custom_call.1} parent=27 // pred_region
          %s271 = sand.u32 %s37, 1
          %s272 = scalar_lea.sflag [#allocation6], %s271
          %s273 = sand.u32 %s37, 1
          %s274 = smul.addr %s273, 96
          %s275 = scalar_lea.vmem [#allocation5], %s274
          %s277 = ssub.s32 1536, 1536
          %278 = vsyncadd %s272, %s277
          %s279 = smul.addr %s27, 12
          %s280 = smul.addr %s279, 128
          %s281 = scalar_lea.hbm %s0, %s280
          %s282 = sshll.u32 %s275, 4
          %s283 = int_to_ptr.vmem [resolvable:$true] %s282
          %288 = dma.hbm_to_vmem [thread:$0]  %s281, 1536, %s283, %s272, 128, 128, 8
        $region32: #{tpu_custom_call.1} parent=27 // pred_fallthru
          _
        // Predicated region
        $region33: #{tpu_custom_call.1} parent=27 // pred_check
          %p289 = pneg %p136
        $region34: #{tpu_custom_call.1} parent=27 // pred_check_branch
          %291 = sbr.rel (%p289) target = $region36
        $region35: #{tpu_custom_call.1} parent=27 // pred_region
          %s292 = sand.u32 %s27, 1
          %s293 = scalar_lea.sflag [#allocation12], %s292
          %s294 = sand.u32 %s126, 1
          %s295 = smul.addr %s294, 16
          %s296 = scalar_lea.vmem [#allocation11], %s295
          %s298 = ssub.s32 256, 256
          %299 = vsyncadd %s293, %s298
          %s300 = smul.addr %s27, 2
          %s301 = smul.addr %s300, 128
          %s302 = scalar_lea.hbm %s4, %s301
          %s303 = sshll.u32 %s296, 4
          %s304 = int_to_ptr.vmem [resolvable:$true] %s303
          %309 = dma.hbm_to_vmem [thread:$0]  %s302, 256, %s304, %s293, 128, 128, 8
        $region36: #{tpu_custom_call.1} parent=27 // pred_fallthru
          _
        // Predicated region
        $region37: #{tpu_custom_call.1} parent=27 // pred_check
          %p310 = pneg %p162
        $region38: #{tpu_custom_call.1} parent=27 // pred_check_branch
          %312 = sbr.rel (%p310) target = $region40
        $region39: #{tpu_custom_call.1} parent=27 // pred_region
          %s313 = sand.u32 %s27, 1
          %s314 = scalar_lea.sflag [#allocation12], %s313
          %s315 = sand.u32 %s152, 1
          %s316 = smul.addr %s315, 16
          %s317 = scalar_lea.vmem [#allocation13], %s316
          %s319 = ssub.s32 256, 256
          %320 = vsyncadd %s314, %s319
          %s321 = smul.addr %s27, 2
          %s322 = smul.addr %s321, 128
          %s323 = scalar_lea.hbm %s5, %s322
          %s324 = sshll.u32 %s317, 4
          %s325 = int_to_ptr.vmem [resolvable:$true] %s324
          %330 = dma.hbm_to_vmem [thread:$0]  %s323, 256, %s325, %s314, 128, 128, 8
        $region40: #{tpu_custom_call.1} parent=27 // pred_fallthru
          _
      $region28: #{tpu_custom_call.1} parent=5 // pred_fallthru
        _
      %p331 = scmp.le.s32.totalorder 1, %s27
      %p332 = scmp.lt.s32.totalorder %s27, 3
      %p333 = pnand %p331, %p332
      %p334 = pneg %p333
      // Predicated region
      $region41: #{tpu_custom_call.1} parent=5 // pred_check
        _
      $region42: #{tpu_custom_call.1} parent=5 // pred_check_branch
        %336 = sbr.rel (%p333) target = $region44
      $region43: #{tpu_custom_call.1} parent=5 // pred_region
        %s337 = ssub.s32 %s27, 1
        %s338 = sand.u32 %s40, 1
        %s339 = scalar_lea.sflag [#allocation6], %s338
        %s340 = sand.u32 %s40, 1
        %s341 = smul.addr %s340, 96
        %s342 = scalar_lea.vmem [#allocation5], %s341
        // Predicated region
        $region45: #{tpu_custom_call.1} parent=43 // pred_check
          %p343 = pneg %p53
        $region46: #{tpu_custom_call.1} parent=43 // pred_check_branch
          %345 = sbr.rel (%p343) target = $region48
        $region47: #{tpu_custom_call.1} parent=43 // pred_region
          %346 = dma.done %s339, 1536
        $region48: #{tpu_custom_call.1} parent=43 // pred_fallthru
          _
        // Predicated region
        $region49: #{tpu_custom_call.1} parent=43 // pred_check
          %p347 = pneg %p74
        $region50: #{tpu_custom_call.1} parent=43 // pred_check_branch
          %349 = sbr.rel (%p347) target = $region52
        $region51: #{tpu_custom_call.1} parent=43 // pred_region
          %350 = dma.done [#allocation9], 512
        $region52: #{tpu_custom_call.1} parent=43 // pred_fallthru
          _
        // Predicated region
        $region53: #{tpu_custom_call.1} parent=43 // pred_check
          %p351 = pneg %p95
        $region54: #{tpu_custom_call.1} parent=43 // pred_check_branch
          %353 = sbr.rel (%p351) target = $region56
        $region55: #{tpu_custom_call.1} parent=43 // pred_region
          %354 = dma.done [#allocation9], 2048
        $region56: #{tpu_custom_call.1} parent=43 // pred_fallthru
          _
        %s355 = sand.u32 %s32, 1
        %s356 = scalar_lea.sflag [#allocation12], %s355
        %s357 = sand.u32 %s129, 1
        %s358 = smul.addr %s357, 16
        %s359 = scalar_lea.vmem [#allocation11], %s358
        // Predicated region
        $region57: #{tpu_custom_call.1} parent=43 // pred_check
          %p360 = pneg %p142
        $region58: #{tpu_custom_call.1} parent=43 // pred_check_branch
          %362 = sbr.rel (%p360) target = $region60
        $region59: #{tpu_custom_call.1} parent=43 // pred_region
          %363 = dma.done %s356, 256
        $region60: #{tpu_custom_call.1} parent=43 // pred_fallthru
          _
        %s364 = sand.u32 %s32, 1
        %s365 = scalar_lea.sflag [#allocation12], %s364
        %s366 = sand.u32 %s155, 1
        %s367 = smul.addr %s366, 16
        %s368 = scalar_lea.vmem [#allocation13], %s367
        // Predicated region
        $region61: #{tpu_custom_call.1} parent=43 // pred_check
          %p369 = pneg %p168
        $region62: #{tpu_custom_call.1} parent=43 // pred_check_branch
          %371 = sbr.rel (%p369) target = $region64
        $region63: #{tpu_custom_call.1} parent=43 // pred_region
          %372 = dma.done %s365, 256
        $region64: #{tpu_custom_call.1} parent=43 // pred_fallthru
          _
        %s373 = sand.u32 %s40, 1
        %s374 = scalar_lea.sflag [#allocation6], %s373
        %s375 = sand.u32 %s40, 1
        %s376 = smul.addr %s375, 96
        %s377 = scalar_lea.vmem [#allocation5], %s376
        %p378 = pneg %p53
        %p379 = pneg %p50
        %p380 = pneg %p74
        %p381 = pneg %p71
        %p382 = pneg %p95
        %p383 = pneg %p92
        %p384 = pneg %p116
        %p385 = pneg %p113
        %s386 = sand.u32 %s32, 1
        %s387 = scalar_lea.sflag [#allocation12], %s386
        %s388 = sand.u32 %s129, 1
        %s389 = smul.addr %s388, 16
        %s390 = scalar_lea.vmem [#allocation11], %s389
        %p391 = pneg %p142
        %p392 = pneg %p139
        %s393 = sand.u32 %s32, 1
        %s394 = scalar_lea.sflag [#allocation12], %s393
        %s395 = sand.u32 %s155, 1
        %s396 = smul.addr %s395, 16
        %s397 = scalar_lea.vmem [#allocation13], %s396
        %p398 = pneg %p168
        %p399 = pneg %p165
        %p400 = pneg %p194
        %p401 = pneg %p191
        %s402 = sand.u32 %s181, 1
        %s403 = scalar_lea.sflag [#allocation7], %s402
        %s404 = sand.u32 %s181, 1
        %s405 = smul.addr %s404, 96
        %s406 = scalar_lea.vmem [#allocation14], %s405
        %p407 = pneg %p220
        %p408 = pneg %p217
        %s409 = sand.u32 %s207, 1
        %s410 = scalar_lea.sflag [#allocation16], %s409
        %s411 = sand.u32 %s207, 1
        %s412 = smul.addr %s411, 96
        %s413 = scalar_lea.vmem [#allocation15], %s412
        %v414 = vld [vmem:[%s342] sm:$0xff]
        %v415 = vld [vmem:[%s342 + $0x8] sm:$0xff]
        %v416 = vld [vmem:[%s342 + $0x10] sm:$0xff]
        %v417 = vld [vmem:[%s342 + $0x18] sm:$0xff]
        %v418 = vld [vmem:[%s342 + $0x20] sm:$0xff]
        %v419 = vld [vmem:[%s342 + $0x28] sm:$0xff]
        %v420 = vld [vmem:[%s342 + $0x30] sm:$0xff]
        %v421 = vld [vmem:[%s342 + $0x38] sm:$0xff]
        %v422 = vld [vmem:[%s342 + $0x40] sm:$0xff]
        %v423 = vld [vmem:[%s342 + $0x48] sm:$0xff]
        %v424 = vld [vmem:[%s342 + $0x50] sm:$0xff]
        %v425 = vld [vmem:[%s342 + $0x58] sm:$0xff]
        %v426 = vld [vmem:[#allocation8] sm:$0xff]
        %v427 = vld [vmem:[#allocation8 + $0x8] sm:$0xff]
        %v428 = vld [vmem:[#allocation8 + $0x10] sm:$0xff]
        %v429 = vld [vmem:[#allocation8 + $0x18] sm:$0xff]
        %vm430 = vcmask 261120
        %v432 = vsel %vm430, %v414, 0
        %v435 = vsel %vm430, %v415, 0
        %v438 = vsel %vm430, %v416, 0
        %v441 = vsel %vm430, %v417, 0
        %v444 = vsel %vm430, %v418, 0
        %v447 = vsel %vm430, %v419, 0
        %v450 = vsel %vm430, %v420, 0
        %v453 = vsel %vm430, %v421, 0
        %v456 = vsel %vm430, %v422, 0
        %v459 = vsel %vm430, %v423, 0
        %v462 = vsel %vm430, %v424, 0
        %v465 = vsel %vm430, %v425, 0
        %467 = vmatprep.subr.mxu0 0.0
        %v468 = vand.u32 %v426, 4294901760
        %469 = vmatpush1.msra.mxu0 %v468
        %470 = vmatprep.subr.mxu0 0.0
        %v471 = vand.u32 %v427, 4294901760
        %472 = vmatpush1.msra.mxu0 %v471
        %473 = vmatprep.subr.mxu0 0.0
        %v474 = vand.u32 %v428, 4294901760
        %475 = vmatpush1.msra.mxu0 %v474
        %476 = vmatprep.subr.mxu0 0.0
        %v477 = vand.u32 %v429, 4294901760
        %478 = vmatpush1.msra.mxu0 %v477
        %479 = vmatprep.subr.mxu0 0.0
        %480 = vmatpush1.msra.mxu0 0.0
        %481 = vmatprep.subr.mxu0 0.0
        %482 = vmatpush1.msra.mxu0 0.0
        %483 = vmatprep.subr.mxu0 0.0
        %484 = vmatpush1.msra.mxu0 0.0
        %485 = vmatprep.subr.mxu0 0.0
        %486 = vmatpush1.msra.mxu0 0.0
        %487 = vmatprep.subr.mxu0 0.0
        %488 = vmatpush1.msra.mxu0 0.0
        %489 = vmatprep.subr.mxu0 0.0
        %490 = vmatpush1.msra.mxu0 0.0
        %491 = vmatprep.subr.mxu0 0.0
        %492 = vmatpush1.msra.mxu0 0.0
        %493 = vmatprep.subr.mxu0 0.0
        %494 = vmatpush1.msra.mxu0 0.0
        %495 = vmatprep.subr.mxu0 0.0
        %496 = vmatpush1.msra.mxu0 0.0
        %497 = vmatprep.subr.mxu0 0.0
        %498 = vmatpush1.msra.mxu0 0.0
        %499 = vmatprep.subr.mxu0 0.0
        %500 = vmatpush1.msra.mxu0 0.0
        %501 = vmatprep.subr.mxu0 0.0
        %502 = vmatpush1.msra.mxu0 0.0
        %503 = vmatprep.subr.mxu0 0.0
        %504 = vmatpush1.msra.mxu0 0.0
        %505 = vmatprep.subr.mxu0 0.0
        %506 = vmatpush1.msra.mxu0 0.0
        %507 = vmatprep.subr.mxu0 0.0
        %508 = vmatpush1.msra.mxu0 0.0
        %509 = vmatprep.subr.mxu0 0.0
        %510 = vmatpush1.msra.mxu0 0.0
        %511 = vmatprep.subr.mxu0 0.0
        %512 = vmatpush1.msra.mxu0 0.0
        %513 = vmatprep.subr.mxu0 0.0
        %514 = vmatpush1.msra.mxu0 0.0
        %515 = vmatprep.subr.mxu0 0.0
        %516 = vmatpush1.msra.mxu0 0.0
        %517 = vmatprep.subr.mxu0 0.0
        %518 = vmatpush1.msra.mxu0 0.0
        %519 = vmatprep.subr.mxu0 0.0
        %520 = vmatpush1.msra.mxu0 0.0
        %521 = vmatprep.subr.mxu0 0.0
        %522 = vmatpush1.msra.mxu0 0.0
        %523 = vmatprep.subr.mxu0 0.0
        %524 = vmatpush1.msra.mxu0 0.0
        %525 = vmatprep.subr.mxu0 0.0
        %526 = vmatpush1.msra.mxu0 0.0
        %527 = vmatprep.subr.mxu0 0.0
        %528 = vmatpush1.msra.mxu0 0.0
        %529 = vmatprep.subr.mxu0 0.0
        %530 = vmatpush1.msra.mxu0 0.0
        %531 = vmatprep.subr.mxu0 0.0
        %532 = vmatpush1.msra.mxu0 0.0
        %533 = vmatprep.subr.mxu0 0.0
        %534 = vmatpush1.msra.mxu0 0.0
        %535 = vmatprep.mubr.f32.mxu0 0.0
        %v536 = vand.u32 %v432, 4294901760
        %v537 = vsub.f32 %v432, %v536
        %v538 = vand.u32 %v537, 4294901760
        %v539 = vsub.f32 %v537, %v538
        %v540 = vand.u32 %v539, 4294901760
        %541 = vmatmul.mubr.f32.gmra.mrb[0].mxu0 %v540
        %v542 = vpop.f32.mrb[0].mxu0
        %v543 = vadd.f32 0.0, %v542
        %v544 = vpop.f32.mrb[0].mxu0
        %545 = vmatprep.mubr.f32.mxu0 0.0
        %v546 = vand.u32 %v435, 4294901760
        %v547 = vsub.f32 %v435, %v546
        %v548 = vand.u32 %v547, 4294901760
        %v549 = vsub.f32 %v547, %v548
        %v550 = vand.u32 %v549, 4294901760
        %551 = vmatmul.mubr.f32.gmra.mrb[0].mxu0 %v550
        %v552 = vpop.f32.mrb[0].mxu0
        %v553 = vadd.f32 0.0, %v552
        %v554 = vpop.f32.mrb[0].mxu0
        %555 = vmatprep.mubr.f32.mxu0 0.0
        %v556 = vand.u32 %v438, 4294901760
        %v557 = vsub.f32 %v438, %v556
        %v558 = vand.u32 %v557, 4294901760
        %v559 = vsub.f32 %v557, %v558
        %v560 = vand.u32 %v559, 4294901760
        %561 = vmatmul.mubr.f32.gmra.mrb[0].mxu0 %v560
        %v562 = vpop.f32.mrb[0].mxu0
        %v563 = vadd.f32 0.0, %v562
        %v564 = vpop.f32.mrb[0].mxu0
        %565 = vmatprep.mubr.f32.mxu0 0.0
        %v566 = vand.u32 %v441, 4294901760
        %v567 = vsub.f32 %v441, %v566
        %v568 = vand.u32 %v567, 4294901760
        %v569 = vsub.f32 %v567, %v568
        %v570 = vand.u32 %v569, 4294901760
        %571 = vmatmul.mubr.f32.gmra.mrb[0].mxu0 %v570
        %v572 = vpop.f32.mrb[0].mxu0
        %v573 = vadd.f32 0.0, %v572
        %v574 = vpop.f32.mrb[0].mxu0
        %575 = vmatprep.mubr.f32.mxu0 0.0
        %v576 = vand.u32 %v444, 4294901760
        %v577 = vsub.f32 %v444, %v576
        %v578 = vand.u32 %v577, 4294901760
        %v579 = vsub.f32 %v577, %v578
        %v580 = vand.u32 %v579, 4294901760
        %581 = vmatmul.mubr.f32.gmra.mrb[0].mxu0 %v580
        %v582 = vpop.f32.mrb[0].mxu0
        %v583 = vadd.f32 0.0, %v582
        %v584 = vpop.f32.mrb[0].mxu0
        %585 = vmatprep.mubr.f32.mxu0 0.0
        %v586 = vand.u32 %v447, 4294901760
        %v587 = vsub.f32 %v447, %v586
        %v588 = vand.u32 %v587, 4294901760
        %v589 = vsub.f32 %v587, %v588
        %v590 = vand.u32 %v589, 4294901760
        %591 = vmatmul.mubr.f32.gmra.mrb[0].mxu0 %v590
        %v592 = vpop.f32.mrb[0].mxu0
        %v593 = vadd.f32 0.0, %v592
        %v594 = vpop.f32.mrb[0].mxu0
        %595 = vmatprep.mubr.f32.mxu0 0.0
        %v596 = vand.u32 %v450, 4294901760
        %v597 = vsub.f32 %v450, %v596
        %v598 = vand.u32 %v597, 4294901760
        %v599 = vsub.f32 %v597, %v598
        %v600 = vand.u32 %v599, 4294901760
        %601 = vmatmul.mubr.f32.gmra.mrb[0].mxu0 %v600
        %v602 = vpop.f32.mrb[0].mxu0
        %v603 = vadd.f32 0.0, %v602
        %v604 = vpop.f32.mrb[0].mxu0
        %605 = vmatprep.mubr.f32.mxu0 0.0
        %v606 = vand.u32 %v453, 4294901760
        %v607 = vsub.f32 %v453, %v606
        %v608 = vand.u32 %v607, 4294901760
        %v609 = vsub.f32 %v607, %v608
        %v610 = vand.u32 %v609, 4294901760
        %611 = vmatmul.mubr.f32.gmra.mrb[0].mxu0 %v610
        %v612 = vpop.f32.mrb[0].mxu0
        %v613 = vadd.f32 0.0, %v612
        %v614 = vpop.f32.mrb[0].mxu0
        %615 = vmatprep.mubr.f32.mxu0 0.0
        %v616 = vand.u32 %v456, 4294901760
        %v617 = vsub.f32 %v456, %v616
        %v618 = vand.u32 %v617, 4294901760
        %v619 = vsub.f32 %v617, %v618
        %v620 = vand.u32 %v619, 4294901760
        %621 = vmatmul.mubr.f32.gmra.mrb[0].mxu0 %v620
        %v622 = vpop.f32.mrb[0].mxu0
        %v623 = vadd.f32 0.0, %v622
        %v624 = vpop.f32.mrb[0].mxu0
        %625 = vmatprep.mubr.f32.mxu0 0.0
        %v626 = vand.u32 %v459, 4294901760
        %v627 = vsub.f32 %v459, %v626
        %v628 = vand.u32 %v627, 4294901760
        %v629 = vsub.f32 %v627, %v628
        %v630 = vand.u32 %v629, 4294901760
        %631 = vmatmul.mubr.f32.gmra.mrb[0].mxu0 %v630
        %v632 = vpop.f32.mrb[0].mxu0
        %v633 = vadd.f32 0.0, %v632
        %v634 = vpop.f32.mrb[0].mxu0
        %635 = vmatprep.mubr.f32.mxu0 0.0
        %v636 = vand.u32 %v462, 4294901760
        %v637 = vsub.f32 %v462, %v636
        %v638 = vand.u32 %v637, 4294901760
        %v639 = vsub.f32 %v637, %v638
        %v640 = vand.u32 %v639, 4294901760
        %641 = vmatmul.mubr.f32.gmra.mrb[0].mxu0 %v640
        %v642 = vpop.f32.mrb[0].mxu0
        %v643 = vadd.f32 0.0, %v642
        %v644 = vpop.f32.mrb[0].mxu0
        %645 = vmatprep.mubr.f32.mxu0 0.0
        %v646 = vand.u32 %v465, 4294901760
        %v647 = vsub.f32 %v465, %v646
        %v648 = vand.u32 %v647, 4294901760
        %v649 = vsub.f32 %v647, %v648
        %v650 = vand.u32 %v649, 4294901760
        %651 = vmatmul.mubr.f32.gmra.mrb[0].mxu0 %v650
        %v652 = vpop.f32.mrb[0].mxu0
        %v653 = vadd.f32 0.0, %v652
        %v654 = vpop.f32.mrb[0].mxu0
        %655 = vdwg.mxu0
        %656 = vmatprep.subr.mxu0 0.0
        %v657 = vand.u32 %v426, 4294901760
        %v658 = vsub.f32 %v426, %v657
        %v659 = vand.u32 %v658, 4294901760
        %v660 = vsub.f32 %v658, %v659
        %v661 = vand.u32 %v660, 4294901760
        %662 = vmatpush1.msra.mxu0 %v661
        %663 = vmatprep.subr.mxu0 0.0
        %v664 = vand.u32 %v427, 4294901760
        %v665 = vsub.f32 %v427, %v664
        %v666 = vand.u32 %v665, 4294901760
        %v667 = vsub.f32 %v665, %v666
        %v668 = vand.u32 %v667, 4294901760
        %669 = vmatpush1.msra.mxu0 %v668
        %670 = vmatprep.subr.mxu0 0.0
        %v671 = vand.u32 %v428, 4294901760
        %v672 = vsub.f32 %v428, %v671
        %v673 = vand.u32 %v672, 4294901760
        %v674 = vsub.f32 %v672, %v673
        %v675 = vand.u32 %v674, 4294901760
        %676 = vmatpush1.msra.mxu0 %v675
        %677 = vmatprep.subr.mxu0 0.0
        %v678 = vand.u32 %v429, 4294901760
        %v679 = vsub.f32 %v429, %v678
        %v680 = vand.u32 %v679, 4294901760
        %v681 = vsub.f32 %v679, %v680
        %v682 = vand.u32 %v681, 4294901760
        %683 = vmatpush1.msra.mxu0 %v682
        %684 = vmatprep.subr.mxu0 0.0
        %685 = vmatpush1.msra.mxu0 0.0
        %686 = vmatprep.subr.mxu0 0.0
        %687 = vmatpush1.msra.mxu0 0.0
        %688 = vmatprep.subr.mxu0 0.0
        %689 = vmatpush1.msra.mxu0 0.0
        %690 = vmatprep.subr.mxu0 0.0
        %691 = vmatpush1.msra.mxu0 0.0
        %692 = vmatprep.subr.mxu0 0.0
        %693 = vmatpush1.msra.mxu0 0.0
        %694 = vmatprep.subr.mxu0 0.0
        %695 = vmatpush1.msra.mxu0 0.0
        %696 = vmatprep.subr.mxu0 0.0
        %697 = vmatpush1.msra.mxu0 0.0
        %698 = vmatprep.subr.mxu0 0.0
        %699 = vmatpush1.msra.mxu0 0.0
        %700 = vmatprep.subr.mxu0 0.0
        %701 = vmatpush1.msra.mxu0 0.0
        %702 = vmatprep.subr.mxu0 0.0
        %703 = vmatpush1.msra.mxu0 0.0
        %704 = vmatprep.subr.mxu0 0.0
        %705 = vmatpush1.msra.mxu0 0.0
        %706 = vmatprep.subr.mxu0 0.0
        %707 = vmatpush1.msra.mxu0 0.0
        %708 = vmatprep.subr.mxu0 0.0
        %709 = vmatpush1.msra.mxu0 0.0
        %710 = vmatprep.subr.mxu0 0.0
        %711 = vmatpush1.msra.mxu0 0.0
        %712 = vmatprep.subr.mxu0 0.0
        %713 = vmatpush1.msra.mxu0 0.0
        %714 = vmatprep.subr.mxu0 0.0
        %715 = vmatpush1.msra.mxu0 0.0
        %716 = vmatprep.subr.mxu0 0.0
        %717 = vmatpush1.msra.mxu0 0.0
        %718 = vmatprep.subr.mxu0 0.0
        %719 = vmatpush1.msra.mxu0 0.0
        %720 = vmatprep.subr.mxu0 0.0
        %721 = vmatpush1.msra.mxu0 0.0
        %722 = vmatprep.subr.mxu0 0.0
        %723 = vmatpush1.msra.mxu0 0.0
        %724 = vmatprep.subr.mxu0 0.0
        %725 = vmatpush1.msra.mxu0 0.0
        %726 = vmatprep.subr.mxu0 0.0
        %727 = vmatpush1.msra.mxu0 0.0
        %728 = vmatprep.subr.mxu0 0.0
        %729 = vmatpush1.msra.mxu0 0.0
        %730 = vmatprep.subr.mxu0 0.0
        %731 = vmatpush1.msra.mxu0 0.0
        %732 = vmatprep.subr.mxu0 0.0
        %733 = vmatpush1.msra.mxu0 0.0
        %734 = vmatprep.subr.mxu0 0.0
        %735 = vmatpush1.msra.mxu0 0.0
        %736 = vmatprep.subr.mxu0 0.0
        %737 = vmatpush1.msra.mxu0 0.0
        %738 = vmatprep.subr.mxu0 0.0
        %739 = vmatpush1.msra.mxu0 0.0
        %740 = vmatprep.mubr.f32.mxu0 0.0
        %v741 = vand.u32 %v432, 4294901760
        %742 = vmatmul.mubr.f32.gmra.mrb[0].mxu0 %v741
        %v743 = vpop.f32.mrb[0].mxu0
        %v744 = vadd.f32 %v543, %v743
        %v745 = vpop.f32.mrb[0].mxu0
        %746 = vmatprep.mubr.f32.mxu0 0.0
        %v747 = vand.u32 %v435, 4294901760
        %748 = vmatmul.mubr.f32.gmra.mrb[0].mxu0 %v747
        %v749 = vpop.f32.mrb[0].mxu0
        %v750 = vadd.f32 %v553, %v749
        %v751 = vpop.f32.mrb[0].mxu0
        %752 = vmatprep.mubr.f32.mxu0 0.0
        %v753 = vand.u32 %v438, 4294901760
        %754 = vmatmul.mubr.f32.gmra.mrb[0].mxu0 %v753
        %v755 = vpop.f32.mrb[0].mxu0
        %v756 = vadd.f32 %v563, %v755
        %v757 = vpop.f32.mrb[0].mxu0
        %758 = vmatprep.mubr.f32.mxu0 0.0
        %v759 = vand.u32 %v441, 4294901760
        %760 = vmatmul.mubr.f32.gmra.mrb[0].mxu0 %v759
        %v761 = vpop.f32.mrb[0].mxu0
        %v762 = vadd.f32 %v573, %v761
        %v763 = vpop.f32.mrb[0].mxu0
        %764 = vmatprep.mubr.f32.mxu0 0.0
        %v765 = vand.u32 %v444, 4294901760
        %766 = vmatmul.mubr.f32.gmra.mrb[0].mxu0 %v765
        %v767 = vpop.f32.mrb[0].mxu0
        %v768 = vadd.f32 %v583, %v767
        %v769 = vpop.f32.mrb[0].mxu0
        %770 = vmatprep.mubr.f32.mxu0 0.0
        %v771 = vand.u32 %v447, 4294901760
        %772 = vmatmul.mubr.f32.gmra.mrb[0].mxu0 %v771
        %v773 = vpop.f32.mrb[0].mxu0
        %v774 = vadd.f32 %v593, %v773
        %v775 = vpop.f32.mrb[0].mxu0
        %776 = vmatprep.mubr.f32.mxu0 0.0
        %v777 = vand.u32 %v450, 4294901760
        %778 = vmatmul.mubr.f32.gmra.mrb[0].mxu0 %v777
        %v779 = vpop.f32.mrb[0].mxu0
        %v780 = vadd.f32 %v603, %v779
        %v781 = vpop.f32.mrb[0].mxu0
        %782 = vmatprep.mubr.f32.mxu0 0.0
        %v783 = vand.u32 %v453, 4294901760
        %784 = vmatmul.mubr.f32.gmra.mrb[0].mxu0 %v783
        %v785 = vpop.f32.mrb[0].mxu0
        %v786 = vadd.f32 %v613, %v785
        %v787 = vpop.f32.mrb[0].mxu0
        %788 = vmatprep.mubr.f32.mxu0 0.0
        %v789 = vand.u32 %v456, 4294901760
        %790 = vmatmul.mubr.f32.gmra.mrb[0].mxu0 %v789
        %v791 = vpop.f32.mrb[0].mxu0
        %v792 = vadd.f32 %v623, %v791
        %v793 = vpop.f32.mrb[0].mxu0
        %794 = vmatprep.mubr.f32.mxu0 0.0
        %v795 = vand.u32 %v459, 4294901760
        %796 = vmatmul.mubr.f32.gmra.mrb[0].mxu0 %v795
        %v797 = vpop.f32.mrb[0].mxu0
        %v798 = vadd.f32 %v633, %v797
        %v799 = vpop.f32.mrb[0].mxu0
        %800 = vmatprep.mubr.f32.mxu0 0.0
        %v801 = vand.u32 %v462, 4294901760
        %802 = vmatmul.mubr.f32.gmra.mrb[0].mxu0 %v801
        %v803 = vpop.f32.mrb[0].mxu0
        %v804 = vadd.f32 %v643, %v803
        %v805 = vpop.f32.mrb[0].mxu0
        %806 = vmatprep.mubr.f32.mxu0 0.0
        %v807 = vand.u32 %v465, 4294901760
        %808 = vmatmul.mubr.f32.gmra.mrb[0].mxu0 %v807
        %v809 = vpop.f32.mrb[0].mxu0
        %v810 = vadd.f32 %v653, %v809
        %v811 = vpop.f32.mrb[0].mxu0
        %812 = vdwg.mxu0
        %813 = vmatprep.subr.mxu0 0.0
        %v814 = vand.u32 %v426, 4294901760
        %v815 = vsub.f32 %v426, %v814
        %816 = vmatpush1.msra.mxu0 %v815
        %817 = vmatprep.subr.mxu0 0.0
        %v818 = vand.u32 %v427, 4294901760
        %v819 = vsub.f32 %v427, %v818
        %820 = vmatpush1.msra.mxu0 %v819
        %821 = vmatprep.subr.mxu0 0.0
        %v822 = vand.u32 %v428, 4294901760
        %v823 = vsub.f32 %v428, %v822
        %824 = vmatpush1.msra.mxu0 %v823
        %825 = vmatprep.subr.mxu0 0.0
        %v826 = vand.u32 %v429, 4294901760
        %v827 = vsub.f32 %v429, %v826
        %828 = vmatpush1.msra.mxu0 %v827
        %829 = vmatprep.subr.mxu0 0.0
        %830 = vmatpush1.msra.mxu0 0.0
        %831 = vmatprep.subr.mxu0 0.0
        %832 = vmatpush1.msra.mxu0 0.0
        %833 = vmatprep.subr.mxu0 0.0
        %834 = vmatpush1.msra.mxu0 0.0
        %835 = vmatprep.subr.mxu0 0.0
        %836 = vmatpush1.msra.mxu0 0.0
        %837 = vmatprep.subr.mxu0 0.0
        %838 = vmatpush1.msra.mxu0 0.0
        %839 = vmatprep.subr.mxu0 0.0
        %840 = vmatpush1.msra.mxu0 0.0
        %841 = vmatprep.subr.mxu0 0.0
        %842 = vmatpush1.msra.mxu0 0.0
        %843 = vmatprep.subr.mxu0 0.0
        %844 = vmatpush1.msra.mxu0 0.0
        %845 = vmatprep.subr.mxu0 0.0
        %846 = vmatpush1.msra.mxu0 0.0
        %847 = vmatprep.subr.mxu0 0.0
        %848 = vmatpush1.msra.mxu0 0.0
        %849 = vmatprep.subr.mxu0 0.0
        %850 = vmatpush1.msra.mxu0 0.0
        %851 = vmatprep.subr.mxu0 0.0
        %852 = vmatpush1.msra.mxu0 0.0
        %853 = vmatprep.subr.mxu0 0.0
        %854 = vmatpush1.msra.mxu0 0.0
        %855 = vmatprep.subr.mxu0 0.0
        %856 = vmatpush1.msra.mxu0 0.0
        %857 = vmatprep.subr.mxu0 0.0
        %858 = vmatpush1.msra.mxu0 0.0
        %859 = vmatprep.subr.mxu0 0.0
        %860 = vmatpush1.msra.mxu0 0.0
        %861 = vmatprep.subr.mxu0 0.0
        %862 = vmatpush1.msra.mxu0 0.0
        %863 = vmatprep.subr.mxu0 0.0
        %864 = vmatpush1.msra.mxu0 0.0
        %865 = vmatprep.subr.mxu0 0.0
        %866 = vmatpush1.msra.mxu0 0.0
        %867 = vmatprep.subr.mxu0 0.0
        %868 = vmatpush1.msra.mxu0 0.0
        %869 = vmatprep.subr.mxu0 0.0
        %870 = vmatpush1.msra.mxu0 0.0
        %871 = vmatprep.subr.mxu0 0.0
        %872 = vmatpush1.msra.mxu0 0.0
        %873 = vmatprep.subr.mxu0 0.0
        %874 = vmatpush1.msra.mxu0 0.0
        %875 = vmatprep.subr.mxu0 0.0
        %876 = vmatpush1.msra.mxu0 0.0
        %877 = vmatprep.subr.mxu0 0.0
        %878 = vmatpush1.msra.mxu0 0.0
        %879 = vmatprep.subr.mxu0 0.0
        %880 = vmatpush1.msra.mxu0 0.0
        %881 = vmatprep.subr.mxu0 0.0
        %882 = vmatpush1.msra.mxu0 0.0
        %883 = vmatprep.subr.mxu0 0.0
        %884 = vmatpush1.msra.mxu0 0.0
        %885 = vmatprep.mubr.f32.mxu0 0.0
        %v886 = vand.u32 %v432, 4294901760
        %v887 = vsub.f32 %v432, %v886
        %888 = vmatmul.mubr.f32.gmra.mrb[0].mxu0 %v887
        %v889 = vpop.f32.mrb[0].mxu0
        %v890 = vadd.f32 %v744, %v889
        %v891 = vpop.f32.mrb[0].mxu0
        %892 = vmatprep.mubr.f32.mxu0 0.0
        %v893 = vand.u32 %v435, 4294901760
        %v894 = vsub.f32 %v435, %v893
        %895 = vmatmul.mubr.f32.gmra.mrb[0].mxu0 %v894
        %v896 = vpop.f32.mrb[0].mxu0
        %v897 = vadd.f32 %v750, %v896
        %v898 = vpop.f32.mrb[0].mxu0
        %899 = vmatprep.mubr.f32.mxu0 0.0
        %v900 = vand.u32 %v438, 4294901760
        %v901 = vsub.f32 %v438, %v900
        %902 = vmatmul.mubr.f32.gmra.mrb[0].mxu0 %v901
        %v903 = vpop.f32.mrb[0].mxu0
        %v904 = vadd.f32 %v756, %v903
        %v905 = vpop.f32.mrb[0].mxu0
        %906 = vmatprep.mubr.f32.mxu0 0.0
        %v907 = vand.u32 %v441, 4294901760
        %v908 = vsub.f32 %v441, %v907
        %909 = vmatmul.mubr.f32.gmra.mrb[0].mxu0 %v908
        %v910 = vpop.f32.mrb[0].mxu0
        %v911 = vadd.f32 %v762, %v910
        %v912 = vpop.f32.mrb[0].mxu0
        %913 = vmatprep.mubr.f32.mxu0 0.0
        %v914 = vand.u32 %v444, 4294901760
        %v915 = vsub.f32 %v444, %v914
        %916 = vmatmul.mubr.f32.gmra.mrb[0].mxu0 %v915
        %v917 = vpop.f32.mrb[0].mxu0
        %v918 = vadd.f32 %v768, %v917
        %v919 = vpop.f32.mrb[0].mxu0
        %920 = vmatprep.mubr.f32.mxu0 0.0
        %v921 = vand.u32 %v447, 4294901760
        %v922 = vsub.f32 %v447, %v921
        %923 = vmatmul.mubr.f32.gmra.mrb[0].mxu0 %v922
        %v924 = vpop.f32.mrb[0].mxu0
        %v925 = vadd.f32 %v774, %v924
        %v926 = vpop.f32.mrb[0].mxu0
        %927 = vmatprep.mubr.f32.mxu0 0.0
        %v928 = vand.u32 %v450, 4294901760
        %v929 = vsub.f32 %v450, %v928
        %930 = vmatmul.mubr.f32.gmra.mrb[0].mxu0 %v929
        %v931 = vpop.f32.mrb[0].mxu0
        %v932 = vadd.f32 %v780, %v931
        %v933 = vpop.f32.mrb[0].mxu0
        %934 = vmatprep.mubr.f32.mxu0 0.0
        %v935 = vand.u32 %v453, 4294901760
        %v936 = vsub.f32 %v453, %v935
        %937 = vmatmul.mubr.f32.gmra.mrb[0].mxu0 %v936
        %v938 = vpop.f32.mrb[0].mxu0
        %v939 = vadd.f32 %v786, %v938
        %v940 = vpop.f32.mrb[0].mxu0
        %941 = vmatprep.mubr.f32.mxu0 0.0
        %v942 = vand.u32 %v456, 4294901760
        %v943 = vsub.f32 %v456, %v942
        %944 = vmatmul.mubr.f32.gmra.mrb[0].mxu0 %v943
        %v945 = vpop.f32.mrb[0].mxu0
        %v946 = vadd.f32 %v792, %v945
        %v947 = vpop.f32.mrb[0].mxu0
        %948 = vmatprep.mubr.f32.mxu0 0.0
        %v949 = vand.u32 %v459, 4294901760
        %v950 = vsub.f32 %v459, %v949
        %951 = vmatmul.mubr.f32.gmra.mrb[0].mxu0 %v950
        %v952 = vpop.f32.mrb[0].mxu0
        %v953 = vadd.f32 %v798, %v952
        %v954 = vpop.f32.mrb[0].mxu0
        %955 = vmatprep.mubr.f32.mxu0 0.0
        %v956 = vand.u32 %v462, 4294901760
        %v957 = vsub.f32 %v462, %v956
        %958 = vmatmul.mubr.f32.gmra.mrb[0].mxu0 %v957
        %v959 = vpop.f32.mrb[0].mxu0
        %v960 = vadd.f32 %v804, %v959
        %v961 = vpop.f32.mrb[0].mxu0
        %962 = vmatprep.mubr.f32.mxu0 0.0
        %v963 = vand.u32 %v465, 4294901760
        %v964 = vsub.f32 %v465, %v963
        %965 = vmatmul.mubr.f32.gmra.mrb[0].mxu0 %v964
        %v966 = vpop.f32.mrb[0].mxu0
        %v967 = vadd.f32 %v810, %v966
        %v968 = vpop.f32.mrb[0].mxu0
        %969 = vdwg.mxu0
        %970 = vmatprep.subr.mxu0 0.0
        %v971 = vand.u32 %v426, 4294901760
        %972 = vmatpush1.msra.mxu0 %v971
        %973 = vmatprep.subr.mxu0 0.0
        %v974 = vand.u32 %v427, 4294901760
        %975 = vmatpush1.msra.mxu0 %v974
        %976 = vmatprep.subr.mxu0 0.0
        %v977 = vand.u32 %v428, 4294901760
        %978 = vmatpush1.msra.mxu0 %v977
        %979 = vmatprep.subr.mxu0 0.0
        %v980 = vand.u32 %v429, 4294901760
        %981 = vmatpush1.msra.mxu0 %v980
        %982 = vmatprep.subr.mxu0 0.0
        %983 = vmatpush1.msra.mxu0 0.0
        %984 = vmatprep.subr.mxu0 0.0
        %985 = vmatpush1.msra.mxu0 0.0
        %986 = vmatprep.subr.mxu0 0.0
        %987 = vmatpush1.msra.mxu0 0.0
        %988 = vmatprep.subr.mxu0 0.0
        %989 = vmatpush1.msra.mxu0 0.0
        %990 = vmatprep.subr.mxu0 0.0
        %991 = vmatpush1.msra.mxu0 0.0
        %992 = vmatprep.subr.mxu0 0.0
        %993 = vmatpush1.msra.mxu0 0.0
        %994 = vmatprep.subr.mxu0 0.0
        %995 = vmatpush1.msra.mxu0 0.0
        %996 = vmatprep.subr.mxu0 0.0
        %997 = vmatpush1.msra.mxu0 0.0
        %998 = vmatprep.subr.mxu0 0.0
        %999 = vmatpush1.msra.mxu0 0.0
        %1000 = vmatprep.subr.mxu0 0.0
        %1001 = vmatpush1.msra.mxu0 0.0
        %1002 = vmatprep.subr.mxu0 0.0
        %1003 = vmatpush1.msra.mxu0 0.0
        %1004 = vmatprep.subr.mxu0 0.0
        %1005 = vmatpush1.msra.mxu0 0.0
        %1006 = vmatprep.subr.mxu0 0.0
        %1007 = vmatpush1.msra.mxu0 0.0
        %1008 = vmatprep.subr.mxu0 0.0
        %1009 = vmatpush1.msra.mxu0 0.0
        %1010 = vmatprep.subr.mxu0 0.0
        %1011 = vmatpush1.msra.mxu0 0.0
        %1012 = vmatprep.subr.mxu0 0.0
        %1013 = vmatpush1.msra.mxu0 0.0
        %1014 = vmatprep.subr.mxu0 0.0
        %1015 = vmatpush1.msra.mxu0 0.0
        %1016 = vmatprep.subr.mxu0 0.0
        %1017 = vmatpush1.msra.mxu0 0.0
        %1018 = vmatprep.subr.mxu0 0.0
        %1019 = vmatpush1.msra.mxu0 0.0
        %1020 = vmatprep.subr.mxu0 0.0
        %1021 = vmatpush1.msra.mxu0 0.0
        %1022 = vmatprep.subr.mxu0 0.0
        %1023 = vmatpush1.msra.mxu0 0.0
        %1024 = vmatprep.subr.mxu0 0.0
        %1025 = vmatpush1.msra.mxu0 0.0
        %1026 = vmatprep.subr.mxu0 0.0
        %1027 = vmatpush1.msra.mxu0 0.0
        %1028 = vmatprep.subr.mxu0 0.0
        %1029 = vmatpush1.msra.mxu0 0.0
        %1030 = vmatprep.subr.mxu0 0.0
        %1031 = vmatpush1.msra.mxu0 0.0
        %1032 = vmatprep.subr.mxu0 0.0
        %1033 = vmatpush1.msra.mxu0 0.0
        %1034 = vmatprep.subr.mxu0 0.0
        %1035 = vmatpush1.msra.mxu0 0.0
        %1036 = vmatprep.subr.mxu0 0.0
        %1037 = vmatpush1.msra.mxu0 0.0
        %1038 = vmatprep.mubr.f32.mxu0 0.0
        %v1039 = vand.u32 %v432, 4294901760
        %v1040 = vsub.f32 %v432, %v1039
        %v1041 = vand.u32 %v1040, 4294901760
        %1042 = vmatmul.mubr.f32.gmra.mrb[0].mxu0 %v1041
        %v1043 = vpop.f32.mrb[0].mxu0
        %v1044 = vadd.f32 %v890, %v1043
        %v1045 = vpop.f32.mrb[0].mxu0
        %1046 = vmatprep.mubr.f32.mxu0 0.0
        %v1047 = vand.u32 %v435, 4294901760
        %v1048 = vsub.f32 %v435, %v1047
        %v1049 = vand.u32 %v1048, 4294901760
        %1050 = vmatmul.mubr.f32.gmra.mrb[0].mxu0 %v1049
        %v1051 = vpop.f32.mrb[0].mxu0
        %v1052 = vadd.f32 %v897, %v1051
        %v1053 = vpop.f32.mrb[0].mxu0
        %1054 = vmatprep.mubr.f32.mxu0 0.0
        %v1055 = vand.u32 %v438, 4294901760
        %v1056 = vsub.f32 %v438, %v1055
        %v1057 = vand.u32 %v1056, 4294901760
        %1058 = vmatmul.mubr.f32.gmra.mrb[0].mxu0 %v1057
        %v1059 = vpop.f32.mrb[0].mxu0
        %v1060 = vadd.f32 %v904, %v1059
        %v1061 = vpop.f32.mrb[0].mxu0
        %1062 = vmatprep.mubr.f32.mxu0 0.0
        %v1063 = vand.u32 %v441, 4294901760
        %v1064 = vsub.f32 %v441, %v1063
        %v1065 = vand.u32 %v1064, 4294901760
        %1066 = vmatmul.mubr.f32.gmra.mrb[0].mxu0 %v1065
        %v1067 = vpop.f32.mrb[0].mxu0
        %v1068 = vadd.f32 %v911, %v1067
        %v1069 = vpop.f32.mrb[0].mxu0
        %1070 = vmatprep.mubr.f32.mxu0 0.0
        %v1071 = vand.u32 %v444, 4294901760
        %v1072 = vsub.f32 %v444, %v1071
        %v1073 = vand.u32 %v1072, 4294901760
        %1074 = vmatmul.mubr.f32.gmra.mrb[0].mxu0 %v1073
        %v1075 = vpop.f32.mrb[0].mxu0
        %v1076 = vadd.f32 %v918, %v1075
        %v1077 = vpop.f32.mrb[0].mxu0
        %1078 = vmatprep.mubr.f32.mxu0 0.0
        %v1079 = vand.u32 %v447, 4294901760
        %v1080 = vsub.f32 %v447, %v1079
        %v1081 = vand.u32 %v1080, 4294901760
        %1082 = vmatmul.mubr.f32.gmra.mrb[0].mxu0 %v1081
        %v1083 = vpop.f32.mrb[0].mxu0
        %v1084 = vadd.f32 %v925, %v1083
        %v1085 = vpop.f32.mrb[0].mxu0
        %1086 = vmatprep.mubr.f32.mxu0 0.0
        %v1087 = vand.u32 %v450, 4294901760
        %v1088 = vsub.f32 %v450, %v1087
        %v1089 = vand.u32 %v1088, 4294901760
        %1090 = vmatmul.mubr.f32.gmra.mrb[0].mxu0 %v1089
        %v1091 = vpop.f32.mrb[0].mxu0
        %v1092 = vadd.f32 %v932, %v1091
        %v1093 = vpop.f32.mrb[0].mxu0
        %1094 = vmatprep.mubr.f32.mxu0 0.0
        %v1095 = vand.u32 %v453, 4294901760
        %v1096 = vsub.f32 %v453, %v1095
        %v1097 = vand.u32 %v1096, 4294901760
        %1098 = vmatmul.mubr.f32.gmra.mrb[0].mxu0 %v1097
        %v1099 = vpop.f32.mrb[0].mxu0
        %v1100 = vadd.f32 %v939, %v1099
        %v1101 = vpop.f32.mrb[0].mxu0
        %1102 = vmatprep.mubr.f32.mxu0 0.0
        %v1103 = vand.u32 %v456, 4294901760
        %v1104 = vsub.f32 %v456, %v1103
        %v1105 = vand.u32 %v1104, 4294901760
        %1106 = vmatmul.mubr.f32.gmra.mrb[0].mxu0 %v1105
        %v1107 = vpop.f32.mrb[0].mxu0
        %v1108 = vadd.f32 %v946, %v1107
        %v1109 = vpop.f32.mrb[0].mxu0
        %1110 = vmatprep.mubr.f32.mxu0 0.0
        %v1111 = vand.u32 %v459, 4294901760
        %v1112 = vsub.f32 %v459, %v1111
        %v1113 = vand.u32 %v1112, 4294901760
        %1114 = vmatmul.mubr.f32.gmra.mrb[0].mxu0 %v1113
        %v1115 = vpop.f32.mrb[0].mxu0
        %v1116 = vadd.f32 %v953, %v1115
        %v1117 = vpop.f32.mrb[0].mxu0
        %1118 = vmatprep.mubr.f32.mxu0 0.0
        %v1119 = vand.u32 %v462, 4294901760
        %v1120 = vsub.f32 %v462, %v1119
        %v1121 = vand.u32 %v1120, 4294901760
        %1122 = vmatmul.mubr.f32.gmra.mrb[0].mxu0 %v1121
        %v1123 = vpop.f32.mrb[0].mxu0
        %v1124 = vadd.f32 %v960, %v1123
        %v1125 = vpop.f32.mrb[0].mxu0
        %1126 = vmatprep.mubr.f32.mxu0 0.0
        %v1127 = vand.u32 %v465, 4294901760
        %v1128 = vsub.f32 %v465, %v1127
        %v1129 = vand.u32 %v1128, 4294901760
        %1130 = vmatmul.mubr.f32.gmra.mrb[0].mxu0 %v1129
        %v1131 = vpop.f32.mrb[0].mxu0
        %v1132 = vadd.f32 %v967, %v1131
        %v1133 = vpop.f32.mrb[0].mxu0
        %1134 = vdwg.mxu0
        %1135 = vmatprep.subr.mxu0 0.0
        %v1136 = vand.u32 %v426, 4294901760
        %v1137 = vsub.f32 %v426, %v1136
        %v1138 = vand.u32 %v1137, 4294901760
        %1139 = vmatpush1.msra.mxu0 %v1138
        %1140 = vmatprep.subr.mxu0 0.0
        %v1141 = vand.u32 %v427, 4294901760
        %v1142 = vsub.f32 %v427, %v1141
        %v1143 = vand.u32 %v1142, 4294901760
        %1144 = vmatpush1.msra.mxu0 %v1143
        %1145 = vmatprep.subr.mxu0 0.0
        %v1146 = vand.u32 %v428, 4294901760
        %v1147 = vsub.f32 %v428, %v1146
        %v1148 = vand.u32 %v1147, 4294901760
        %1149 = vmatpush1.msra.mxu0 %v1148
        %1150 = vmatprep.subr.mxu0 0.0
        %v1151 = vand.u32 %v429, 4294901760
        %v1152 = vsub.f32 %v429, %v1151
        %v1153 = vand.u32 %v1152, 4294901760
        %1154 = vmatpush1.msra.mxu0 %v1153
        %1155 = vmatprep.subr.mxu0 0.0
        %1156 = vmatpush1.msra.mxu0 0.0
        %1157 = vmatprep.subr.mxu0 0.0
        %1158 = vmatpush1.msra.mxu0 0.0
        %1159 = vmatprep.subr.mxu0 0.0
        %1160 = vmatpush1.msra.mxu0 0.0
        %1161 = vmatprep.subr.mxu0 0.0
        %1162 = vmatpush1.msra.mxu0 0.0
        %1163 = vmatprep.subr.mxu0 0.0
        %1164 = vmatpush1.msra.mxu0 0.0
        %1165 = vmatprep.subr.mxu0 0.0
        %1166 = vmatpush1.msra.mxu0 0.0
        %1167 = vmatprep.subr.mxu0 0.0
        %1168 = vmatpush1.msra.mxu0 0.0
        %1169 = vmatprep.subr.mxu0 0.0
        %1170 = vmatpush1.msra.mxu0 0.0
        %1171 = vmatprep.subr.mxu0 0.0
        %1172 = vmatpush1.msra.mxu0 0.0
        %1173 = vmatprep.subr.mxu0 0.0
        %1174 = vmatpush1.msra.mxu0 0.0
        %1175 = vmatprep.subr.mxu0 0.0
        %1176 = vmatpush1.msra.mxu0 0.0
        %1177 = vmatprep.subr.mxu0 0.0
        %1178 = vmatpush1.msra.mxu0 0.0
        %1179 = vmatprep.subr.mxu0 0.0
        %1180 = vmatpush1.msra.mxu0 0.0
        %1181 = vmatprep.subr.mxu0 0.0
        %1182 = vmatpush1.msra.mxu0 0.0
        %1183 = vmatprep.subr.mxu0 0.0
        %1184 = vmatpush1.msra.mxu0 0.0
        %1185 = vmatprep.subr.mxu0 0.0
        %1186 = vmatpush1.msra.mxu0 0.0
        %1187 = vmatprep.subr.mxu0 0.0
        %1188 = vmatpush1.msra.mxu0 0.0
        %1189 = vmatprep.subr.mxu0 0.0
        %1190 = vmatpush1.msra.mxu0 0.0
        %1191 = vmatprep.subr.mxu0 0.0
        %1192 = vmatpush1.msra.mxu0 0.0
        %1193 = vmatprep.subr.mxu0 0.0
        %1194 = vmatpush1.msra.mxu0 0.0
        %1195 = vmatprep.subr.mxu0 0.0
        %1196 = vmatpush1.msra.mxu0 0.0
        %1197 = vmatprep.subr.mxu0 0.0
        %1198 = vmatpush1.msra.mxu0 0.0
        %1199 = vmatprep.subr.mxu0 0.0
        %1200 = vmatpush1.msra.mxu0 0.0
        %1201 = vmatprep.subr.mxu0 0.0
        %1202 = vmatpush1.msra.mxu0 0.0
        %1203 = vmatprep.subr.mxu0 0.0
        %1204 = vmatpush1.msra.mxu0 0.0
        %1205 = vmatprep.subr.mxu0 0.0
        %1206 = vmatpush1.msra.mxu0 0.0
        %1207 = vmatprep.subr.mxu0 0.0
        %1208 = vmatpush1.msra.mxu0 0.0
        %1209 = vmatprep.subr.mxu0 0.0
        %1210 = vmatpush1.msra.mxu0 0.0
        %1211 = vmatprep.mubr.f32.mxu0 0.0
        %v1212 = vand.u32 %v432, 4294901760
        %1213 = vmatmul.mubr.f32.gmra.mrb[0].mxu0 %v1212
        %v1214 = vpop.f32.mrb[0].mxu0
        %v1215 = vadd.f32 %v1044, %v1214
        %v1216 = vpop.f32.mrb[0].mxu0
        %1217 = vmatprep.mubr.f32.mxu0 0.0
        %v1218 = vand.u32 %v435, 4294901760
        %1219 = vmatmul.mubr.f32.gmra.mrb[0].mxu0 %v1218
        %v1220 = vpop.f32.mrb[0].mxu0
        %v1221 = vadd.f32 %v1052, %v1220
        %v1222 = vpop.f32.mrb[0].mxu0
        %1223 = vmatprep.mubr.f32.mxu0 0.0
        %v1224 = vand.u32 %v438, 4294901760
        %1225 = vmatmul.mubr.f32.gmra.mrb[0].mxu0 %v1224
        %v1226 = vpop.f32.mrb[0].mxu0
        %v1227 = vadd.f32 %v1060, %v1226
        %v1228 = vpop.f32.mrb[0].mxu0
        %1229 = vmatprep.mubr.f32.mxu0 0.0
        %v1230 = vand.u32 %v441, 4294901760
        %1231 = vmatmul.mubr.f32.gmra.mrb[0].mxu0 %v1230
        %v1232 = vpop.f32.mrb[0].mxu0
        %v1233 = vadd.f32 %v1068, %v1232
        %v1234 = vpop.f32.mrb[0].mxu0
        %1235 = vmatprep.mubr.f32.mxu0 0.0
        %v1236 = vand.u32 %v444, 4294901760
        %1237 = vmatmul.mubr.f32.gmra.mrb[0].mxu0 %v1236
        %v1238 = vpop.f32.mrb[0].mxu0
        %v1239 = vadd.f32 %v1076, %v1238
        %v1240 = vpop.f32.mrb[0].mxu0
        %1241 = vmatprep.mubr.f32.mxu0 0.0
        %v1242 = vand.u32 %v447, 4294901760
        %1243 = vmatmul.mubr.f32.gmra.mrb[0].mxu0 %v1242
        %v1244 = vpop.f32.mrb[0].mxu0
        %v1245 = vadd.f32 %v1084, %v1244
        %v1246 = vpop.f32.mrb[0].mxu0
        %1247 = vmatprep.mubr.f32.mxu0 0.0
        %v1248 = vand.u32 %v450, 4294901760
        %1249 = vmatmul.mubr.f32.gmra.mrb[0].mxu0 %v1248
        %v1250 = vpop.f32.mrb[0].mxu0
        %v1251 = vadd.f32 %v1092, %v1250
        %v1252 = vpop.f32.mrb[0].mxu0
        %1253 = vmatprep.mubr.f32.mxu0 0.0
        %v1254 = vand.u32 %v453, 4294901760
        %1255 = vmatmul.mubr.f32.gmra.mrb[0].mxu0 %v1254
        %v1256 = vpop.f32.mrb[0].mxu0
        %v1257 = vadd.f32 %v1100, %v1256
        %v1258 = vpop.f32.mrb[0].mxu0
        %1259 = vmatprep.mubr.f32.mxu0 0.0
        %v1260 = vand.u32 %v456, 4294901760
        %1261 = vmatmul.mubr.f32.gmra.mrb[0].mxu0 %v1260
        %v1262 = vpop.f32.mrb[0].mxu0
        %v1263 = vadd.f32 %v1108, %v1262
        %v1264 = vpop.f32.mrb[0].mxu0
        %1265 = vmatprep.mubr.f32.mxu0 0.0
        %v1266 = vand.u32 %v459, 4294901760
        %1267 = vmatmul.mubr.f32.gmra.mrb[0].mxu0 %v1266
        %v1268 = vpop.f32.mrb[0].mxu0
        %v1269 = vadd.f32 %v1116, %v1268
        %v1270 = vpop.f32.mrb[0].mxu0
        %1271 = vmatprep.mubr.f32.mxu0 0.0
        %v1272 = vand.u32 %v462, 4294901760
        %1273 = vmatmul.mubr.f32.gmra.mrb[0].mxu0 %v1272
        %v1274 = vpop.f32.mrb[0].mxu0
        %v1275 = vadd.f32 %v1124, %v1274
        %v1276 = vpop.f32.mrb[0].mxu0
        %1277 = vmatprep.mubr.f32.mxu0 0.0
        %v1278 = vand.u32 %v465, 4294901760
        %1279 = vmatmul.mubr.f32.gmra.mrb[0].mxu0 %v1278
        %v1280 = vpop.f32.mrb[0].mxu0
        %v1281 = vadd.f32 %v1132, %v1280
        %v1282 = vpop.f32.mrb[0].mxu0
        %1283 = vdwg.mxu0
        %1284 = vmatprep.subr.mxu0 0.0
        %v1285 = vand.u32 %v426, 4294901760
        %1286 = vmatpush1.msra.mxu0 %v1285
        %1287 = vmatprep.subr.mxu0 0.0
        %v1288 = vand.u32 %v427, 4294901760
        %1289 = vmatpush1.msra.mxu0 %v1288
        %1290 = vmatprep.subr.mxu0 0.0
        %v1291 = vand.u32 %v428, 4294901760
        %1292 = vmatpush1.msra.mxu0 %v1291
        %1293 = vmatprep.subr.mxu0 0.0
        %v1294 = vand.u32 %v429, 4294901760
        %1295 = vmatpush1.msra.mxu0 %v1294
        %1296 = vmatprep.subr.mxu0 0.0
        %1297 = vmatpush1.msra.mxu0 0.0
        %1298 = vmatprep.subr.mxu0 0.0
        %1299 = vmatpush1.msra.mxu0 0.0
        %1300 = vmatprep.subr.mxu0 0.0
        %1301 = vmatpush1.msra.mxu0 0.0
        %1302 = vmatprep.subr.mxu0 0.0
        %1303 = vmatpush1.msra.mxu0 0.0
        %1304 = vmatprep.subr.mxu0 0.0
        %1305 = vmatpush1.msra.mxu0 0.0
        %1306 = vmatprep.subr.mxu0 0.0
        %1307 = vmatpush1.msra.mxu0 0.0
        %1308 = vmatprep.subr.mxu0 0.0
        %1309 = vmatpush1.msra.mxu0 0.0
        %1310 = vmatprep.subr.mxu0 0.0
        %1311 = vmatpush1.msra.mxu0 0.0
        %1312 = vmatprep.subr.mxu0 0.0
        %1313 = vmatpush1.msra.mxu0 0.0
        %1314 = vmatprep.subr.mxu0 0.0
        %1315 = vmatpush1.msra.mxu0 0.0
        %1316 = vmatprep.subr.mxu0 0.0
        %1317 = vmatpush1.msra.mxu0 0.0
        %1318 = vmatprep.subr.mxu0 0.0
        %1319 = vmatpush1.msra.mxu0 0.0
        %1320 = vmatprep.subr.mxu0 0.0
        %1321 = vmatpush1.msra.mxu0 0.0
        %1322 = vmatprep.subr.mxu0 0.0
        %1323 = vmatpush1.msra.mxu0 0.0
        %1324 = vmatprep.subr.mxu0 0.0
        %1325 = vmatpush1.msra.mxu0 0.0
        %1326 = vmatprep.subr.mxu0 0.0
        %1327 = vmatpush1.msra.mxu0 0.0
        %1328 = vmatprep.subr.mxu0 0.0
        %1329 = vmatpush1.msra.mxu0 0.0
        %1330 = vmatprep.subr.mxu0 0.0
        %1331 = vmatpush1.msra.mxu0 0.0
        %1332 = vmatprep.subr.mxu0 0.0
        %1333 = vmatpush1.msra.mxu0 0.0
        %1334 = vmatprep.subr.mxu0 0.0
        %1335 = vmatpush1.msra.mxu0 0.0
        %1336 = vmatprep.subr.mxu0 0.0
        %1337 = vmatpush1.msra.mxu0 0.0
        %1338 = vmatprep.subr.mxu0 0.0
        %1339 = vmatpush1.msra.mxu0 0.0
        %1340 = vmatprep.subr.mxu0 0.0
        %1341 = vmatpush1.msra.mxu0 0.0
        %1342 = vmatprep.subr.mxu0 0.0
        %1343 = vmatpush1.msra.mxu0 0.0
        %1344 = vmatprep.subr.mxu0 0.0
        %1345 = vmatpush1.msra.mxu0 0.0
        %1346 = vmatprep.subr.mxu0 0.0
        %1347 = vmatpush1.msra.mxu0 0.0
        %1348 = vmatprep.subr.mxu0 0.0
        %1349 = vmatpush1.msra.mxu0 0.0
        %1350 = vmatprep.subr.mxu0 0.0
        %1351 = vmatpush1.msra.mxu0 0.0
        %1352 = vmatprep.mubr.f32.mxu0 0.0
        %v1353 = vand.u32 %v432, 4294901760
        %1354 = vmatmul.mubr.f32.gmra.mrb[0].mxu0 %v1353
        %v1355 = vpop.f32.mrb[0].mxu0
        %v1356 = vadd.f32 %v1215, %v1355
        %v1357 = vpop.f32.mrb[0].mxu0
        %1358 = vmatprep.mubr.f32.mxu0 0.0
        %v1359 = vand.u32 %v435, 4294901760
        %1360 = vmatmul.mubr.f32.gmra.mrb[0].mxu0 %v1359
        %v1361 = vpop.f32.mrb[0].mxu0
        %v1362 = vadd.f32 %v1221, %v1361
        %v1363 = vpop.f32.mrb[0].mxu0
        %1364 = vmatprep.mubr.f32.mxu0 0.0
        %v1365 = vand.u32 %v438, 4294901760
        %1366 = vmatmul.mubr.f32.gmra.mrb[0].mxu0 %v1365
        %v1367 = vpop.f32.mrb[0].mxu0
        %v1368 = vadd.f32 %v1227, %v1367
        %v1369 = vpop.f32.mrb[0].mxu0
        %1370 = vmatprep.mubr.f32.mxu0 0.0
        %v1371 = vand.u32 %v441, 4294901760
        %1372 = vmatmul.mubr.f32.gmra.mrb[0].mxu0 %v1371
        %v1373 = vpop.f32.mrb[0].mxu0
        %v1374 = vadd.f32 %v1233, %v1373
        %v1375 = vpop.f32.mrb[0].mxu0
        %1376 = vmatprep.mubr.f32.mxu0 0.0
        %v1377 = vand.u32 %v444, 4294901760
        %1378 = vmatmul.mubr.f32.gmra.mrb[0].mxu0 %v1377
        %v1379 = vpop.f32.mrb[0].mxu0
        %v1380 = vadd.f32 %v1239, %v1379
        %v1381 = vpop.f32.mrb[0].mxu0
        %1382 = vmatprep.mubr.f32.mxu0 0.0
        %v1383 = vand.u32 %v447, 4294901760
        %1384 = vmatmul.mubr.f32.gmra.mrb[0].mxu0 %v1383
        %v1385 = vpop.f32.mrb[0].mxu0
        %v1386 = vadd.f32 %v1245, %v1385
        %v1387 = vpop.f32.mrb[0].mxu0
        %1388 = vmatprep.mubr.f32.mxu0 0.0
        %v1389 = vand.u32 %v450, 4294901760
        %1390 = vmatmul.mubr.f32.gmra.mrb[0].mxu0 %v1389
        %v1391 = vpop.f32.mrb[0].mxu0
        %v1392 = vadd.f32 %v1251, %v1391
        %v1393 = vpop.f32.mrb[0].mxu0
        %1394 = vmatprep.mubr.f32.mxu0 0.0
        %v1395 = vand.u32 %v453, 4294901760
        %1396 = vmatmul.mubr.f32.gmra.mrb[0].mxu0 %v1395
        %v1397 = vpop.f32.mrb[0].mxu0
        %v1398 = vadd.f32 %v1257, %v1397
        %v1399 = vpop.f32.mrb[0].mxu0
        %1400 = vmatprep.mubr.f32.mxu0 0.0
        %v1401 = vand.u32 %v456, 4294901760
        %1402 = vmatmul.mubr.f32.gmra.mrb[0].mxu0 %v1401
        %v1403 = vpop.f32.mrb[0].mxu0
        %v1404 = vadd.f32 %v1263, %v1403
        %v1405 = vpop.f32.mrb[0].mxu0
        %1406 = vmatprep.mubr.f32.mxu0 0.0
        %v1407 = vand.u32 %v459, 4294901760
        %1408 = vmatmul.mubr.f32.gmra.mrb[0].mxu0 %v1407
        %v1409 = vpop.f32.mrb[0].mxu0
        %v1410 = vadd.f32 %v1269, %v1409
        %v1411 = vpop.f32.mrb[0].mxu0
        %1412 = vmatprep.mubr.f32.mxu0 0.0
        %v1413 = vand.u32 %v462, 4294901760
        %1414 = vmatmul.mubr.f32.gmra.mrb[0].mxu0 %v1413
        %v1415 = vpop.f32.mrb[0].mxu0
        %v1416 = vadd.f32 %v1275, %v1415
        %v1417 = vpop.f32.mrb[0].mxu0
        %1418 = vmatprep.mubr.f32.mxu0 0.0
        %v1419 = vand.u32 %v465, 4294901760
        %1420 = vmatmul.mubr.f32.gmra.mrb[0].mxu0 %v1419
        %v1421 = vpop.f32.mrb[0].mxu0
        %v1422 = vadd.f32 %v1281, %v1421
        %v1423 = vpop.f32.mrb[0].mxu0
        %1424 = vdwg.mxu0
        %1425 = vst [vmem:[#allocation2] sm:$0xff] %v1356
        %1426 = vst [vmem:[#allocation2 + $0x8] sm:$0xff] %v1362
        %1427 = vst [vmem:[#allocation2 + $0x10] sm:$0xff] %v1368
        %1428 = vst [vmem:[#allocation2 + $0x18] sm:$0xff] %v1374
        %1429 = vst [vmem:[#allocation2 + $0x20] sm:$0xff] %v1380
        %1430 = vst [vmem:[#allocation2 + $0x28] sm:$0xff] %v1386
        %1431 = vst [vmem:[#allocation2 + $0x30] sm:$0xff] %v1392
        %1432 = vst [vmem:[#allocation2 + $0x38] sm:$0xff] %v1398
        %1433 = vst [vmem:[#allocation2 + $0x40] sm:$0xff] %v1404
        %1434 = vst [vmem:[#allocation2 + $0x48] sm:$0xff] %v1410
        %1435 = vst [vmem:[#allocation2 + $0x50] sm:$0xff] %v1416
        %1436 = vst [vmem:[#allocation2 + $0x58] sm:$0xff] %v1422
        %v1437 = vld [vmem:[%s359] sm:$0xff]
        %v1438 = vld [vmem:[%s359 + $0x8] sm:$0xff]
        %1439 = vst [vmem:[#allocation3] sm:$0xff] %v1437
        %1440 = vst [vmem:[#allocation3 + $0x8] sm:$0xff] %v1438
        %v1441 = vld [vmem:[%s368] sm:$0xff]
        %v1442 = vld [vmem:[%s368 + $0x8] sm:$0xff]
        %1443 = vst [vmem:[#allocation4] sm:$0xff] %v1441
        %1444 = vst [vmem:[#allocation4 + $0x8] sm:$0xff] %v1442
        %v1445 = vld [vmem:[#allocation10] sm:$0xff]
        %v1446 = vld [vmem:[#allocation10 + $0x8] sm:$0xff]
        %v1447 = vld [vmem:[#allocation10 + $0x10] sm:$0xff]
        %v1448 = vld [vmem:[#allocation10 + $0x18] sm:$0xff]
        %v1449 = vld [vmem:[#allocation10 + $0x20] sm:$0xff]
        %v1450 = vld [vmem:[#allocation10 + $0x28] sm:$0xff]
        %v1451 = vld [vmem:[#allocation10 + $0x30] sm:$0xff]
        %v1452 = vld [vmem:[#allocation10 + $0x38] sm:$0xff]
        %v1453 = vld [vmem:[#allocation10 + $0x40] sm:$0xff]
        %v1454 = vld [vmem:[#allocation10 + $0x48] sm:$0xff]
        %v1455 = vld [vmem:[#allocation10 + $0x50] sm:$0xff]
        %v1456 = vld [vmem:[#allocation10 + $0x58] sm:$0xff]
        %v1457 = vld [vmem:[#allocation10 + $0x60] sm:$0xff]
        %v1458 = vld [vmem:[#allocation10 + $0x68] sm:$0xff]
        %v1459 = vld [vmem:[#allocation10 + $0x70] sm:$0xff]
        %v1460 = vld [vmem:[#allocation10 + $0x78] sm:$0xff]
        %v1461 = vld [vmem:[%s3] sm:$0x1]
        %v1462 = vsub.f32 1.0, %v1461
        %v1463 = vld [vmem:[#allocation2] sm:$0xff]
        %v1464 = vld [vmem:[#allocation2 + $0x8] sm:$0xff]
        %v1465 = vld [vmem:[#allocation3] sm:$0xff]
        %v1466 = vld [vmem:[#allocation3 + $0x8] sm:$0xff]
        %1467 = vmatprep.subr.mxu0 0.0
        %v1468 = vand.u32 %v1445, 4294901760
        %1469 = vmatpush1.msra.mxu0 %v1468
        %1470 = vmatprep.subr.mxu0 0.0
        %v1471 = vand.u32 %v1446, 4294901760
        %1472 = vmatpush1.msra.mxu0 %v1471
        %1473 = vmatprep.subr.mxu0 0.0
        %v1474 = vand.u32 %v1447, 4294901760
        %1475 = vmatpush1.msra.mxu0 %v1474
        %1476 = vmatprep.subr.mxu0 0.0
        %v1477 = vand.u32 %v1448, 4294901760
        %1478 = vmatpush1.msra.mxu0 %v1477
        %1479 = vmatprep.subr.mxu0 0.0
        %v1480 = vand.u32 %v1449, 4294901760
        %1481 = vmatpush1.msra.mxu0 %v1480
        %1482 = vmatprep.subr.mxu0 0.0
        %v1483 = vand.u32 %v1450, 4294901760
        %1484 = vmatpush1.msra.mxu0 %v1483
        %1485 = vmatprep.subr.mxu0 0.0
        %v1486 = vand.u32 %v1451, 4294901760
        %1487 = vmatpush1.msra.mxu0 %v1486
        %1488 = vmatprep.subr.mxu0 0.0
        %v1489 = vand.u32 %v1452, 4294901760
        %1490 = vmatpush1.msra.mxu0 %v1489
        %1491 = vmatprep.subr.mxu0 0.0
        %v1492 = vand.u32 %v1453, 4294901760
        %1493 = vmatpush1.msra.mxu0 %v1492
        %1494 = vmatprep.subr.mxu0 0.0
        %v1495 = vand.u32 %v1454, 4294901760
        %1496 = vmatpush1.msra.mxu0 %v1495
        %1497 = vmatprep.subr.mxu0 0.0
        %v1498 = vand.u32 %v1455, 4294901760
        %1499 = vmatpush1.msra.mxu0 %v1498
        %1500 = vmatprep.subr.mxu0 0.0
        %v1501 = vand.u32 %v1456, 4294901760
        %1502 = vmatpush1.msra.mxu0 %v1501
        %1503 = vmatprep.subr.mxu0 0.0
        %v1504 = vand.u32 %v1457, 4294901760
        %1505 = vmatpush1.msra.mxu0 %v1504
        %1506 = vmatprep.subr.mxu0 0.0
        %v1507 = vand.u32 %v1458, 4294901760
        %1508 = vmatpush1.msra.mxu0 %v1507
        %1509 = vmatprep.subr.mxu0 0.0
        %v1510 = vand.u32 %v1459, 4294901760
        %1511 = vmatpush1.msra.mxu0 %v1510
        %1512 = vmatprep.subr.mxu0 0.0
        %v1513 = vand.u32 %v1460, 4294901760
        %1514 = vmatpush1.msra.mxu0 %v1513
        %1515 = vmatprep.subr.mxu0 0.0
        %1516 = vmatpush1.msra.mxu0 0.0
        %1517 = vmatprep.subr.mxu0 0.0
        %1518 = vmatpush1.msra.mxu0 0.0
        %1519 = vmatprep.subr.mxu0 0.0
        %1520 = vmatpush1.msra.mxu0 0.0
        %1521 = vmatprep.subr.mxu0 0.0
        %1522 = vmatpush1.msra.mxu0 0.0
        %1523 = vmatprep.subr.mxu0 0.0
        %1524 = vmatpush1.msra.mxu0 0.0
        %1525 = vmatprep.subr.mxu0 0.0
        %1526 = vmatpush1.msra.mxu0 0.0
        %1527 = vmatprep.subr.mxu0 0.0
        %1528 = vmatpush1.msra.mxu0 0.0
        %1529 = vmatprep.subr.mxu0 0.0
        %1530 = vmatpush1.msra.mxu0 0.0
        %1531 = vmatprep.subr.mxu0 0.0
        %1532 = vmatpush1.msra.mxu0 0.0
        %1533 = vmatprep.subr.mxu0 0.0
        %1534 = vmatpush1.msra.mxu0 0.0
        %1535 = vmatprep.subr.mxu0 0.0
        %1536 = vmatpush1.msra.mxu0 0.0
        %1537 = vmatprep.subr.mxu0 0.0
        %1538 = vmatpush1.msra.mxu0 0.0
        %1539 = vmatprep.subr.mxu0 0.0
        %1540 = vmatpush1.msra.mxu0 0.0
        %1541 = vmatprep.subr.mxu0 0.0
        %1542 = vmatpush1.msra.mxu0 0.0
        %1543 = vmatprep.subr.mxu0 0.0
        %1544 = vmatpush1.msra.mxu0 0.0
        %1545 = vmatprep.subr.mxu0 0.0
        %1546 = vmatpush1.msra.mxu0 0.0
        %1547 = vmatprep.mubr.f32.mxu0 0.0
        %v1548 = vand.u32 %v1465, 4294901760
        %v1549 = vsub.f32 %v1465, %v1548
        %v1550 = vand.u32 %v1549, 4294901760
        %v1551 = vsub.f32 %v1549, %v1550
        %v1552 = vand.u32 %v1551, 4294901760
        %1553 = vmatmul.mubr.f32.gmra.mrb[0].mxu0 %v1552
        %v1554 = vpop.f32.mrb[0].mxu0
        %v1555 = vadd.f32 0.0, %v1554
        %v1556 = vpop.f32.mrb[0].mxu0
        %1557 = vmatprep.mubr.f32.mxu0 0.0
        %v1558 = vand.u32 %v1466, 4294901760
        %v1559 = vsub.f32 %v1466, %v1558
        %v1560 = vand.u32 %v1559, 4294901760
        %v1561 = vsub.f32 %v1559, %v1560
        %v1562 = vand.u32 %v1561, 4294901760
        %1563 = vmatmul.mubr.f32.gmra.mrb[0].mxu0 %v1562
        %v1564 = vpop.f32.mrb[0].mxu0
        %v1565 = vadd.f32 0.0, %v1564
        %v1566 = vpop.f32.mrb[0].mxu0
        %1567 = vdwg.mxu0
        %1568 = vmatprep.subr.mxu0 0.0
        %v1569 = vand.u32 %v1445, 4294901760
        %v1570 = vsub.f32 %v1445, %v1569
        %v1571 = vand.u32 %v1570, 4294901760
        %v1572 = vsub.f32 %v1570, %v1571
        %v1573 = vand.u32 %v1572, 4294901760
        %1574 = vmatpush1.msra.mxu0 %v1573
        %1575 = vmatprep.subr.mxu0 0.0
        %v1576 = vand.u32 %v1446, 4294901760
        %v1577 = vsub.f32 %v1446, %v1576
        %v1578 = vand.u32 %v1577, 4294901760
        %v1579 = vsub.f32 %v1577, %v1578
        %v1580 = vand.u32 %v1579, 4294901760
        %1581 = vmatpush1.msra.mxu0 %v1580
        %1582 = vmatprep.subr.mxu0 0.0
        %v1583 = vand.u32 %v1447, 4294901760
        %v1584 = vsub.f32 %v1447, %v1583
        %v1585 = vand.u32 %v1584, 4294901760
        %v1586 = vsub.f32 %v1584, %v1585
        %v1587 = vand.u32 %v1586, 4294901760
        %1588 = vmatpush1.msra.mxu0 %v1587
        %1589 = vmatprep.subr.mxu0 0.0
        %v1590 = vand.u32 %v1448, 4294901760
        %v1591 = vsub.f32 %v1448, %v1590
        %v1592 = vand.u32 %v1591, 4294901760
        %v1593 = vsub.f32 %v1591, %v1592
        %v1594 = vand.u32 %v1593, 4294901760
        %1595 = vmatpush1.msra.mxu0 %v1594
        %1596 = vmatprep.subr.mxu0 0.0
        %v1597 = vand.u32 %v1449, 4294901760
        %v1598 = vsub.f32 %v1449, %v1597
        %v1599 = vand.u32 %v1598, 4294901760
        %v1600 = vsub.f32 %v1598, %v1599
        %v1601 = vand.u32 %v1600, 4294901760
        %1602 = vmatpush1.msra.mxu0 %v1601
        %1603 = vmatprep.subr.mxu0 0.0
        %v1604 = vand.u32 %v1450, 4294901760
        %v1605 = vsub.f32 %v1450, %v1604
        %v1606 = vand.u32 %v1605, 4294901760
        %v1607 = vsub.f32 %v1605, %v1606
        %v1608 = vand.u32 %v1607, 4294901760
        %1609 = vmatpush1.msra.mxu0 %v1608
        %1610 = vmatprep.subr.mxu0 0.0
        %v1611 = vand.u32 %v1451, 4294901760
        %v1612 = vsub.f32 %v1451, %v1611
        %v1613 = vand.u32 %v1612, 4294901760
        %v1614 = vsub.f32 %v1612, %v1613
        %v1615 = vand.u32 %v1614, 4294901760
        %1616 = vmatpush1.msra.mxu0 %v1615
        %1617 = vmatprep.subr.mxu0 0.0
        %v1618 = vand.u32 %v1452, 4294901760
        %v1619 = vsub.f32 %v1452, %v1618
        %v1620 = vand.u32 %v1619, 4294901760
        %v1621 = vsub.f32 %v1619, %v1620
        %v1622 = vand.u32 %v1621, 4294901760
        %1623 = vmatpush1.msra.mxu0 %v1622
        %1624 = vmatprep.subr.mxu0 0.0
        %v1625 = vand.u32 %v1453, 4294901760
        %v1626 = vsub.f32 %v1453, %v1625
        %v1627 = vand.u32 %v1626, 4294901760
        %v1628 = vsub.f32 %v1626, %v1627
        %v1629 = vand.u32 %v1628, 4294901760
        %1630 = vmatpush1.msra.mxu0 %v1629
        %1631 = vmatprep.subr.mxu0 0.0
        %v1632 = vand.u32 %v1454, 4294901760
        %v1633 = vsub.f32 %v1454, %v1632
        %v1634 = vand.u32 %v1633, 4294901760
        %v1635 = vsub.f32 %v1633, %v1634
        %v1636 = vand.u32 %v1635, 4294901760
        %1637 = vmatpush1.msra.mxu0 %v1636
        %1638 = vmatprep.subr.mxu0 0.0
        %v1639 = vand.u32 %v1455, 4294901760
        %v1640 = vsub.f32 %v1455, %v1639
        %v1641 = vand.u32 %v1640, 4294901760
        %v1642 = vsub.f32 %v1640, %v1641
        %v1643 = vand.u32 %v1642, 4294901760
        %1644 = vmatpush1.msra.mxu0 %v1643
        %1645 = vmatprep.subr.mxu0 0.0
        %v1646 = vand.u32 %v1456, 4294901760
        %v1647 = vsub.f32 %v1456, %v1646
        %v1648 = vand.u32 %v1647, 4294901760
        %v1649 = vsub.f32 %v1647, %v1648
        %v1650 = vand.u32 %v1649, 4294901760
        %1651 = vmatpush1.msra.mxu0 %v1650
        %1652 = vmatprep.subr.mxu0 0.0
        %v1653 = vand.u32 %v1457, 4294901760
        %v1654 = vsub.f32 %v1457, %v1653
        %v1655 = vand.u32 %v1654, 4294901760
        %v1656 = vsub.f32 %v1654, %v1655
        %v1657 = vand.u32 %v1656, 4294901760
        %1658 = vmatpush1.msra.mxu0 %v1657
        %1659 = vmatprep.subr.mxu0 0.0
        %v1660 = vand.u32 %v1458, 4294901760
        %v1661 = vsub.f32 %v1458, %v1660
        %v1662 = vand.u32 %v1661, 4294901760
        %v1663 = vsub.f32 %v1661, %v1662
        %v1664 = vand.u32 %v1663, 4294901760
        %1665 = vmatpush1.msra.mxu0 %v1664
        %1666 = vmatprep.subr.mxu0 0.0
        %v1667 = vand.u32 %v1459, 4294901760
        %v1668 = vsub.f32 %v1459, %v1667
        %v1669 = vand.u32 %v1668, 4294901760
        %v1670 = vsub.f32 %v1668, %v1669
        %v1671 = vand.u32 %v1670, 4294901760
        %1672 = vmatpush1.msra.mxu0 %v1671
        %1673 = vmatprep.subr.mxu0 0.0
        %v1674 = vand.u32 %v1460, 4294901760
        %v1675 = vsub.f32 %v1460, %v1674
        %v1676 = vand.u32 %v1675, 4294901760
        %v1677 = vsub.f32 %v1675, %v1676
        %v1678 = vand.u32 %v1677, 4294901760
        %1679 = vmatpush1.msra.mxu0 %v1678
        %1680 = vmatprep.subr.mxu0 0.0
        %1681 = vmatpush1.msra.mxu0 0.0
        %1682 = vmatprep.subr.mxu0 0.0
        %1683 = vmatpush1.msra.mxu0 0.0
        %1684 = vmatprep.subr.mxu0 0.0
        %1685 = vmatpush1.msra.mxu0 0.0
        %1686 = vmatprep.subr.mxu0 0.0
        %1687 = vmatpush1.msra.mxu0 0.0
        %1688 = vmatprep.subr.mxu0 0.0
        %1689 = vmatpush1.msra.mxu0 0.0
        %1690 = vmatprep.subr.mxu0 0.0
        %1691 = vmatpush1.msra.mxu0 0.0
        %1692 = vmatprep.subr.mxu0 0.0
        %1693 = vmatpush1.msra.mxu0 0.0
        %1694 = vmatprep.subr.mxu0 0.0
        %1695 = vmatpush1.msra.mxu0 0.0
        %1696 = vmatprep.subr.mxu0 0.0
        %1697 = vmatpush1.msra.mxu0 0.0
        %1698 = vmatprep.subr.mxu0 0.0
        %1699 = vmatpush1.msra.mxu0 0.0
        %1700 = vmatprep.subr.mxu0 0.0
        %1701 = vmatpush1.msra.mxu0 0.0
        %1702 = vmatprep.subr.mxu0 0.0
        %1703 = vmatpush1.msra.mxu0 0.0
        %1704 = vmatprep.subr.mxu0 0.0
        %1705 = vmatpush1.msra.mxu0 0.0
        %1706 = vmatprep.subr.mxu0 0.0
        %1707 = vmatpush1.msra.mxu0 0.0
        %1708 = vmatprep.subr.mxu0 0.0
        %1709 = vmatpush1.msra.mxu0 0.0
        %1710 = vmatprep.subr.mxu0 0.0
        %1711 = vmatpush1.msra.mxu0 0.0
        %1712 = vmatprep.mubr.f32.mxu0 0.0
        %v1713 = vand.u32 %v1465, 4294901760
        %1714 = vmatmul.mubr.f32.gmra.mrb[0].mxu0 %v1713
        %v1715 = vpop.f32.mrb[0].mxu0
        %v1716 = vadd.f32 %v1555, %v1715
        %v1717 = vpop.f32.mrb[0].mxu0
        %1718 = vmatprep.mubr.f32.mxu0 0.0
        %v1719 = vand.u32 %v1466, 4294901760
        %1720 = vmatmul.mubr.f32.gmra.mrb[0].mxu0 %v1719
        %v1721 = vpop.f32.mrb[0].mxu0
        %v1722 = vadd.f32 %v1565, %v1721
        %v1723 = vpop.f32.mrb[0].mxu0
        %1724 = vdwg.mxu0
        %1725 = vmatprep.subr.mxu0 0.0
        %v1726 = vand.u32 %v1445, 4294901760
        %v1727 = vsub.f32 %v1445, %v1726
        %1728 = vmatpush1.msra.mxu0 %v1727
        %1729 = vmatprep.subr.mxu0 0.0
        %v1730 = vand.u32 %v1446, 4294901760
        %v1731 = vsub.f32 %v1446, %v1730
        %1732 = vmatpush1.msra.mxu0 %v1731
        %1733 = vmatprep.subr.mxu0 0.0
        %v1734 = vand.u32 %v1447, 4294901760
        %v1735 = vsub.f32 %v1447, %v1734
        %1736 = vmatpush1.msra.mxu0 %v1735
        %1737 = vmatprep.subr.mxu0 0.0
        %v1738 = vand.u32 %v1448, 4294901760
        %v1739 = vsub.f32 %v1448, %v1738
        %1740 = vmatpush1.msra.mxu0 %v1739
        %1741 = vmatprep.subr.mxu0 0.0
        %v1742 = vand.u32 %v1449, 4294901760
        %v1743 = vsub.f32 %v1449, %v1742
        %1744 = vmatpush1.msra.mxu0 %v1743
        %1745 = vmatprep.subr.mxu0 0.0
        %v1746 = vand.u32 %v1450, 4294901760
        %v1747 = vsub.f32 %v1450, %v1746
        %1748 = vmatpush1.msra.mxu0 %v1747
        %1749 = vmatprep.subr.mxu0 0.0
        %v1750 = vand.u32 %v1451, 4294901760
        %v1751 = vsub.f32 %v1451, %v1750
        %1752 = vmatpush1.msra.mxu0 %v1751
        %1753 = vmatprep.subr.mxu0 0.0
        %v1754 = vand.u32 %v1452, 4294901760
        %v1755 = vsub.f32 %v1452, %v1754
        %1756 = vmatpush1.msra.mxu0 %v1755
        %1757 = vmatprep.subr.mxu0 0.0
        %v1758 = vand.u32 %v1453, 4294901760
        %v1759 = vsub.f32 %v1453, %v1758
        %1760 = vmatpush1.msra.mxu0 %v1759
        %1761 = vmatprep.subr.mxu0 0.0
        %v1762 = vand.u32 %v1454, 4294901760
        %v1763 = vsub.f32 %v1454, %v1762
        %1764 = vmatpush1.msra.mxu0 %v1763
        %1765 = vmatprep.subr.mxu0 0.0
        %v1766 = vand.u32 %v1455, 4294901760
        %v1767 = vsub.f32 %v1455, %v1766
        %1768 = vmatpush1.msra.mxu0 %v1767
        %1769 = vmatprep.subr.mxu0 0.0
        %v1770 = vand.u32 %v1456, 4294901760
        %v1771 = vsub.f32 %v1456, %v1770
        %1772 = vmatpush1.msra.mxu0 %v1771
        %1773 = vmatprep.subr.mxu0 0.0
        %v1774 = vand.u32 %v1457, 4294901760
        %v1775 = vsub.f32 %v1457, %v1774
        %1776 = vmatpush1.msra.mxu0 %v1775
        %1777 = vmatprep.subr.mxu0 0.0
        %v1778 = vand.u32 %v1458, 4294901760
        %v1779 = vsub.f32 %v1458, %v1778
        %1780 = vmatpush1.msra.mxu0 %v1779
        %1781 = vmatprep.subr.mxu0 0.0
        %v1782 = vand.u32 %v1459, 4294901760
        %v1783 = vsub.f32 %v1459, %v1782
        %1784 = vmatpush1.msra.mxu0 %v1783
        %1785 = vmatprep.subr.mxu0 0.0
        %v1786 = vand.u32 %v1460, 4294901760
        %v1787 = vsub.f32 %v1460, %v1786
        %1788 = vmatpush1.msra.mxu0 %v1787
        %1789 = vmatprep.subr.mxu0 0.0
        %1790 = vmatpush1.msra.mxu0 0.0
        %1791 = vmatprep.subr.mxu0 0.0
        %1792 = vmatpush1.msra.mxu0 0.0
        %1793 = vmatprep.subr.mxu0 0.0
        %1794 = vmatpush1.msra.mxu0 0.0
        %1795 = vmatprep.subr.mxu0 0.0
        %1796 = vmatpush1.msra.mxu0 0.0
        %1797 = vmatprep.subr.mxu0 0.0
        %1798 = vmatpush1.msra.mxu0 0.0
        %1799 = vmatprep.subr.mxu0 0.0
        %1800 = vmatpush1.msra.mxu0 0.0
        %1801 = vmatprep.subr.mxu0 0.0
        %1802 = vmatpush1.msra.mxu0 0.0
        %1803 = vmatprep.subr.mxu0 0.0
        %1804 = vmatpush1.msra.mxu0 0.0
        %1805 = vmatprep.subr.mxu0 0.0
        %1806 = vmatpush1.msra.mxu0 0.0
        %1807 = vmatprep.subr.mxu0 0.0
        %1808 = vmatpush1.msra.mxu0 0.0
        %1809 = vmatprep.subr.mxu0 0.0
        %1810 = vmatpush1.msra.mxu0 0.0
        %1811 = vmatprep.subr.mxu0 0.0
        %1812 = vmatpush1.msra.mxu0 0.0
        %1813 = vmatprep.subr.mxu0 0.0
        %1814 = vmatpush1.msra.mxu0 0.0
        %1815 = vmatprep.subr.mxu0 0.0
        %1816 = vmatpush1.msra.mxu0 0.0
        %1817 = vmatprep.subr.mxu0 0.0
        %1818 = vmatpush1.msra.mxu0 0.0
        %1819 = vmatprep.subr.mxu0 0.0
        %1820 = vmatpush1.msra.mxu0 0.0
        %1821 = vmatprep.mubr.f32.mxu0 0.0
        %v1822 = vand.u32 %v1465, 4294901760
        %v1823 = vsub.f32 %v1465, %v1822
        %1824 = vmatmul.mubr.f32.gmra.mrb[0].mxu0 %v1823
        %v1825 = vpop.f32.mrb[0].mxu0
        %v1826 = vadd.f32 %v1716, %v1825
        %v1827 = vpop.f32.mrb[0].mxu0
        %1828 = vmatprep.mubr.f32.mxu0 0.0
        %v1829 = vand.u32 %v1466, 4294901760
        %v1830 = vsub.f32 %v1466, %v1829
        %1831 = vmatmul.mubr.f32.gmra.mrb[0].mxu0 %v1830
        %v1832 = vpop.f32.mrb[0].mxu0
        %v1833 = vadd.f32 %v1722, %v1832
        %v1834 = vpop.f32.mrb[0].mxu0
        %1835 = vdwg.mxu0
        %1836 = vmatprep.subr.mxu0 0.0
        %v1837 = vand.u32 %v1445, 4294901760
        %1838 = vmatpush1.msra.mxu0 %v1837
        %1839 = vmatprep.subr.mxu0 0.0
        %v1840 = vand.u32 %v1446, 4294901760
        %1841 = vmatpush1.msra.mxu0 %v1840
        %1842 = vmatprep.subr.mxu0 0.0
        %v1843 = vand.u32 %v1447, 4294901760
        %1844 = vmatpush1.msra.mxu0 %v1843
        %1845 = vmatprep.subr.mxu0 0.0
        %v1846 = vand.u32 %v1448, 4294901760
        %1847 = vmatpush1.msra.mxu0 %v1846
        %1848 = vmatprep.subr.mxu0 0.0
        %v1849 = vand.u32 %v1449, 4294901760
        %1850 = vmatpush1.msra.mxu0 %v1849
        %1851 = vmatprep.subr.mxu0 0.0
        %v1852 = vand.u32 %v1450, 4294901760
        %1853 = vmatpush1.msra.mxu0 %v1852
        %1854 = vmatprep.subr.mxu0 0.0
        %v1855 = vand.u32 %v1451, 4294901760
        %1856 = vmatpush1.msra.mxu0 %v1855
        %1857 = vmatprep.subr.mxu0 0.0
        %v1858 = vand.u32 %v1452, 4294901760
        %1859 = vmatpush1.msra.mxu0 %v1858
        %1860 = vmatprep.subr.mxu0 0.0
        %v1861 = vand.u32 %v1453, 4294901760
        %1862 = vmatpush1.msra.mxu0 %v1861
        %1863 = vmatprep.subr.mxu0 0.0
        %v1864 = vand.u32 %v1454, 4294901760
        %1865 = vmatpush1.msra.mxu0 %v1864
        %1866 = vmatprep.subr.mxu0 0.0
        %v1867 = vand.u32 %v1455, 4294901760
        %1868 = vmatpush1.msra.mxu0 %v1867
        %1869 = vmatprep.subr.mxu0 0.0
        %v1870 = vand.u32 %v1456, 4294901760
        %1871 = vmatpush1.msra.mxu0 %v1870
        %1872 = vmatprep.subr.mxu0 0.0
        %v1873 = vand.u32 %v1457, 4294901760
        %1874 = vmatpush1.msra.mxu0 %v1873
        %1875 = vmatprep.subr.mxu0 0.0
        %v1876 = vand.u32 %v1458, 4294901760
        %1877 = vmatpush1.msra.mxu0 %v1876
        %1878 = vmatprep.subr.mxu0 0.0
        %v1879 = vand.u32 %v1459, 4294901760
        %1880 = vmatpush1.msra.mxu0 %v1879
        %1881 = vmatprep.subr.mxu0 0.0
        %v1882 = vand.u32 %v1460, 4294901760
        %1883 = vmatpush1.msra.mxu0 %v1882
        %1884 = vmatprep.subr.mxu0 0.0
        %1885 = vmatpush1.msra.mxu0 0.0
        %1886 = vmatprep.subr.mxu0 0.0
        %1887 = vmatpush1.msra.mxu0 0.0
        %1888 = vmatprep.subr.mxu0 0.0
        %1889 = vmatpush1.msra.mxu0 0.0
        %1890 = vmatprep.subr.mxu0 0.0
        %1891 = vmatpush1.msra.mxu0 0.0
        %1892 = vmatprep.subr.mxu0 0.0
        %1893 = vmatpush1.msra.mxu0 0.0
        %1894 = vmatprep.subr.mxu0 0.0
        %1895 = vmatpush1.msra.mxu0 0.0
        %1896 = vmatprep.subr.mxu0 0.0
        %1897 = vmatpush1.msra.mxu0 0.0
        %1898 = vmatprep.subr.mxu0 0.0
        %1899 = vmatpush1.msra.mxu0 0.0
        %1900 = vmatprep.subr.mxu0 0.0
        %1901 = vmatpush1.msra.mxu0 0.0
        %1902 = vmatprep.subr.mxu0 0.0
        %1903 = vmatpush1.msra.mxu0 0.0
        %1904 = vmatprep.subr.mxu0 0.0
        %1905 = vmatpush1.msra.mxu0 0.0
        %1906 = vmatprep.subr.mxu0 0.0
        %1907 = vmatpush1.msra.mxu0 0.0
        %1908 = vmatprep.subr.mxu0 0.0
        %1909 = vmatpush1.msra.mxu0 0.0
        %1910 = vmatprep.subr.mxu0 0.0
        %1911 = vmatpush1.msra.mxu0 0.0
        %1912 = vmatprep.subr.mxu0 0.0
        %1913 = vmatpush1.msra.mxu0 0.0
        %1914 = vmatprep.subr.mxu0 0.0
        %1915 = vmatpush1.msra.mxu0 0.0
        %1916 = vmatprep.mubr.f32.mxu0 0.0
        %v1917 = vand.u32 %v1465, 4294901760
        %v1918 = vsub.f32 %v1465, %v1917
        %v1919 = vand.u32 %v1918, 4294901760
        %1920 = vmatmul.mubr.f32.gmra.mrb[0].mxu0 %v1919
        %v1921 = vpop.f32.mrb[0].mxu0
        %v1922 = vadd.f32 %v1826, %v1921
        %v1923 = vpop.f32.mrb[0].mxu0
        %1924 = vmatprep.mubr.f32.mxu0 0.0
        %v1925 = vand.u32 %v1466, 4294901760
        %v1926 = vsub.f32 %v1466, %v1925
        %v1927 = vand.u32 %v1926, 4294901760
        %1928 = vmatmul.mubr.f32.gmra.mrb[0].mxu0 %v1927
        %v1929 = vpop.f32.mrb[0].mxu0
        %v1930 = vadd.f32 %v1833, %v1929
        %v1931 = vpop.f32.mrb[0].mxu0
        %1932 = vdwg.mxu0
        %1933 = vmatprep.subr.mxu0 0.0
        %v1934 = vand.u32 %v1445, 4294901760
        %v1935 = vsub.f32 %v1445, %v1934
        %v1936 = vand.u32 %v1935, 4294901760
        %1937 = vmatpush1.msra.mxu0 %v1936
        %1938 = vmatprep.subr.mxu0 0.0
        %v1939 = vand.u32 %v1446, 4294901760
        %v1940 = vsub.f32 %v1446, %v1939
        %v1941 = vand.u32 %v1940, 4294901760
        %1942 = vmatpush1.msra.mxu0 %v1941
        %1943 = vmatprep.subr.mxu0 0.0
        %v1944 = vand.u32 %v1447, 4294901760
        %v1945 = vsub.f32 %v1447, %v1944
        %v1946 = vand.u32 %v1945, 4294901760
        %1947 = vmatpush1.msra.mxu0 %v1946
        %1948 = vmatprep.subr.mxu0 0.0
        %v1949 = vand.u32 %v1448, 4294901760
        %v1950 = vsub.f32 %v1448, %v1949
        %v1951 = vand.u32 %v1950, 4294901760
        %1952 = vmatpush1.msra.mxu0 %v1951
        %1953 = vmatprep.subr.mxu0 0.0
        %v1954 = vand.u32 %v1449, 4294901760
        %v1955 = vsub.f32 %v1449, %v1954
        %v1956 = vand.u32 %v1955, 4294901760
        %1957 = vmatpush1.msra.mxu0 %v1956
        %1958 = vmatprep.subr.mxu0 0.0
        %v1959 = vand.u32 %v1450, 4294901760
        %v1960 = vsub.f32 %v1450, %v1959
        %v1961 = vand.u32 %v1960, 4294901760
        %1962 = vmatpush1.msra.mxu0 %v1961
        %1963 = vmatprep.subr.mxu0 0.0
        %v1964 = vand.u32 %v1451, 4294901760
        %v1965 = vsub.f32 %v1451, %v1964
        %v1966 = vand.u32 %v1965, 4294901760
        %1967 = vmatpush1.msra.mxu0 %v1966
        %1968 = vmatprep.subr.mxu0 0.0
        %v1969 = vand.u32 %v1452, 4294901760
        %v1970 = vsub.f32 %v1452, %v1969
        %v1971 = vand.u32 %v1970, 4294901760
        %1972 = vmatpush1.msra.mxu0 %v1971
        %1973 = vmatprep.subr.mxu0 0.0
        %v1974 = vand.u32 %v1453, 4294901760
        %v1975 = vsub.f32 %v1453, %v1974
        %v1976 = vand.u32 %v1975, 4294901760
        %1977 = vmatpush1.msra.mxu0 %v1976
        %1978 = vmatprep.subr.mxu0 0.0
        %v1979 = vand.u32 %v1454, 4294901760
        %v1980 = vsub.f32 %v1454, %v1979
        %v1981 = vand.u32 %v1980, 4294901760
        %1982 = vmatpush1.msra.mxu0 %v1981
        %1983 = vmatprep.subr.mxu0 0.0
        %v1984 = vand.u32 %v1455, 4294901760
        %v1985 = vsub.f32 %v1455, %v1984
        %v1986 = vand.u32 %v1985, 4294901760
        %1987 = vmatpush1.msra.mxu0 %v1986
        %1988 = vmatprep.subr.mxu0 0.0
        %v1989 = vand.u32 %v1456, 4294901760
        %v1990 = vsub.f32 %v1456, %v1989
        %v1991 = vand.u32 %v1990, 4294901760
        %1992 = vmatpush1.msra.mxu0 %v1991
        %1993 = vmatprep.subr.mxu0 0.0
        %v1994 = vand.u32 %v1457, 4294901760
        %v1995 = vsub.f32 %v1457, %v1994
        %v1996 = vand.u32 %v1995, 4294901760
        %1997 = vmatpush1.msra.mxu0 %v1996
        %1998 = vmatprep.subr.mxu0 0.0
        %v1999 = vand.u32 %v1458, 4294901760
        %v2000 = vsub.f32 %v1458, %v1999
        %v2001 = vand.u32 %v2000, 4294901760
        %2002 = vmatpush1.msra.mxu0 %v2001
        %2003 = vmatprep.subr.mxu0 0.0
        %v2004 = vand.u32 %v1459, 4294901760
        %v2005 = vsub.f32 %v1459, %v2004
        %v2006 = vand.u32 %v2005, 4294901760
        %2007 = vmatpush1.msra.mxu0 %v2006
        %2008 = vmatprep.subr.mxu0 0.0
        %v2009 = vand.u32 %v1460, 4294901760
        %v2010 = vsub.f32 %v1460, %v2009
        %v2011 = vand.u32 %v2010, 4294901760
        %2012 = vmatpush1.msra.mxu0 %v2011
        %2013 = vmatprep.subr.mxu0 0.0
        %2014 = vmatpush1.msra.mxu0 0.0
        %2015 = vmatprep.subr.mxu0 0.0
        %2016 = vmatpush1.msra.mxu0 0.0
        %2017 = vmatprep.subr.mxu0 0.0
        %2018 = vmatpush1.msra.mxu0 0.0
        %2019 = vmatprep.subr.mxu0 0.0
        %2020 = vmatpush1.msra.mxu0 0.0
        %2021 = vmatprep.subr.mxu0 0.0
        %2022 = vmatpush1.msra.mxu0 0.0
        %2023 = vmatprep.subr.mxu0 0.0
        %2024 = vmatpush1.msra.mxu0 0.0
        %2025 = vmatprep.subr.mxu0 0.0
        %2026 = vmatpush1.msra.mxu0 0.0
        %2027 = vmatprep.subr.mxu0 0.0
        %2028 = vmatpush1.msra.mxu0 0.0
        %2029 = vmatprep.subr.mxu0 0.0
        %2030 = vmatpush1.msra.mxu0 0.0
        %2031 = vmatprep.subr.mxu0 0.0
        %2032 = vmatpush1.msra.mxu0 0.0
        %2033 = vmatprep.subr.mxu0 0.0
        %2034 = vmatpush1.msra.mxu0 0.0
        %2035 = vmatprep.subr.mxu0 0.0
        %2036 = vmatpush1.msra.mxu0 0.0
        %2037 = vmatprep.subr.mxu0 0.0
        %2038 = vmatpush1.msra.mxu0 0.0
        %2039 = vmatprep.subr.mxu0 0.0
        %2040 = vmatpush1.msra.mxu0 0.0
        %2041 = vmatprep.subr.mxu0 0.0
        %2042 = vmatpush1.msra.mxu0 0.0
        %2043 = vmatprep.subr.mxu0 0.0
        %2044 = vmatpush1.msra.mxu0 0.0
        %2045 = vmatprep.mubr.f32.mxu0 0.0
        %v2046 = vand.u32 %v1465, 4294901760
        %2047 = vmatmul.mubr.f32.gmra.mrb[0].mxu0 %v2046
        %v2048 = vpop.f32.mrb[0].mxu0
        %v2049 = vadd.f32 %v1922, %v2048
        %v2050 = vpop.f32.mrb[0].mxu0
        %2051 = vmatprep.mubr.f32.mxu0 0.0
        %v2052 = vand.u32 %v1466, 4294901760
        %2053 = vmatmul.mubr.f32.gmra.mrb[0].mxu0 %v2052
        %v2054 = vpop.f32.mrb[0].mxu0
        %v2055 = vadd.f32 %v1930, %v2054
        %v2056 = vpop.f32.mrb[0].mxu0
        %2057 = vdwg.mxu0
        %2058 = vmatprep.subr.mxu0 0.0
        %v2059 = vand.u32 %v1445, 4294901760
        %2060 = vmatpush1.msra.mxu0 %v2059
        %2061 = vmatprep.subr.mxu0 0.0
        %v2062 = vand.u32 %v1446, 4294901760
        %2063 = vmatpush1.msra.mxu0 %v2062
        %2064 = vmatprep.subr.mxu0 0.0
        %v2065 = vand.u32 %v1447, 4294901760
        %2066 = vmatpush1.msra.mxu0 %v2065
        %2067 = vmatprep.subr.mxu0 0.0
        %v2068 = vand.u32 %v1448, 4294901760
        %2069 = vmatpush1.msra.mxu0 %v2068
        %2070 = vmatprep.subr.mxu0 0.0
        %v2071 = vand.u32 %v1449, 4294901760
        %2072 = vmatpush1.msra.mxu0 %v2071
        %2073 = vmatprep.subr.mxu0 0.0
        %v2074 = vand.u32 %v1450, 4294901760
        %2075 = vmatpush1.msra.mxu0 %v2074
        %2076 = vmatprep.subr.mxu0 0.0
        %v2077 = vand.u32 %v1451, 4294901760
        %2078 = vmatpush1.msra.mxu0 %v2077
        %2079 = vmatprep.subr.mxu0 0.0
        %v2080 = vand.u32 %v1452, 4294901760
        %2081 = vmatpush1.msra.mxu0 %v2080
        %2082 = vmatprep.subr.mxu0 0.0
        %v2083 = vand.u32 %v1453, 4294901760
        %2084 = vmatpush1.msra.mxu0 %v2083
        %2085 = vmatprep.subr.mxu0 0.0
        %v2086 = vand.u32 %v1454, 4294901760
        %2087 = vmatpush1.msra.mxu0 %v2086
        %2088 = vmatprep.subr.mxu0 0.0
        %v2089 = vand.u32 %v1455, 4294901760
        %2090 = vmatpush1.msra.mxu0 %v2089
        %2091 = vmatprep.subr.mxu0 0.0
        %v2092 = vand.u32 %v1456, 4294901760
        %2093 = vmatpush1.msra.mxu0 %v2092
        %2094 = vmatprep.subr.mxu0 0.0
        %v2095 = vand.u32 %v1457, 4294901760
        %2096 = vmatpush1.msra.mxu0 %v2095
        %2097 = vmatprep.subr.mxu0 0.0
        %v2098 = vand.u32 %v1458, 4294901760
        %2099 = vmatpush1.msra.mxu0 %v2098
        %2100 = vmatprep.subr.mxu0 0.0
        %v2101 = vand.u32 %v1459, 4294901760
        %2102 = vmatpush1.msra.mxu0 %v2101
        %2103 = vmatprep.subr.mxu0 0.0
        %v2104 = vand.u32 %v1460, 4294901760
        %2105 = vmatpush1.msra.mxu0 %v2104
        %2106 = vmatprep.subr.mxu0 0.0
        %2107 = vmatpush1.msra.mxu0 0.0
        %2108 = vmatprep.subr.mxu0 0.0
        %2109 = vmatpush1.msra.mxu0 0.0
        %2110 = vmatprep.subr.mxu0 0.0
        %2111 = vmatpush1.msra.mxu0 0.0
        %2112 = vmatprep.subr.mxu0 0.0
        %2113 = vmatpush1.msra.mxu0 0.0
        %2114 = vmatprep.subr.mxu0 0.0
        %2115 = vmatpush1.msra.mxu0 0.0
        %2116 = vmatprep.subr.mxu0 0.0
        %2117 = vmatpush1.msra.mxu0 0.0
        %2118 = vmatprep.subr.mxu0 0.0
        %2119 = vmatpush1.msra.mxu0 0.0
        %2120 = vmatprep.subr.mxu0 0.0
        %2121 = vmatpush1.msra.mxu0 0.0
        %2122 = vmatprep.subr.mxu0 0.0
        %2123 = vmatpush1.msra.mxu0 0.0
        %2124 = vmatprep.subr.mxu0 0.0
        %2125 = vmatpush1.msra.mxu0 0.0
        %2126 = vmatprep.subr.mxu0 0.0
        %2127 = vmatpush1.msra.mxu0 0.0
        %2128 = vmatprep.subr.mxu0 0.0
        %2129 = vmatpush1.msra.mxu0 0.0
        %2130 = vmatprep.subr.mxu0 0.0
        %2131 = vmatpush1.msra.mxu0 0.0
        %2132 = vmatprep.subr.mxu0 0.0
        %2133 = vmatpush1.msra.mxu0 0.0
        %2134 = vmatprep.subr.mxu0 0.0
        %2135 = vmatpush1.msra.mxu0 0.0
        %2136 = vmatprep.subr.mxu0 0.0
        %2137 = vmatpush1.msra.mxu0 0.0
        %2138 = vmatprep.mubr.f32.mxu0 0.0
        %v2139 = vand.u32 %v1465, 4294901760
        %2140 = vmatmul.mubr.f32.gmra.mrb[0].mxu0 %v2139
        %v2141 = vpop.f32.mrb[0].mxu0
        %v2142 = vadd.f32 %v2049, %v2141
        %v2143 = vpop.f32.mrb[0].mxu0
        %2144 = vmatprep.mubr.f32.mxu0 0.0
        %v2145 = vand.u32 %v1466, 4294901760
        %2146 = vmatmul.mubr.f32.gmra.mrb[0].mxu0 %v2145
        %v2147 = vpop.f32.mrb[0].mxu0
        %v2148 = vadd.f32 %v2055, %v2147
        %v2149 = vpop.f32.mrb[0].mxu0
        %2150 = vdwg.mxu0
        %v2151 = vadd.f32 %v1463, %v2142
        %v2152 = vadd.f32 %v1464, %v2148
        %v2153 = vld [vmem:[#allocation4] sm:$0xff]
        %v2154 = vld [vmem:[#allocation4 + $0x8] sm:$0xff]
        %v2156 = vlaneseq
        %v2157 = vshrl.u32 %v2156, 7
        %v2158 = vsub.s32 0, %v2157
        %v2159 = vrot.slane %v1462, %v2158
        %v2161 = vmul.f32 %v2159, %v2153
        %v2162 = vmul.f32 %v2159, %v2154
        %v2164 = vlaneseq
        %v2165 = vshrl.u32 %v2164, 7
        %v2166 = vsub.s32 0, %v2165
        %v2167 = vrot.slane %v1461, %v2166
        %v2169 = vmul.f32 %v2167, %v2151
        %v2170 = vmul.f32 %v2167, %v2152
        %v2171 = vadd.f32 %v2161, %v2169
        %v2172 = vadd.f32 %v2162, %v2170
        %v2173 = vtanh.pop %v2171
        %v2174 = vtanh.pop %v2172
        %2175 = vst [vmem:[#allocation3] sm:$0xff] %v2173
        %2176 = vst [vmem:[#allocation3 + $0x8] sm:$0xff] %v2174
        %2177 = vst [vmem:[#allocation4] sm:$0xff] %v2171
        %2178 = vst [vmem:[#allocation4 + $0x8] sm:$0xff] %v2172
        %2179 = vst [vmem:[%s406] sm:$0xff] %v2173
        %2180 = vst [vmem:[%s406 + $0x8] sm:$0xff] %v2174
        %2181 = vst [vmem:[%s413] sm:$0xff] %v2171
        %2182 = vst [vmem:[%s413 + $0x8] sm:$0xff] %v2172
        %s2183 = scalar_lea.vmem [#allocation2], 16
        %v2184 = vld [vmem:[%s2183] sm:$0xff]
        %v2185 = vld [vmem:[%s2183 + $0x8] sm:$0xff]
        %v2186 = vld [vmem:[#allocation3] sm:$0xff]
        %v2187 = vld [vmem:[#allocation3 + $0x8] sm:$0xff]
        %2188 = vmatprep.subr.mxu0 0.0
        %v2189 = vand.u32 %v1445, 4294901760
        %2190 = vmatpush1.msra.mxu0 %v2189
        %2191 = vmatprep.subr.mxu0 0.0
        %v2192 = vand.u32 %v1446, 4294901760
        %2193 = vmatpush1.msra.mxu0 %v2192
        %2194 = vmatprep.subr.mxu0 0.0
        %v2195 = vand.u32 %v1447, 4294901760
        %2196 = vmatpush1.msra.mxu0 %v2195
        %2197 = vmatprep.subr.mxu0 0.0
        %v2198 = vand.u32 %v1448, 4294901760
        %2199 = vmatpush1.msra.mxu0 %v2198
        %2200 = vmatprep.subr.mxu0 0.0
        %v2201 = vand.u32 %v1449, 4294901760
        %2202 = vmatpush1.msra.mxu0 %v2201
        %2203 = vmatprep.subr.mxu0 0.0
        %v2204 = vand.u32 %v1450, 4294901760
        %2205 = vmatpush1.msra.mxu0 %v2204
        %2206 = vmatprep.subr.mxu0 0.0
        %v2207 = vand.u32 %v1451, 4294901760
        %2208 = vmatpush1.msra.mxu0 %v2207
        %2209 = vmatprep.subr.mxu0 0.0
        %v2210 = vand.u32 %v1452, 4294901760
        %2211 = vmatpush1.msra.mxu0 %v2210
        %2212 = vmatprep.subr.mxu0 0.0
        %v2213 = vand.u32 %v1453, 4294901760
        %2214 = vmatpush1.msra.mxu0 %v2213
        %2215 = vmatprep.subr.mxu0 0.0
        %v2216 = vand.u32 %v1454, 4294901760
        %2217 = vmatpush1.msra.mxu0 %v2216
        %2218 = vmatprep.subr.mxu0 0.0
        %v2219 = vand.u32 %v1455, 4294901760
        %2220 = vmatpush1.msra.mxu0 %v2219
        %2221 = vmatprep.subr.mxu0 0.0
        %v2222 = vand.u32 %v1456, 4294901760
        %2223 = vmatpush1.msra.mxu0 %v2222
        %2224 = vmatprep.subr.mxu0 0.0
        %v2225 = vand.u32 %v1457, 4294901760
        %2226 = vmatpush1.msra.mxu0 %v2225
        %2227 = vmatprep.subr.mxu0 0.0
        %v2228 = vand.u32 %v1458, 4294901760
        %2229 = vmatpush1.msra.mxu0 %v2228
        %2230 = vmatprep.subr.mxu0 0.0
        %v2231 = vand.u32 %v1459, 4294901760
        %2232 = vmatpush1.msra.mxu0 %v2231
        %2233 = vmatprep.subr.mxu0 0.0
        %v2234 = vand.u32 %v1460, 4294901760
        %2235 = vmatpush1.msra.mxu0 %v2234
        %2236 = vmatprep.subr.mxu0 0.0
        %2237 = vmatpush1.msra.mxu0 0.0
        %2238 = vmatprep.subr.mxu0 0.0
        %2239 = vmatpush1.msra.mxu0 0.0
        %2240 = vmatprep.subr.mxu0 0.0
        %2241 = vmatpush1.msra.mxu0 0.0
        %2242 = vmatprep.subr.mxu0 0.0
        %2243 = vmatpush1.msra.mxu0 0.0
        %2244 = vmatprep.subr.mxu0 0.0
        %2245 = vmatpush1.msra.mxu0 0.0
        %2246 = vmatprep.subr.mxu0 0.0
        %2247 = vmatpush1.msra.mxu0 0.0
        %2248 = vmatprep.subr.mxu0 0.0
        %2249 = vmatpush1.msra.mxu0 0.0
        %2250 = vmatprep.subr.mxu0 0.0
        %2251 = vmatpush1.msra.mxu0 0.0
        %2252 = vmatprep.subr.mxu0 0.0
        %2253 = vmatpush1.msra.mxu0 0.0
        %2254 = vmatprep.subr.mxu0 0.0
        %2255 = vmatpush1.msra.mxu0 0.0
        %2256 = vmatprep.subr.mxu0 0.0
        %2257 = vmatpush1.msra.mxu0 0.0
        %2258 = vmatprep.subr.mxu0 0.0
        %2259 = vmatpush1.msra.mxu0 0.0
        %2260 = vmatprep.subr.mxu0 0.0
        %2261 = vmatpush1.msra.mxu0 0.0
        %2262 = vmatprep.subr.mxu0 0.0
        %2263 = vmatpush1.msra.mxu0 0.0
        %2264 = vmatprep.subr.mxu0 0.0
        %2265 = vmatpush1.msra.mxu0 0.0
        %2266 = vmatprep.subr.mxu0 0.0
        %2267 = vmatpush1.msra.mxu0 0.0
        %2268 = vmatprep.mubr.f32.mxu0 0.0
        %v2269 = vand.u32 %v2186, 4294901760
        %v2270 = vsub.f32 %v2186, %v2269
        %v2271 = vand.u32 %v2270, 4294901760
        %v2272 = vsub.f32 %v2270, %v2271
        %v2273 = vand.u32 %v2272, 4294901760
        %2274 = vmatmul.mubr.f32.gmra.mrb[0].mxu0 %v2273
        %v2275 = vpop.f32.mrb[0].mxu0
        %v2276 = vadd.f32 0.0, %v2275
        %v2277 = vpop.f32.mrb[0].mxu0
        %2278 = vmatprep.mubr.f32.mxu0 0.0
        %v2279 = vand.u32 %v2187, 4294901760
        %v2280 = vsub.f32 %v2187, %v2279
        %v2281 = vand.u32 %v2280, 4294901760
        %v2282 = vsub.f32 %v2280, %v2281
        %v2283 = vand.u32 %v2282, 4294901760
        %2284 = vmatmul.mubr.f32.gmra.mrb[0].mxu0 %v2283
        %v2285 = vpop.f32.mrb[0].mxu0
        %v2286 = vadd.f32 0.0, %v2285
        %v2287 = vpop.f32.mrb[0].mxu0
        %2288 = vdwg.mxu0
        %2289 = vmatprep.subr.mxu0 0.0
        %v2290 = vand.u32 %v1445, 4294901760
        %v2291 = vsub.f32 %v1445, %v2290
        %v2292 = vand.u32 %v2291, 4294901760
        %v2293 = vsub.f32 %v2291, %v2292
        %v2294 = vand.u32 %v2293, 4294901760
        %2295 = vmatpush1.msra.mxu0 %v2294
        %2296 = vmatprep.subr.mxu0 0.0
        %v2297 = vand.u32 %v1446, 4294901760
        %v2298 = vsub.f32 %v1446, %v2297
        %v2299 = vand.u32 %v2298, 4294901760
        %v2300 = vsub.f32 %v2298, %v2299
        %v2301 = vand.u32 %v2300, 4294901760
        %2302 = vmatpush1.msra.mxu0 %v2301
        %2303 = vmatprep.subr.mxu0 0.0
        %v2304 = vand.u32 %v1447, 4294901760
        %v2305 = vsub.f32 %v1447, %v2304
        %v2306 = vand.u32 %v2305, 4294901760
        %v2307 = vsub.f32 %v2305, %v2306
        %v2308 = vand.u32 %v2307, 4294901760
        %2309 = vmatpush1.msra.mxu0 %v2308
        %2310 = vmatprep.subr.mxu0 0.0
        %v2311 = vand.u32 %v1448, 4294901760
        %v2312 = vsub.f32 %v1448, %v2311
        %v2313 = vand.u32 %v2312, 4294901760
        %v2314 = vsub.f32 %v2312, %v2313
        %v2315 = vand.u32 %v2314, 4294901760
        %2316 = vmatpush1.msra.mxu0 %v2315
        %2317 = vmatprep.subr.mxu0 0.0
        %v2318 = vand.u32 %v1449, 4294901760
        %v2319 = vsub.f32 %v1449, %v2318
        %v2320 = vand.u32 %v2319, 4294901760
        %v2321 = vsub.f32 %v2319, %v2320
        %v2322 = vand.u32 %v2321, 4294901760
        %2323 = vmatpush1.msra.mxu0 %v2322
        %2324 = vmatprep.subr.mxu0 0.0
        %v2325 = vand.u32 %v1450, 4294901760
        %v2326 = vsub.f32 %v1450, %v2325
        %v2327 = vand.u32 %v2326, 4294901760
        %v2328 = vsub.f32 %v2326, %v2327
        %v2329 = vand.u32 %v2328, 4294901760
        %2330 = vmatpush1.msra.mxu0 %v2329
        %2331 = vmatprep.subr.mxu0 0.0
        %v2332 = vand.u32 %v1451, 4294901760
        %v2333 = vsub.f32 %v1451, %v2332
        %v2334 = vand.u32 %v2333, 4294901760
        %v2335 = vsub.f32 %v2333, %v2334
        %v2336 = vand.u32 %v2335, 4294901760
        %2337 = vmatpush1.msra.mxu0 %v2336
        %2338 = vmatprep.subr.mxu0 0.0
        %v2339 = vand.u32 %v1452, 4294901760
        %v2340 = vsub.f32 %v1452, %v2339
        %v2341 = vand.u32 %v2340, 4294901760
        %v2342 = vsub.f32 %v2340, %v2341
        %v2343 = vand.u32 %v2342, 4294901760
        %2344 = vmatpush1.msra.mxu0 %v2343
        %2345 = vmatprep.subr.mxu0 0.0
        %v2346 = vand.u32 %v1453, 4294901760
        %v2347 = vsub.f32 %v1453, %v2346
        %v2348 = vand.u32 %v2347, 4294901760
        %v2349 = vsub.f32 %v2347, %v2348
        %v2350 = vand.u32 %v2349, 4294901760
        %2351 = vmatpush1.msra.mxu0 %v2350
        %2352 = vmatprep.subr.mxu0 0.0
        %v2353 = vand.u32 %v1454, 4294901760
        %v2354 = vsub.f32 %v1454, %v2353
        %v2355 = vand.u32 %v2354, 4294901760
        %v2356 = vsub.f32 %v2354, %v2355
        %v2357 = vand.u32 %v2356, 4294901760
        %2358 = vmatpush1.msra.mxu0 %v2357
        %2359 = vmatprep.subr.mxu0 0.0
        %v2360 = vand.u32 %v1455, 4294901760
        %v2361 = vsub.f32 %v1455, %v2360
        %v2362 = vand.u32 %v2361, 4294901760
        %v2363 = vsub.f32 %v2361, %v2362
        %v2364 = vand.u32 %v2363, 4294901760
        %2365 = vmatpush1.msra.mxu0 %v2364
        %2366 = vmatprep.subr.mxu0 0.0
        %v2367 = vand.u32 %v1456, 4294901760
        %v2368 = vsub.f32 %v1456, %v2367
        %v2369 = vand.u32 %v2368, 4294901760
        %v2370 = vsub.f32 %v2368, %v2369
        %v2371 = vand.u32 %v2370, 4294901760
        %2372 = vmatpush1.msra.mxu0 %v2371
        %2373 = vmatprep.subr.mxu0 0.0
        %v2374 = vand.u32 %v1457, 4294901760
        %v2375 = vsub.f32 %v1457, %v2374
        %v2376 = vand.u32 %v2375, 4294901760
        %v2377 = vsub.f32 %v2375, %v2376
        %v2378 = vand.u32 %v2377, 4294901760
        %2379 = vmatpush1.msra.mxu0 %v2378
        %2380 = vmatprep.subr.mxu0 0.0
        %v2381 = vand.u32 %v1458, 4294901760
        %v2382 = vsub.f32 %v1458, %v2381
        %v2383 = vand.u32 %v2382, 4294901760
        %v2384 = vsub.f32 %v2382, %v2383
        %v2385 = vand.u32 %v2384, 4294901760
        %2386 = vmatpush1.msra.mxu0 %v2385
        %2387 = vmatprep.subr.mxu0 0.0
        %v2388 = vand.u32 %v1459, 4294901760
        %v2389 = vsub.f32 %v1459, %v2388
        %v2390 = vand.u32 %v2389, 4294901760
        %v2391 = vsub.f32 %v2389, %v2390
        %v2392 = vand.u32 %v2391, 4294901760
        %2393 = vmatpush1.msra.mxu0 %v2392
        %2394 = vmatprep.subr.mxu0 0.0
        %v2395 = vand.u32 %v1460, 4294901760
        %v2396 = vsub.f32 %v1460, %v2395
        %v2397 = vand.u32 %v2396, 4294901760
        %v2398 = vsub.f32 %v2396, %v2397
        %v2399 = vand.u32 %v2398, 4294901760
        %2400 = vmatpush1.msra.mxu0 %v2399
        %2401 = vmatprep.subr.mxu0 0.0
        %2402 = vmatpush1.msra.mxu0 0.0
        %2403 = vmatprep.subr.mxu0 0.0
        %2404 = vmatpush1.msra.mxu0 0.0
        %2405 = vmatprep.subr.mxu0 0.0
        %2406 = vmatpush1.msra.mxu0 0.0
        %2407 = vmatprep.subr.mxu0 0.0
        %2408 = vmatpush1.msra.mxu0 0.0
        %2409 = vmatprep.subr.mxu0 0.0
        %2410 = vmatpush1.msra.mxu0 0.0
        %2411 = vmatprep.subr.mxu0 0.0
        %2412 = vmatpush1.msra.mxu0 0.0
        %2413 = vmatprep.subr.mxu0 0.0
        %2414 = vmatpush1.msra.mxu0 0.0
        %2415 = vmatprep.subr.mxu0 0.0
        %2416 = vmatpush1.msra.mxu0 0.0
        %2417 = vmatprep.subr.mxu0 0.0
        %2418 = vmatpush1.msra.mxu0 0.0
        %2419 = vmatprep.subr.mxu0 0.0
        %2420 = vmatpush1.msra.mxu0 0.0
        %2421 = vmatprep.subr.mxu0 0.0
        %2422 = vmatpush1.msra.mxu0 0.0
        %2423 = vmatprep.subr.mxu0 0.0
        %2424 = vmatpush1.msra.mxu0 0.0
        %2425 = vmatprep.subr.mxu0 0.0
        %2426 = vmatpush1.msra.mxu0 0.0
        %2427 = vmatprep.subr.mxu0 0.0
        %2428 = vmatpush1.msra.mxu0 0.0
        %2429 = vmatprep.subr.mxu0 0.0
        %2430 = vmatpush1.msra.mxu0 0.0
        %2431 = vmatprep.subr.mxu0 0.0
        %2432 = vmatpush1.msra.mxu0 0.0
        %2433 = vmatprep.mubr.f32.mxu0 0.0
        %v2434 = vand.u32 %v2186, 4294901760
        %2435 = vmatmul.mubr.f32.gmra.mrb[0].mxu0 %v2434
        %v2436 = vpop.f32.mrb[0].mxu0
        %v2437 = vadd.f32 %v2276, %v2436
        %v2438 = vpop.f32.mrb[0].mxu0
        %2439 = vmatprep.mubr.f32.mxu0 0.0
        %v2440 = vand.u32 %v2187, 4294901760
        %2441 = vmatmul.mubr.f32.gmra.mrb[0].mxu0 %v2440
        %v2442 = vpop.f32.mrb[0].mxu0
        %v2443 = vadd.f32 %v2286, %v2442
        %v2444 = vpop.f32.mrb[0].mxu0
        %2445 = vdwg.mxu0
        %2446 = vmatprep.subr.mxu0 0.0
        %v2447 = vand.u32 %v1445, 4294901760
        %v2448 = vsub.f32 %v1445, %v2447
        %2449 = vmatpush1.msra.mxu0 %v2448
        %2450 = vmatprep.subr.mxu0 0.0
        %v2451 = vand.u32 %v1446, 4294901760
        %v2452 = vsub.f32 %v1446, %v2451
        %2453 = vmatpush1.msra.mxu0 %v2452
        %2454 = vmatprep.subr.mxu0 0.0
        %v2455 = vand.u32 %v1447, 4294901760
        %v2456 = vsub.f32 %v1447, %v2455
        %2457 = vmatpush1.msra.mxu0 %v2456
        %2458 = vmatprep.subr.mxu0 0.0
        %v2459 = vand.u32 %v1448, 4294901760
        %v2460 = vsub.f32 %v1448, %v2459
        %2461 = vmatpush1.msra.mxu0 %v2460
        %2462 = vmatprep.subr.mxu0 0.0
        %v2463 = vand.u32 %v1449, 4294901760
        %v2464 = vsub.f32 %v1449, %v2463
        %2465 = vmatpush1.msra.mxu0 %v2464
        %2466 = vmatprep.subr.mxu0 0.0
        %v2467 = vand.u32 %v1450, 4294901760
        %v2468 = vsub.f32 %v1450, %v2467
        %2469 = vmatpush1.msra.mxu0 %v2468
        %2470 = vmatprep.subr.mxu0 0.0
        %v2471 = vand.u32 %v1451, 4294901760
        %v2472 = vsub.f32 %v1451, %v2471
        %2473 = vmatpush1.msra.mxu0 %v2472
        %2474 = vmatprep.subr.mxu0 0.0
        %v2475 = vand.u32 %v1452, 4294901760
        %v2476 = vsub.f32 %v1452, %v2475
        %2477 = vmatpush1.msra.mxu0 %v2476
        %2478 = vmatprep.subr.mxu0 0.0
        %v2479 = vand.u32 %v1453, 4294901760
        %v2480 = vsub.f32 %v1453, %v2479
        %2481 = vmatpush1.msra.mxu0 %v2480
        %2482 = vmatprep.subr.mxu0 0.0
        %v2483 = vand.u32 %v1454, 4294901760
        %v2484 = vsub.f32 %v1454, %v2483
        %2485 = vmatpush1.msra.mxu0 %v2484
        %2486 = vmatprep.subr.mxu0 0.0
        %v2487 = vand.u32 %v1455, 4294901760
        %v2488 = vsub.f32 %v1455, %v2487
        %2489 = vmatpush1.msra.mxu0 %v2488
        %2490 = vmatprep.subr.mxu0 0.0
        %v2491 = vand.u32 %v1456, 4294901760
        %v2492 = vsub.f32 %v1456, %v2491
        %2493 = vmatpush1.msra.mxu0 %v2492
        %2494 = vmatprep.subr.mxu0 0.0
        %v2495 = vand.u32 %v1457, 4294901760
        %v2496 = vsub.f32 %v1457, %v2495
        %2497 = vmatpush1.msra.mxu0 %v2496
        %2498 = vmatprep.subr.mxu0 0.0
        %v2499 = vand.u32 %v1458, 4294901760
        %v2500 = vsub.f32 %v1458, %v2499
        %2501 = vmatpush1.msra.mxu0 %v2500
        %2502 = vmatprep.subr.mxu0 0.0
        %v2503 = vand.u32 %v1459, 4294901760
        %v2504 = vsub.f32 %v1459, %v2503
        %2505 = vmatpush1.msra.mxu0 %v2504
        %2506 = vmatprep.subr.mxu0 0.0
        %v2507 = vand.u32 %v1460, 4294901760
        %v2508 = vsub.f32 %v1460, %v2507
        %2509 = vmatpush1.msra.mxu0 %v2508
        %2510 = vmatprep.subr.mxu0 0.0
        %2511 = vmatpush1.msra.mxu0 0.0
        %2512 = vmatprep.subr.mxu0 0.0
        %2513 = vmatpush1.msra.mxu0 0.0
        %2514 = vmatprep.subr.mxu0 0.0
        %2515 = vmatpush1.msra.mxu0 0.0
        %2516 = vmatprep.subr.mxu0 0.0
        %2517 = vmatpush1.msra.mxu0 0.0
        %2518 = vmatprep.subr.mxu0 0.0
        %2519 = vmatpush1.msra.mxu0 0.0
        %2520 = vmatprep.subr.mxu0 0.0
        %2521 = vmatpush1.msra.mxu0 0.0
        %2522 = vmatprep.subr.mxu0 0.0
        %2523 = vmatpush1.msra.mxu0 0.0
        %2524 = vmatprep.subr.mxu0 0.0
        %2525 = vmatpush1.msra.mxu0 0.0
        %2526 = vmatprep.subr.mxu0 0.0
        %2527 = vmatpush1.msra.mxu0 0.0
        %2528 = vmatprep.subr.mxu0 0.0
        %2529 = vmatpush1.msra.mxu0 0.0
        %2530 = vmatprep.subr.mxu0 0.0
        %2531 = vmatpush1.msra.mxu0 0.0
        %2532 = vmatprep.subr.mxu0 0.0
        %2533 = vmatpush1.msra.mxu0 0.0
        %2534 = vmatprep.subr.mxu0 0.0
        %2535 = vmatpush1.msra.mxu0 0.0
        %2536 = vmatprep.subr.mxu0 0.0
        %2537 = vmatpush1.msra.mxu0 0.0
        %2538 = vmatprep.subr.mxu0 0.0
        %2539 = vmatpush1.msra.mxu0 0.0
        %2540 = vmatprep.subr.mxu0 0.0
        %2541 = vmatpush1.msra.mxu0 0.0
        %2542 = vmatprep.mubr.f32.mxu0 0.0
        %v2543 = vand.u32 %v2186, 4294901760
        %v2544 = vsub.f32 %v2186, %v2543
        %2545 = vmatmul.mubr.f32.gmra.mrb[0].mxu0 %v2544
        %v2546 = vpop.f32.mrb[0].mxu0
        %v2547 = vadd.f32 %v2437, %v2546
        %v2548 = vpop.f32.mrb[0].mxu0
        %2549 = vmatprep.mubr.f32.mxu0 0.0
        %v2550 = vand.u32 %v2187, 4294901760
        %v2551 = vsub.f32 %v2187, %v2550
        %2552 = vmatmul.mubr.f32.gmra.mrb[0].mxu0 %v2551
        %v2553 = vpop.f32.mrb[0].mxu0
        %v2554 = vadd.f32 %v2443, %v2553
        %v2555 = vpop.f32.mrb[0].mxu0
        %2556 = vdwg.mxu0
        %2557 = vmatprep.subr.mxu0 0.0
        %v2558 = vand.u32 %v1445, 4294901760
        %2559 = vmatpush1.msra.mxu0 %v2558
        %2560 = vmatprep.subr.mxu0 0.0
        %v2561 = vand.u32 %v1446, 4294901760
        %2562 = vmatpush1.msra.mxu0 %v2561
        %2563 = vmatprep.subr.mxu0 0.0
        %v2564 = vand.u32 %v1447, 4294901760
        %2565 = vmatpush1.msra.mxu0 %v2564
        %2566 = vmatprep.subr.mxu0 0.0
        %v2567 = vand.u32 %v1448, 4294901760
        %2568 = vmatpush1.msra.mxu0 %v2567
        %2569 = vmatprep.subr.mxu0 0.0
        %v2570 = vand.u32 %v1449, 4294901760
        %2571 = vmatpush1.msra.mxu0 %v2570
        %2572 = vmatprep.subr.mxu0 0.0
        %v2573 = vand.u32 %v1450, 4294901760
        %2574 = vmatpush1.msra.mxu0 %v2573
        %2575 = vmatprep.subr.mxu0 0.0
        %v2576 = vand.u32 %v1451, 4294901760
        %2577 = vmatpush1.msra.mxu0 %v2576
        %2578 = vmatprep.subr.mxu0 0.0
        %v2579 = vand.u32 %v1452, 4294901760
        %2580 = vmatpush1.msra.mxu0 %v2579
        %2581 = vmatprep.subr.mxu0 0.0
        %v2582 = vand.u32 %v1453, 4294901760
        %2583 = vmatpush1.msra.mxu0 %v2582
        %2584 = vmatprep.subr.mxu0 0.0
        %v2585 = vand.u32 %v1454, 4294901760
        %2586 = vmatpush1.msra.mxu0 %v2585
        %2587 = vmatprep.subr.mxu0 0.0
        %v2588 = vand.u32 %v1455, 4294901760
        %2589 = vmatpush1.msra.mxu0 %v2588
        %2590 = vmatprep.subr.mxu0 0.0
        %v2591 = vand.u32 %v1456, 4294901760
        %2592 = vmatpush1.msra.mxu0 %v2591
        %2593 = vmatprep.subr.mxu0 0.0
        %v2594 = vand.u32 %v1457, 4294901760
        %2595 = vmatpush1.msra.mxu0 %v2594
        %2596 = vmatprep.subr.mxu0 0.0
        %v2597 = vand.u32 %v1458, 4294901760
        %2598 = vmatpush1.msra.mxu0 %v2597
        %2599 = vmatprep.subr.mxu0 0.0
        %v2600 = vand.u32 %v1459, 4294901760
        %2601 = vmatpush1.msra.mxu0 %v2600
        %2602 = vmatprep.subr.mxu0 0.0
        %v2603 = vand.u32 %v1460, 4294901760
        %2604 = vmatpush1.msra.mxu0 %v2603
        %2605 = vmatprep.subr.mxu0 0.0
        %2606 = vmatpush1.msra.mxu0 0.0
        %2607 = vmatprep.subr.mxu0 0.0
        %2608 = vmatpush1.msra.mxu0 0.0
        %2609 = vmatprep.subr.mxu0 0.0
        %2610 = vmatpush1.msra.mxu0 0.0
        %2611 = vmatprep.subr.mxu0 0.0
        %2612 = vmatpush1.msra.mxu0 0.0
        %2613 = vmatprep.subr.mxu0 0.0
        %2614 = vmatpush1.msra.mxu0 0.0
        %2615 = vmatprep.subr.mxu0 0.0
        %2616 = vmatpush1.msra.mxu0 0.0
        %2617 = vmatprep.subr.mxu0 0.0
        %2618 = vmatpush1.msra.mxu0 0.0
        %2619 = vmatprep.subr.mxu0 0.0
        %2620 = vmatpush1.msra.mxu0 0.0
        %2621 = vmatprep.subr.mxu0 0.0
        %2622 = vmatpush1.msra.mxu0 0.0
        %2623 = vmatprep.subr.mxu0 0.0
        %2624 = vmatpush1.msra.mxu0 0.0
        %2625 = vmatprep.subr.mxu0 0.0
        %2626 = vmatpush1.msra.mxu0 0.0
        %2627 = vmatprep.subr.mxu0 0.0
        %2628 = vmatpush1.msra.mxu0 0.0
        %2629 = vmatprep.subr.mxu0 0.0
        %2630 = vmatpush1.msra.mxu0 0.0
        %2631 = vmatprep.subr.mxu0 0.0
        %2632 = vmatpush1.msra.mxu0 0.0
        %2633 = vmatprep.subr.mxu0 0.0
        %2634 = vmatpush1.msra.mxu0 0.0
        %2635 = vmatprep.subr.mxu0 0.0
        %2636 = vmatpush1.msra.mxu0 0.0
        %2637 = vmatprep.mubr.f32.mxu0 0.0
        %v2638 = vand.u32 %v2186, 4294901760
        %v2639 = vsub.f32 %v2186, %v2638
        %v2640 = vand.u32 %v2639, 4294901760
        %2641 = vmatmul.mubr.f32.gmra.mrb[0].mxu0 %v2640
        %v2642 = vpop.f32.mrb[0].mxu0
        %v2643 = vadd.f32 %v2547, %v2642
        %v2644 = vpop.f32.mrb[0].mxu0
        %2645 = vmatprep.mubr.f32.mxu0 0.0
        %v2646 = vand.u32 %v2187, 4294901760
        %v2647 = vsub.f32 %v2187, %v2646
        %v2648 = vand.u32 %v2647, 4294901760
        %2649 = vmatmul.mubr.f32.gmra.mrb[0].mxu0 %v2648
        %v2650 = vpop.f32.mrb[0].mxu0
        %v2651 = vadd.f32 %v2554, %v2650
        %v2652 = vpop.f32.mrb[0].mxu0
        %2653 = vdwg.mxu0
        %2654 = vmatprep.subr.mxu0 0.0
        %v2655 = vand.u32 %v1445, 4294901760
        %v2656 = vsub.f32 %v1445, %v2655
        %v2657 = vand.u32 %v2656, 4294901760
        %2658 = vmatpush1.msra.mxu0 %v2657
        %2659 = vmatprep.subr.mxu0 0.0
        %v2660 = vand.u32 %v1446, 4294901760
        %v2661 = vsub.f32 %v1446, %v2660
        %v2662 = vand.u32 %v2661, 4294901760
        %2663 = vmatpush1.msra.mxu0 %v2662
        %2664 = vmatprep.subr.mxu0 0.0
        %v2665 = vand.u32 %v1447, 4294901760
        %v2666 = vsub.f32 %v1447, %v2665
        %v2667 = vand.u32 %v2666, 4294901760
        %2668 = vmatpush1.msra.mxu0 %v2667
        %2669 = vmatprep.subr.mxu0 0.0
        %v2670 = vand.u32 %v1448, 4294901760
        %v2671 = vsub.f32 %v1448, %v2670
        %v2672 = vand.u32 %v2671, 4294901760
        %2673 = vmatpush1.msra.mxu0 %v2672
        %2674 = vmatprep.subr.mxu0 0.0
        %v2675 = vand.u32 %v1449, 4294901760
        %v2676 = vsub.f32 %v1449, %v2675
        %v2677 = vand.u32 %v2676, 4294901760
        %2678 = vmatpush1.msra.mxu0 %v2677
        %2679 = vmatprep.subr.mxu0 0.0
        %v2680 = vand.u32 %v1450, 4294901760
        %v2681 = vsub.f32 %v1450, %v2680
        %v2682 = vand.u32 %v2681, 4294901760
        %2683 = vmatpush1.msra.mxu0 %v2682
        %2684 = vmatprep.subr.mxu0 0.0
        %v2685 = vand.u32 %v1451, 4294901760
        %v2686 = vsub.f32 %v1451, %v2685
        %v2687 = vand.u32 %v2686, 4294901760
        %2688 = vmatpush1.msra.mxu0 %v2687
        %2689 = vmatprep.subr.mxu0 0.0
        %v2690 = vand.u32 %v1452, 4294901760
        %v2691 = vsub.f32 %v1452, %v2690
        %v2692 = vand.u32 %v2691, 4294901760
        %2693 = vmatpush1.msra.mxu0 %v2692
        %2694 = vmatprep.subr.mxu0 0.0
        %v2695 = vand.u32 %v1453, 4294901760
        %v2696 = vsub.f32 %v1453, %v2695
        %v2697 = vand.u32 %v2696, 4294901760
        %2698 = vmatpush1.msra.mxu0 %v2697
        %2699 = vmatprep.subr.mxu0 0.0
        %v2700 = vand.u32 %v1454, 4294901760
        %v2701 = vsub.f32 %v1454, %v2700
        %v2702 = vand.u32 %v2701, 4294901760
        %2703 = vmatpush1.msra.mxu0 %v2702
        %2704 = vmatprep.subr.mxu0 0.0
        %v2705 = vand.u32 %v1455, 4294901760
        %v2706 = vsub.f32 %v1455, %v2705
        %v2707 = vand.u32 %v2706, 4294901760
        %2708 = vmatpush1.msra.mxu0 %v2707
        %2709 = vmatprep.subr.mxu0 0.0
        %v2710 = vand.u32 %v1456, 4294901760
        %v2711 = vsub.f32 %v1456, %v2710
        %v2712 = vand.u32 %v2711, 4294901760
        %2713 = vmatpush1.msra.mxu0 %v2712
        %2714 = vmatprep.subr.mxu0 0.0
        %v2715 = vand.u32 %v1457, 4294901760
        %v2716 = vsub.f32 %v1457, %v2715
        %v2717 = vand.u32 %v2716, 4294901760
        %2718 = vmatpush1.msra.mxu0 %v2717
        %2719 = vmatprep.subr.mxu0 0.0
        %v2720 = vand.u32 %v1458, 4294901760
        %v2721 = vsub.f32 %v1458, %v2720
        %v2722 = vand.u32 %v2721, 4294901760
        %2723 = vmatpush1.msra.mxu0 %v2722
        %2724 = vmatprep.subr.mxu0 0.0
        %v2725 = vand.u32 %v1459, 4294901760
        %v2726 = vsub.f32 %v1459, %v2725
        %v2727 = vand.u32 %v2726, 4294901760
        %2728 = vmatpush1.msra.mxu0 %v2727
        %2729 = vmatprep.subr.mxu0 0.0
        %v2730 = vand.u32 %v1460, 4294901760
        %v2731 = vsub.f32 %v1460, %v2730
        %v2732 = vand.u32 %v2731, 4294901760
        %2733 = vmatpush1.msra.mxu0 %v2732
        %2734 = vmatprep.subr.mxu0 0.0
        %2735 = vmatpush1.msra.mxu0 0.0
        %2736 = vmatprep.subr.mxu0 0.0
        %2737 = vmatpush1.msra.mxu0 0.0
        %2738 = vmatprep.subr.mxu0 0.0
        %2739 = vmatpush1.msra.mxu0 0.0
        %2740 = vmatprep.subr.mxu0 0.0
        %2741 = vmatpush1.msra.mxu0 0.0
        %2742 = vmatprep.subr.mxu0 0.0
        %2743 = vmatpush1.msra.mxu0 0.0
        %2744 = vmatprep.subr.mxu0 0.0
        %2745 = vmatpush1.msra.mxu0 0.0
        %2746 = vmatprep.subr.mxu0 0.0
        %2747 = vmatpush1.msra.mxu0 0.0
        %2748 = vmatprep.subr.mxu0 0.0
        %2749 = vmatpush1.msra.mxu0 0.0
        %2750 = vmatprep.subr.mxu0 0.0
        %2751 = vmatpush1.msra.mxu0 0.0
        %2752 = vmatprep.subr.mxu0 0.0
        %2753 = vmatpush1.msra.mxu0 0.0
        %2754 = vmatprep.subr.mxu0 0.0
        %2755 = vmatpush1.msra.mxu0 0.0
        %2756 = vmatprep.subr.mxu0 0.0
        %2757 = vmatpush1.msra.mxu0 0.0
        %2758 = vmatprep.subr.mxu0 0.0
        %2759 = vmatpush1.msra.mxu0 0.0
        %2760 = vmatprep.subr.mxu0 0.0
        %2761 = vmatpush1.msra.mxu0 0.0
        %2762 = vmatprep.subr.mxu0 0.0
        %2763 = vmatpush1.msra.mxu0 0.0
        %2764 = vmatprep.subr.mxu0 0.0
        %2765 = vmatpush1.msra.mxu0 0.0
        %2766 = vmatprep.mubr.f32.mxu0 0.0
        %v2767 = vand.u32 %v2186, 4294901760
        %2768 = vmatmul.mubr.f32.gmra.mrb[0].mxu0 %v2767
        %v2769 = vpop.f32.mrb[0].mxu0
        %v2770 = vadd.f32 %v2643, %v2769
        %v2771 = vpop.f32.mrb[0].mxu0
        %2772 = vmatprep.mubr.f32.mxu0 0.0
        %v2773 = vand.u32 %v2187, 4294901760
        %2774 = vmatmul.mubr.f32.gmra.mrb[0].mxu0 %v2773
        %v2775 = vpop.f32.mrb[0].mxu0
        %v2776 = vadd.f32 %v2651, %v2775
        %v2777 = vpop.f32.mrb[0].mxu0
        %2778 = vdwg.mxu0
        %2779 = vmatprep.subr.mxu0 0.0
        %v2780 = vand.u32 %v1445, 4294901760
        %2781 = vmatpush1.msra.mxu0 %v2780
        %2782 = vmatprep.subr.mxu0 0.0
        %v2783 = vand.u32 %v1446, 4294901760
        %2784 = vmatpush1.msra.mxu0 %v2783
        %2785 = vmatprep.subr.mxu0 0.0
        %v2786 = vand.u32 %v1447, 4294901760
        %2787 = vmatpush1.msra.mxu0 %v2786
        %2788 = vmatprep.subr.mxu0 0.0
        %v2789 = vand.u32 %v1448, 4294901760
        %2790 = vmatpush1.msra.mxu0 %v2789
        %2791 = vmatprep.subr.mxu0 0.0
        %v2792 = vand.u32 %v1449, 4294901760
        %2793 = vmatpush1.msra.mxu0 %v2792
        %2794 = vmatprep.subr.mxu0 0.0
        %v2795 = vand.u32 %v1450, 4294901760
        %2796 = vmatpush1.msra.mxu0 %v2795
        %2797 = vmatprep.subr.mxu0 0.0
        %v2798 = vand.u32 %v1451, 4294901760
        %2799 = vmatpush1.msra.mxu0 %v2798
        %2800 = vmatprep.subr.mxu0 0.0
        %v2801 = vand.u32 %v1452, 4294901760
        %2802 = vmatpush1.msra.mxu0 %v2801
        %2803 = vmatprep.subr.mxu0 0.0
        %v2804 = vand.u32 %v1453, 4294901760
        %2805 = vmatpush1.msra.mxu0 %v2804
        %2806 = vmatprep.subr.mxu0 0.0
        %v2807 = vand.u32 %v1454, 4294901760
        %2808 = vmatpush1.msra.mxu0 %v2807
        %2809 = vmatprep.subr.mxu0 0.0
        %v2810 = vand.u32 %v1455, 4294901760
        %2811 = vmatpush1.msra.mxu0 %v2810
        %2812 = vmatprep.subr.mxu0 0.0
        %v2813 = vand.u32 %v1456, 4294901760
        %2814 = vmatpush1.msra.mxu0 %v2813
        %2815 = vmatprep.subr.mxu0 0.0
        %v2816 = vand.u32 %v1457, 4294901760
        %2817 = vmatpush1.msra.mxu0 %v2816
        %2818 = vmatprep.subr.mxu0 0.0
        %v2819 = vand.u32 %v1458, 4294901760
        %2820 = vmatpush1.msra.mxu0 %v2819
        %2821 = vmatprep.subr.mxu0 0.0
        %v2822 = vand.u32 %v1459, 4294901760
        %2823 = vmatpush1.msra.mxu0 %v2822
        %2824 = vmatprep.subr.mxu0 0.0
        %v2825 = vand.u32 %v1460, 4294901760
        %2826 = vmatpush1.msra.mxu0 %v2825
        %2827 = vmatprep.subr.mxu0 0.0
        %2828 = vmatpush1.msra.mxu0 0.0
        %2829 = vmatprep.subr.mxu0 0.0
        %2830 = vmatpush1.msra.mxu0 0.0
        %2831 = vmatprep.subr.mxu0 0.0
        %2832 = vmatpush1.msra.mxu0 0.0
        %2833 = vmatprep.subr.mxu0 0.0
        %2834 = vmatpush1.msra.mxu0 0.0
        %2835 = vmatprep.subr.mxu0 0.0
        %2836 = vmatpush1.msra.mxu0 0.0
        %2837 = vmatprep.subr.mxu0 0.0
        %2838 = vmatpush1.msra.mxu0 0.0
        %2839 = vmatprep.subr.mxu0 0.0
        %2840 = vmatpush1.msra.mxu0 0.0
        %2841 = vmatprep.subr.mxu0 0.0
        %2842 = vmatpush1.msra.mxu0 0.0
        %2843 = vmatprep.subr.mxu0 0.0
        %2844 = vmatpush1.msra.mxu0 0.0
        %2845 = vmatprep.subr.mxu0 0.0
        %2846 = vmatpush1.msra.mxu0 0.0
        %2847 = vmatprep.subr.mxu0 0.0
        %2848 = vmatpush1.msra.mxu0 0.0
        %2849 = vmatprep.subr.mxu0 0.0
        %2850 = vmatpush1.msra.mxu0 0.0
        %2851 = vmatprep.subr.mxu0 0.0
        %2852 = vmatpush1.msra.mxu0 0.0
        %2853 = vmatprep.subr.mxu0 0.0
        %2854 = vmatpush1.msra.mxu0 0.0
        %2855 = vmatprep.subr.mxu0 0.0
        %2856 = vmatpush1.msra.mxu0 0.0
        %2857 = vmatprep.subr.mxu0 0.0
        %2858 = vmatpush1.msra.mxu0 0.0
        %2859 = vmatprep.mubr.f32.mxu0 0.0
        %v2860 = vand.u32 %v2186, 4294901760
        %2861 = vmatmul.mubr.f32.gmra.mrb[0].mxu0 %v2860
        %v2862 = vpop.f32.mrb[0].mxu0
        %v2863 = vadd.f32 %v2770, %v2862
        %v2864 = vpop.f32.mrb[0].mxu0
        %2865 = vmatprep.mubr.f32.mxu0 0.0
        %v2866 = vand.u32 %v2187, 4294901760
        %2867 = vmatmul.mubr.f32.gmra.mrb[0].mxu0 %v2866
        %v2868 = vpop.f32.mrb[0].mxu0
        %v2869 = vadd.f32 %v2776, %v2868
        %v2870 = vpop.f32.mrb[0].mxu0
        %2871 = vdwg.mxu0
        %v2872 = vadd.f32 %v2184, %v2863
        %v2873 = vadd.f32 %v2185, %v2869
        %v2874 = vld [vmem:[#allocation4] sm:$0xff]
        %v2875 = vld [vmem:[#allocation4 + $0x8] sm:$0xff]
        %v2876 = vmul.f32 %v2159, %v2874
        %v2877 = vmul.f32 %v2159, %v2875
        %v2878 = vmul.f32 %v2167, %v2872
        %v2879 = vmul.f32 %v2167, %v2873
        %v2880 = vadd.f32 %v2876, %v2878
        %v2881 = vadd.f32 %v2877, %v2879
        %v2882 = vtanh.pop %v2880
        %v2883 = vtanh.pop %v2881
        %2884 = vst [vmem:[#allocation3] sm:$0xff] %v2882
        %2885 = vst [vmem:[#allocation3 + $0x8] sm:$0xff] %v2883
        %2886 = vst [vmem:[#allocation4] sm:$0xff] %v2880
        %2887 = vst [vmem:[#allocation4 + $0x8] sm:$0xff] %v2881
        %s2888 = scalar_lea.vmem %s406, 16 [#allocation14]
        %2889 = vst [vmem:[%s2888] sm:$0xff] %v2882
        %2890 = vst [vmem:[%s2888 + $0x8] sm:$0xff] %v2883
        %s2891 = scalar_lea.vmem %s413, 16 [#allocation15]
        %2892 = vst [vmem:[%s2891] sm:$0xff] %v2880
        %2893 = vst [vmem:[%s2891 + $0x8] sm:$0xff] %v2881
        %s2894 = scalar_lea.vmem [#allocation2], 32
        %v2895 = vld [vmem:[%s2894] sm:$0xff]
        %v2896 = vld [vmem:[%s2894 + $0x8] sm:$0xff]
        %v2897 = vld [vmem:[#allocation3] sm:$0xff]
        %v2898 = vld [vmem:[#allocation3 + $0x8] sm:$0xff]
        %2899 = vmatprep.subr.mxu0 0.0
        %v2900 = vand.u32 %v1445, 4294901760
        %2901 = vmatpush1.msra.mxu0 %v2900
        %2902 = vmatprep.subr.mxu0 0.0
        %v2903 = vand.u32 %v1446, 4294901760
        %2904 = vmatpush1.msra.mxu0 %v2903
        %2905 = vmatprep.subr.mxu0 0.0
        %v2906 = vand.u32 %v1447, 4294901760
        %2907 = vmatpush1.msra.mxu0 %v2906
        %2908 = vmatprep.subr.mxu0 0.0
        %v2909 = vand.u32 %v1448, 4294901760
        %2910 = vmatpush1.msra.mxu0 %v2909
        %2911 = vmatprep.subr.mxu0 0.0
        %v2912 = vand.u32 %v1449, 4294901760
        %2913 = vmatpush1.msra.mxu0 %v2912
        %2914 = vmatprep.subr.mxu0 0.0
        %v2915 = vand.u32 %v1450, 4294901760
        %2916 = vmatpush1.msra.mxu0 %v2915
        %2917 = vmatprep.subr.mxu0 0.0
        %v2918 = vand.u32 %v1451, 4294901760
        %2919 = vmatpush1.msra.mxu0 %v2918
        %2920 = vmatprep.subr.mxu0 0.0
        %v2921 = vand.u32 %v1452, 4294901760
        %2922 = vmatpush1.msra.mxu0 %v2921
        %2923 = vmatprep.subr.mxu0 0.0
        %v2924 = vand.u32 %v1453, 4294901760
        %2925 = vmatpush1.msra.mxu0 %v2924
        %2926 = vmatprep.subr.mxu0 0.0
        %v2927 = vand.u32 %v1454, 4294901760
        %2928 = vmatpush1.msra.mxu0 %v2927
        %2929 = vmatprep.subr.mxu0 0.0
        %v2930 = vand.u32 %v1455, 4294901760
        %2931 = vmatpush1.msra.mxu0 %v2930
        %2932 = vmatprep.subr.mxu0 0.0
        %v2933 = vand.u32 %v1456, 4294901760
        %2934 = vmatpush1.msra.mxu0 %v2933
        %2935 = vmatprep.subr.mxu0 0.0
        %v2936 = vand.u32 %v1457, 4294901760
        %2937 = vmatpush1.msra.mxu0 %v2936
        %2938 = vmatprep.subr.mxu0 0.0
        %v2939 = vand.u32 %v1458, 4294901760
        %2940 = vmatpush1.msra.mxu0 %v2939
        %2941 = vmatprep.subr.mxu0 0.0
        %v2942 = vand.u32 %v1459, 4294901760
        %2943 = vmatpush1.msra.mxu0 %v2942
        %2944 = vmatprep.subr.mxu0 0.0
        %v2945 = vand.u32 %v1460, 4294901760
        %2946 = vmatpush1.msra.mxu0 %v2945
        %2947 = vmatprep.subr.mxu0 0.0
        %2948 = vmatpush1.msra.mxu0 0.0
        %2949 = vmatprep.subr.mxu0 0.0
        %2950 = vmatpush1.msra.mxu0 0.0
        %2951 = vmatprep.subr.mxu0 0.0
        %2952 = vmatpush1.msra.mxu0 0.0
        %2953 = vmatprep.subr.mxu0 0.0
        %2954 = vmatpush1.msra.mxu0 0.0
        %2955 = vmatprep.subr.mxu0 0.0
        %2956 = vmatpush1.msra.mxu0 0.0
        %2957 = vmatprep.subr.mxu0 0.0
        %2958 = vmatpush1.msra.mxu0 0.0
        %2959 = vmatprep.subr.mxu0 0.0
        %2960 = vmatpush1.msra.mxu0 0.0
        %2961 = vmatprep.subr.mxu0 0.0
        %2962 = vmatpush1.msra.mxu0 0.0
        %2963 = vmatprep.subr.mxu0 0.0
        %2964 = vmatpush1.msra.mxu0 0.0
        %2965 = vmatprep.subr.mxu0 0.0
        %2966 = vmatpush1.msra.mxu0 0.0
        %2967 = vmatprep.subr.mxu0 0.0
        %2968 = vmatpush1.msra.mxu0 0.0
        %2969 = vmatprep.subr.mxu0 0.0
        %2970 = vmatpush1.msra.mxu0 0.0
        %2971 = vmatprep.subr.mxu0 0.0
        %2972 = vmatpush1.msra.mxu0 0.0
        %2973 = vmatprep.subr.mxu0 0.0
        %2974 = vmatpush1.msra.mxu0 0.0
        %2975 = vmatprep.subr.mxu0 0.0
        %2976 = vmatpush1.msra.mxu0 0.0
        %2977 = vmatprep.subr.mxu0 0.0
        %2978 = vmatpush1.msra.mxu0 0.0
        %2979 = vmatprep.mubr.f32.mxu0 0.0
        %v2980 = vand.u32 %v2897, 4294901760
        %v2981 = vsub.f32 %v2897, %v2980
        %v2982 = vand.u32 %v2981, 4294901760
        %v2983 = vsub.f32 %v2981, %v2982
        %v2984 = vand.u32 %v2983, 4294901760
        %2985 = vmatmul.mubr.f32.gmra.mrb[0].mxu0 %v2984
        %v2986 = vpop.f32.mrb[0].mxu0
        %v2987 = vadd.f32 0.0, %v2986
        %v2988 = vpop.f32.mrb[0].mxu0
        %2989 = vmatprep.mubr.f32.mxu0 0.0
        %v2990 = vand.u32 %v2898, 4294901760
        %v2991 = vsub.f32 %v2898, %v2990
        %v2992 = vand.u32 %v2991, 4294901760
        %v2993 = vsub.f32 %v2991, %v2992
        %v2994 = vand.u32 %v2993, 4294901760
        %2995 = vmatmul.mubr.f32.gmra.mrb[0].mxu0 %v2994
        %v2996 = vpop.f32.mrb[0].mxu0
        %v2997 = vadd.f32 0.0, %v2996
        %v2998 = vpop.f32.mrb[0].mxu0
        %2999 = vdwg.mxu0
        %3000 = vmatprep.subr.mxu0 0.0
        %v3001 = vand.u32 %v1445, 4294901760
        %v3002 = vsub.f32 %v1445, %v3001
        %v3003 = vand.u32 %v3002, 4294901760
        %v3004 = vsub.f32 %v3002, %v3003
        %v3005 = vand.u32 %v3004, 4294901760
        %3006 = vmatpush1.msra.mxu0 %v3005
        %3007 = vmatprep.subr.mxu0 0.0
        %v3008 = vand.u32 %v1446, 4294901760
        %v3009 = vsub.f32 %v1446, %v3008
        %v3010 = vand.u32 %v3009, 4294901760
        %v3011 = vsub.f32 %v3009, %v3010
        %v3012 = vand.u32 %v3011, 4294901760
        %3013 = vmatpush1.msra.mxu0 %v3012
        %3014 = vmatprep.subr.mxu0 0.0
        %v3015 = vand.u32 %v1447, 4294901760
        %v3016 = vsub.f32 %v1447, %v3015
        %v3017 = vand.u32 %v3016, 4294901760
        %v3018 = vsub.f32 %v3016, %v3017
        %v3019 = vand.u32 %v3018, 4294901760
        %3020 = vmatpush1.msra.mxu0 %v3019
        %3021 = vmatprep.subr.mxu0 0.0
        %v3022 = vand.u32 %v1448, 4294901760
        %v3023 = vsub.f32 %v1448, %v3022
        %v3024 = vand.u32 %v3023, 4294901760
        %v3025 = vsub.f32 %v3023, %v3024
        %v3026 = vand.u32 %v3025, 4294901760
        %3027 = vmatpush1.msra.mxu0 %v3026
        %3028 = vmatprep.subr.mxu0 0.0
        %v3029 = vand.u32 %v1449, 4294901760
        %v3030 = vsub.f32 %v1449, %v3029
        %v3031 = vand.u32 %v3030, 4294901760
        %v3032 = vsub.f32 %v3030, %v3031
        %v3033 = vand.u32 %v3032, 4294901760
        %3034 = vmatpush1.msra.mxu0 %v3033
        %3035 = vmatprep.subr.mxu0 0.0
        %v3036 = vand.u32 %v1450, 4294901760
        %v3037 = vsub.f32 %v1450, %v3036
        %v3038 = vand.u32 %v3037, 4294901760
        %v3039 = vsub.f32 %v3037, %v3038
        %v3040 = vand.u32 %v3039, 4294901760
        %3041 = vmatpush1.msra.mxu0 %v3040
        %3042 = vmatprep.subr.mxu0 0.0
        %v3043 = vand.u32 %v1451, 4294901760
        %v3044 = vsub.f32 %v1451, %v3043
        %v3045 = vand.u32 %v3044, 4294901760
        %v3046 = vsub.f32 %v3044, %v3045
        %v3047 = vand.u32 %v3046, 4294901760
        %3048 = vmatpush1.msra.mxu0 %v3047
        %3049 = vmatprep.subr.mxu0 0.0
        %v3050 = vand.u32 %v1452, 4294901760
        %v3051 = vsub.f32 %v1452, %v3050
        %v3052 = vand.u32 %v3051, 4294901760
        %v3053 = vsub.f32 %v3051, %v3052
        %v3054 = vand.u32 %v3053, 4294901760
        %3055 = vmatpush1.msra.mxu0 %v3054
        %3056 = vmatprep.subr.mxu0 0.0
        %v3057 = vand.u32 %v1453, 4294901760
        %v3058 = vsub.f32 %v1453, %v3057
        %v3059 = vand.u32 %v3058, 4294901760
        %v3060 = vsub.f32 %v3058, %v3059
        %v3061 = vand.u32 %v3060, 4294901760
        %3062 = vmatpush1.msra.mxu0 %v3061
        %3063 = vmatprep.subr.mxu0 0.0
        %v3064 = vand.u32 %v1454, 4294901760
        %v3065 = vsub.f32 %v1454, %v3064
        %v3066 = vand.u32 %v3065, 4294901760
        %v3067 = vsub.f32 %v3065, %v3066
        %v3068 = vand.u32 %v3067, 4294901760
        %3069 = vmatpush1.msra.mxu0 %v3068
        %3070 = vmatprep.subr.mxu0 0.0
        %v3071 = vand.u32 %v1455, 4294901760
        %v3072 = vsub.f32 %v1455, %v3071
        %v3073 = vand.u32 %v3072, 4294901760
        %v3074 = vsub.f32 %v3072, %v3073
        %v3075 = vand.u32 %v3074, 4294901760
        %3076 = vmatpush1.msra.mxu0 %v3075
        %3077 = vmatprep.subr.mxu0 0.0
        %v3078 = vand.u32 %v1456, 4294901760
        %v3079 = vsub.f32 %v1456, %v3078
        %v3080 = vand.u32 %v3079, 4294901760
        %v3081 = vsub.f32 %v3079, %v3080
        %v3082 = vand.u32 %v3081, 4294901760
        %3083 = vmatpush1.msra.mxu0 %v3082
        %3084 = vmatprep.subr.mxu0 0.0
        %v3085 = vand.u32 %v1457, 4294901760
        %v3086 = vsub.f32 %v1457, %v3085
        %v3087 = vand.u32 %v3086, 4294901760
        %v3088 = vsub.f32 %v3086, %v3087
        %v3089 = vand.u32 %v3088, 4294901760
        %3090 = vmatpush1.msra.mxu0 %v3089
        %3091 = vmatprep.subr.mxu0 0.0
        %v3092 = vand.u32 %v1458, 4294901760
        %v3093 = vsub.f32 %v1458, %v3092
        %v3094 = vand.u32 %v3093, 4294901760
        %v3095 = vsub.f32 %v3093, %v3094
        %v3096 = vand.u32 %v3095, 4294901760
        %3097 = vmatpush1.msra.mxu0 %v3096
        %3098 = vmatprep.subr.mxu0 0.0
        %v3099 = vand.u32 %v1459, 4294901760
        %v3100 = vsub.f32 %v1459, %v3099
        %v3101 = vand.u32 %v3100, 4294901760
        %v3102 = vsub.f32 %v3100, %v3101
        %v3103 = vand.u32 %v3102, 4294901760
        %3104 = vmatpush1.msra.mxu0 %v3103
        %3105 = vmatprep.subr.mxu0 0.0
        %v3106 = vand.u32 %v1460, 4294901760
        %v3107 = vsub.f32 %v1460, %v3106
        %v3108 = vand.u32 %v3107, 4294901760
        %v3109 = vsub.f32 %v3107, %v3108
        %v3110 = vand.u32 %v3109, 4294901760
        %3111 = vmatpush1.msra.mxu0 %v3110
        %3112 = vmatprep.subr.mxu0 0.0
        %3113 = vmatpush1.msra.mxu0 0.0
        %3114 = vmatprep.subr.mxu0 0.0
        %3115 = vmatpush1.msra.mxu0 0.0
        %3116 = vmatprep.subr.mxu0 0.0
        %3117 = vmatpush1.msra.mxu0 0.0
        %3118 = vmatprep.subr.mxu0 0.0
        %3119 = vmatpush1.msra.mxu0 0.0
        %3120 = vmatprep.subr.mxu0 0.0
        %3121 = vmatpush1.msra.mxu0 0.0
        %3122 = vmatprep.subr.mxu0 0.0
        %3123 = vmatpush1.msra.mxu0 0.0
        %3124 = vmatprep.subr.mxu0 0.0
        %3125 = vmatpush1.msra.mxu0 0.0
        %3126 = vmatprep.subr.mxu0 0.0
        %3127 = vmatpush1.msra.mxu0 0.0
        %3128 = vmatprep.subr.mxu0 0.0
        %3129 = vmatpush1.msra.mxu0 0.0
        %3130 = vmatprep.subr.mxu0 0.0
        %3131 = vmatpush1.msra.mxu0 0.0
        %3132 = vmatprep.subr.mxu0 0.0
        %3133 = vmatpush1.msra.mxu0 0.0
        %3134 = vmatprep.subr.mxu0 0.0
        %3135 = vmatpush1.msra.mxu0 0.0
        %3136 = vmatprep.subr.mxu0 0.0
        %3137 = vmatpush1.msra.mxu0 0.0
        %3138 = vmatprep.subr.mxu0 0.0
        %3139 = vmatpush1.msra.mxu0 0.0
        %3140 = vmatprep.subr.mxu0 0.0
        %3141 = vmatpush1.msra.mxu0 0.0
        %3142 = vmatprep.subr.mxu0 0.0
        %3143 = vmatpush1.msra.mxu0 0.0
        %3144 = vmatprep.mubr.f32.mxu0 0.0
        %v3145 = vand.u32 %v2897, 4294901760
        %3146 = vmatmul.mubr.f32.gmra.mrb[0].mxu0 %v3145
        %v3147 = vpop.f32.mrb[0].mxu0
        %v3148 = vadd.f32 %v2987, %v3147
        %v3149 = vpop.f32.mrb[0].mxu0
        %3150 = vmatprep.mubr.f32.mxu0 0.0
        %v3151 = vand.u32 %v2898, 4294901760
        %3152 = vmatmul.mubr.f32.gmra.mrb[0].mxu0 %v3151
        %v3153 = vpop.f32.mrb[0].mxu0
        %v3154 = vadd.f32 %v2997, %v3153
        %v3155 = vpop.f32.mrb[0].mxu0
        %3156 = vdwg.mxu0
        %3157 = vmatprep.subr.mxu0 0.0
        %v3158 = vand.u32 %v1445, 4294901760
        %v3159 = vsub.f32 %v1445, %v3158
        %3160 = vmatpush1.msra.mxu0 %v3159
        %3161 = vmatprep.subr.mxu0 0.0
        %v3162 = vand.u32 %v1446, 4294901760
        %v3163 = vsub.f32 %v1446, %v3162
        %3164 = vmatpush1.msra.mxu0 %v3163
        %3165 = vmatprep.subr.mxu0 0.0
        %v3166 = vand.u32 %v1447, 4294901760
        %v3167 = vsub.f32 %v1447, %v3166
        %3168 = vmatpush1.msra.mxu0 %v3167
        %3169 = vmatprep.subr.mxu0 0.0
        %v3170 = vand.u32 %v1448, 4294901760
        %v3171 = vsub.f32 %v1448, %v3170
        %3172 = vmatpush1.msra.mxu0 %v3171
        %3173 = vmatprep.subr.mxu0 0.0
        %v3174 = vand.u32 %v1449, 4294901760
        %v3175 = vsub.f32 %v1449, %v3174
        %3176 = vmatpush1.msra.mxu0 %v3175
        %3177 = vmatprep.subr.mxu0 0.0
        %v3178 = vand.u32 %v1450, 4294901760
        %v3179 = vsub.f32 %v1450, %v3178
        %3180 = vmatpush1.msra.mxu0 %v3179
        %3181 = vmatprep.subr.mxu0 0.0
        %v3182 = vand.u32 %v1451, 4294901760
        %v3183 = vsub.f32 %v1451, %v3182
        %3184 = vmatpush1.msra.mxu0 %v3183
        %3185 = vmatprep.subr.mxu0 0.0
        %v3186 = vand.u32 %v1452, 4294901760
        %v3187 = vsub.f32 %v1452, %v3186
        %3188 = vmatpush1.msra.mxu0 %v3187
        %3189 = vmatprep.subr.mxu0 0.0
        %v3190 = vand.u32 %v1453, 4294901760
        %v3191 = vsub.f32 %v1453, %v3190
        %3192 = vmatpush1.msra.mxu0 %v3191
        %3193 = vmatprep.subr.mxu0 0.0
        %v3194 = vand.u32 %v1454, 4294901760
        %v3195 = vsub.f32 %v1454, %v3194
        %3196 = vmatpush1.msra.mxu0 %v3195
        %3197 = vmatprep.subr.mxu0 0.0
        %v3198 = vand.u32 %v1455, 4294901760
        %v3199 = vsub.f32 %v1455, %v3198
        %3200 = vmatpush1.msra.mxu0 %v3199
        %3201 = vmatprep.subr.mxu0 0.0
        %v3202 = vand.u32 %v1456, 4294901760
        %v3203 = vsub.f32 %v1456, %v3202
        %3204 = vmatpush1.msra.mxu0 %v3203
        %3205 = vmatprep.subr.mxu0 0.0
        %v3206 = vand.u32 %v1457, 4294901760
        %v3207 = vsub.f32 %v1457, %v3206
        %3208 = vmatpush1.msra.mxu0 %v3207
        %3209 = vmatprep.subr.mxu0 0.0
        %v3210 = vand.u32 %v1458, 4294901760
        %v3211 = vsub.f32 %v1458, %v3210
        %3212 = vmatpush1.msra.mxu0 %v3211
        %3213 = vmatprep.subr.mxu0 0.0
        %v3214 = vand.u32 %v1459, 4294901760
        %v3215 = vsub.f32 %v1459, %v3214
        %3216 = vmatpush1.msra.mxu0 %v3215
        %3217 = vmatprep.subr.mxu0 0.0
        %v3218 = vand.u32 %v1460, 4294901760
        %v3219 = vsub.f32 %v1460, %v3218
        %3220 = vmatpush1.msra.mxu0 %v3219
        %3221 = vmatprep.subr.mxu0 0.0
        %3222 = vmatpush1.msra.mxu0 0.0
        %3223 = vmatprep.subr.mxu0 0.0
        %3224 = vmatpush1.msra.mxu0 0.0
        %3225 = vmatprep.subr.mxu0 0.0
        %3226 = vmatpush1.msra.mxu0 0.0
        %3227 = vmatprep.subr.mxu0 0.0
        %3228 = vmatpush1.msra.mxu0 0.0
        %3229 = vmatprep.subr.mxu0 0.0
        %3230 = vmatpush1.msra.mxu0 0.0
        %3231 = vmatprep.subr.mxu0 0.0
        %3232 = vmatpush1.msra.mxu0 0.0
        %3233 = vmatprep.subr.mxu0 0.0
        %3234 = vmatpush1.msra.mxu0 0.0
        %3235 = vmatprep.subr.mxu0 0.0
        %3236 = vmatpush1.msra.mxu0 0.0
        %3237 = vmatprep.subr.mxu0 0.0
        %3238 = vmatpush1.msra.mxu0 0.0
        %3239 = vmatprep.subr.mxu0 0.0
        %3240 = vmatpush1.msra.mxu0 0.0
        %3241 = vmatprep.subr.mxu0 0.0
        %3242 = vmatpush1.msra.mxu0 0.0
        %3243 = vmatprep.subr.mxu0 0.0
        %3244 = vmatpush1.msra.mxu0 0.0
        %3245 = vmatprep.subr.mxu0 0.0
        %3246 = vmatpush1.msra.mxu0 0.0
        %3247 = vmatprep.subr.mxu0 0.0
        %3248 = vmatpush1.msra.mxu0 0.0
        %3249 = vmatprep.subr.mxu0 0.0
        %3250 = vmatpush1.msra.mxu0 0.0
        %3251 = vmatprep.subr.mxu0 0.0
        %3252 = vmatpush1.msra.mxu0 0.0
        %3253 = vmatprep.mubr.f32.mxu0 0.0
        %v3254 = vand.u32 %v2897, 4294901760
        %v3255 = vsub.f32 %v2897, %v3254
        %3256 = vmatmul.mubr.f32.gmra.mrb[0].mxu0 %v3255
        %v3257 = vpop.f32.mrb[0].mxu0
        %v3258 = vadd.f32 %v3148, %v3257
        %v3259 = vpop.f32.mrb[0].mxu0
        %3260 = vmatprep.mubr.f32.mxu0 0.0
        %v3261 = vand.u32 %v2898, 4294901760
        %v3262 = vsub.f32 %v2898, %v3261
        %3263 = vmatmul.mubr.f32.gmra.mrb[0].mxu0 %v3262
        %v3264 = vpop.f32.mrb[0].mxu0
        %v3265 = vadd.f32 %v3154, %v3264
        %v3266 = vpop.f32.mrb[0].mxu0
        %3267 = vdwg.mxu0
        %3268 = vmatprep.subr.mxu0 0.0
        %v3269 = vand.u32 %v1445, 4294901760
        %3270 = vmatpush1.msra.mxu0 %v3269
        %3271 = vmatprep.subr.mxu0 0.0
        %v3272 = vand.u32 %v1446, 4294901760
        %3273 = vmatpush1.msra.mxu0 %v3272
        %3274 = vmatprep.subr.mxu0 0.0
        %v3275 = vand.u32 %v1447, 4294901760
        %3276 = vmatpush1.msra.mxu0 %v3275
        %3277 = vmatprep.subr.mxu0 0.0
        %v3278 = vand.u32 %v1448, 4294901760
        %3279 = vmatpush1.msra.mxu0 %v3278
        %3280 = vmatprep.subr.mxu0 0.0
        %v3281 = vand.u32 %v1449, 4294901760
        %3282 = vmatpush1.msra.mxu0 %v3281
        %3283 = vmatprep.subr.mxu0 0.0
        %v3284 = vand.u32 %v1450, 4294901760
        %3285 = vmatpush1.msra.mxu0 %v3284
        %3286 = vmatprep.subr.mxu0 0.0
        %v3287 = vand.u32 %v1451, 4294901760
        %3288 = vmatpush1.msra.mxu0 %v3287
        %3289 = vmatprep.subr.mxu0 0.0
        %v3290 = vand.u32 %v1452, 4294901760
        %3291 = vmatpush1.msra.mxu0 %v3290
        %3292 = vmatprep.subr.mxu0 0.0
        %v3293 = vand.u32 %v1453, 4294901760
        %3294 = vmatpush1.msra.mxu0 %v3293
        %3295 = vmatprep.subr.mxu0 0.0
        %v3296 = vand.u32 %v1454, 4294901760
        %3297 = vmatpush1.msra.mxu0 %v3296
        %3298 = vmatprep.subr.mxu0 0.0
        %v3299 = vand.u32 %v1455, 4294901760
        %3300 = vmatpush1.msra.mxu0 %v3299
        %3301 = vmatprep.subr.mxu0 0.0
        %v3302 = vand.u32 %v1456, 4294901760
        %3303 = vmatpush1.msra.mxu0 %v3302
        %3304 = vmatprep.subr.mxu0 0.0
        %v3305 = vand.u32 %v1457, 4294901760
        %3306 = vmatpush1.msra.mxu0 %v3305
        %3307 = vmatprep.subr.mxu0 0.0
        %v3308 = vand.u32 %v1458, 4294901760
        %3309 = vmatpush1.msra.mxu0 %v3308
        %3310 = vmatprep.subr.mxu0 0.0
        %v3311 = vand.u32 %v1459, 4294901760
        %3312 = vmatpush1.msra.mxu0 %v3311
        %3313 = vmatprep.subr.mxu0 0.0
        %v3314 = vand.u32 %v1460, 4294901760
        %3315 = vmatpush1.msra.mxu0 %v3314
        %3316 = vmatprep.subr.mxu0 0.0
        %3317 = vmatpush1.msra.mxu0 0.0
        %3318 = vmatprep.subr.mxu0 0.0
        %3319 = vmatpush1.msra.mxu0 0.0
        %3320 = vmatprep.subr.mxu0 0.0
        %3321 = vmatpush1.msra.mxu0 0.0
        %3322 = vmatprep.subr.mxu0 0.0
        %3323 = vmatpush1.msra.mxu0 0.0
        %3324 = vmatprep.subr.mxu0 0.0
        %3325 = vmatpush1.msra.mxu0 0.0
        %3326 = vmatprep.subr.mxu0 0.0
        %3327 = vmatpush1.msra.mxu0 0.0
        %3328 = vmatprep.subr.mxu0 0.0
        %3329 = vmatpush1.msra.mxu0 0.0
        %3330 = vmatprep.subr.mxu0 0.0
        %3331 = vmatpush1.msra.mxu0 0.0
        %3332 = vmatprep.subr.mxu0 0.0
        %3333 = vmatpush1.msra.mxu0 0.0
        %3334 = vmatprep.subr.mxu0 0.0
        %3335 = vmatpush1.msra.mxu0 0.0
        %3336 = vmatprep.subr.mxu0 0.0
        %3337 = vmatpush1.msra.mxu0 0.0
        %3338 = vmatprep.subr.mxu0 0.0
        %3339 = vmatpush1.msra.mxu0 0.0
        %3340 = vmatprep.subr.mxu0 0.0
        %3341 = vmatpush1.msra.mxu0 0.0
        %3342 = vmatprep.subr.mxu0 0.0
        %3343 = vmatpush1.msra.mxu0 0.0
        %3344 = vmatprep.subr.mxu0 0.0
        %3345 = vmatpush1.msra.mxu0 0.0
        %3346 = vmatprep.subr.mxu0 0.0
        %3347 = vmatpush1.msra.mxu0 0.0
        %3348 = vmatprep.mubr.f32.mxu0 0.0
        %v3349 = vand.u32 %v2897, 4294901760
        %v3350 = vsub.f32 %v2897, %v3349
        %v3351 = vand.u32 %v3350, 4294901760
        %3352 = vmatmul.mubr.f32.gmra.mrb[0].mxu0 %v3351
        %v3353 = vpop.f32.mrb[0].mxu0
        %v3354 = vadd.f32 %v3258, %v3353
        %v3355 = vpop.f32.mrb[0].mxu0
        %3356 = vmatprep.mubr.f32.mxu0 0.0
        %v3357 = vand.u32 %v2898, 4294901760
        %v3358 = vsub.f32 %v2898, %v3357
        %v3359 = vand.u32 %v3358, 4294901760
        %3360 = vmatmul.mubr.f32.gmra.mrb[0].mxu0 %v3359
        %v3361 = vpop.f32.mrb[0].mxu0
        %v3362 = vadd.f32 %v3265, %v3361
        %v3363 = vpop.f32.mrb[0].mxu0
        %3364 = vdwg.mxu0
        %3365 = vmatprep.subr.mxu0 0.0
        %v3366 = vand.u32 %v1445, 4294901760
        %v3367 = vsub.f32 %v1445, %v3366
        %v3368 = vand.u32 %v3367, 4294901760
        %3369 = vmatpush1.msra.mxu0 %v3368
        %3370 = vmatprep.subr.mxu0 0.0
        %v3371 = vand.u32 %v1446, 4294901760
        %v3372 = vsub.f32 %v1446, %v3371
        %v3373 = vand.u32 %v3372, 4294901760
        %3374 = vmatpush1.msra.mxu0 %v3373
        %3375 = vmatprep.subr.mxu0 0.0
        %v3376 = vand.u32 %v1447, 4294901760
        %v3377 = vsub.f32 %v1447, %v3376
        %v3378 = vand.u32 %v3377, 4294901760
        %3379 = vmatpush1.msra.mxu0 %v3378
        %3380 = vmatprep.subr.mxu0 0.0
        %v3381 = vand.u32 %v1448, 4294901760
        %v3382 = vsub.f32 %v1448, %v3381
        %v3383 = vand.u32 %v3382, 4294901760
        %3384 = vmatpush1.msra.mxu0 %v3383
        %3385 = vmatprep.subr.mxu0 0.0
        %v3386 = vand.u32 %v1449, 4294901760
        %v3387 = vsub.f32 %v1449, %v3386
        %v3388 = vand.u32 %v3387, 4294901760
        %3389 = vmatpush1.msra.mxu0 %v3388
        %3390 = vmatprep.subr.mxu0 0.0
        %v3391 = vand.u32 %v1450, 4294901760
        %v3392 = vsub.f32 %v1450, %v3391
        %v3393 = vand.u32 %v3392, 4294901760
        %3394 = vmatpush1.msra.mxu0 %v3393
        %3395 = vmatprep.subr.mxu0 0.0
        %v3396 = vand.u32 %v1451, 4294901760
        %v3397 = vsub.f32 %v1451, %v3396
        %v3398 = vand.u32 %v3397, 4294901760
        %3399 = vmatpush1.msra.mxu0 %v3398
        %3400 = vmatprep.subr.mxu0 0.0
        %v3401 = vand.u32 %v1452, 4294901760
        %v3402 = vsub.f32 %v1452, %v3401
        %v3403 = vand.u32 %v3402, 4294901760
        %3404 = vmatpush1.msra.mxu0 %v3403
        %3405 = vmatprep.subr.mxu0 0.0
        %v3406 = vand.u32 %v1453, 4294901760
        %v3407 = vsub.f32 %v1453, %v3406
        %v3408 = vand.u32 %v3407, 4294901760
        %3409 = vmatpush1.msra.mxu0 %v3408
        %3410 = vmatprep.subr.mxu0 0.0
        %v3411 = vand.u32 %v1454, 4294901760
        %v3412 = vsub.f32 %v1454, %v3411
        %v3413 = vand.u32 %v3412, 4294901760
        %3414 = vmatpush1.msra.mxu0 %v3413
        %3415 = vmatprep.subr.mxu0 0.0
        %v3416 = vand.u32 %v1455, 4294901760
        %v3417 = vsub.f32 %v1455, %v3416
        %v3418 = vand.u32 %v3417, 4294901760
        %3419 = vmatpush1.msra.mxu0 %v3418
        %3420 = vmatprep.subr.mxu0 0.0
        %v3421 = vand.u32 %v1456, 4294901760
        %v3422 = vsub.f32 %v1456, %v3421
        %v3423 = vand.u32 %v3422, 4294901760
        %3424 = vmatpush1.msra.mxu0 %v3423
        %3425 = vmatprep.subr.mxu0 0.0
        %v3426 = vand.u32 %v1457, 4294901760
        %v3427 = vsub.f32 %v1457, %v3426
        %v3428 = vand.u32 %v3427, 4294901760
        %3429 = vmatpush1.msra.mxu0 %v3428
        %3430 = vmatprep.subr.mxu0 0.0
        %v3431 = vand.u32 %v1458, 4294901760
        %v3432 = vsub.f32 %v1458, %v3431
        %v3433 = vand.u32 %v3432, 4294901760
        %3434 = vmatpush1.msra.mxu0 %v3433
        %3435 = vmatprep.subr.mxu0 0.0
        %v3436 = vand.u32 %v1459, 4294901760
        %v3437 = vsub.f32 %v1459, %v3436
        %v3438 = vand.u32 %v3437, 4294901760
        %3439 = vmatpush1.msra.mxu0 %v3438
        %3440 = vmatprep.subr.mxu0 0.0
        %v3441 = vand.u32 %v1460, 4294901760
        %v3442 = vsub.f32 %v1460, %v3441
        %v3443 = vand.u32 %v3442, 4294901760
        %3444 = vmatpush1.msra.mxu0 %v3443
        %3445 = vmatprep.subr.mxu0 0.0
        %3446 = vmatpush1.msra.mxu0 0.0
        %3447 = vmatprep.subr.mxu0 0.0
        %3448 = vmatpush1.msra.mxu0 0.0
        %3449 = vmatprep.subr.mxu0 0.0
        %3450 = vmatpush1.msra.mxu0 0.0
        %3451 = vmatprep.subr.mxu0 0.0
        %3452 = vmatpush1.msra.mxu0 0.0
        %3453 = vmatprep.subr.mxu0 0.0
        %3454 = vmatpush1.msra.mxu0 0.0
        %3455 = vmatprep.subr.mxu0 0.0
        %3456 = vmatpush1.msra.mxu0 0.0
        %3457 = vmatprep.subr.mxu0 0.0
        %3458 = vmatpush1.msra.mxu0 0.0
        %3459 = vmatprep.subr.mxu0 0.0
        %3460 = vmatpush1.msra.mxu0 0.0
        %3461 = vmatprep.subr.mxu0 0.0
        %3462 = vmatpush1.msra.mxu0 0.0
        %3463 = vmatprep.subr.mxu0 0.0
        %3464 = vmatpush1.msra.mxu0 0.0
        %3465 = vmatprep.subr.mxu0 0.0
        %3466 = vmatpush1.msra.mxu0 0.0
        %3467 = vmatprep.subr.mxu0 0.0
        %3468 = vmatpush1.msra.mxu0 0.0
        %3469 = vmatprep.subr.mxu0 0.0
        %3470 = vmatpush1.msra.mxu0 0.0
        %3471 = vmatprep.subr.mxu0 0.0
        %3472 = vmatpush1.msra.mxu0 0.0
        %3473 = vmatprep.subr.mxu0 0.0
        %3474 = vmatpush1.msra.mxu0 0.0
        %3475 = vmatprep.subr.mxu0 0.0
        %3476 = vmatpush1.msra.mxu0 0.0
        %3477 = vmatprep.mubr.f32.mxu0 0.0
        %v3478 = vand.u32 %v2897, 4294901760
        %3479 = vmatmul.mubr.f32.gmra.mrb[0].mxu0 %v3478
        %v3480 = vpop.f32.mrb[0].mxu0
        %v3481 = vadd.f32 %v3354, %v3480
        %v3482 = vpop.f32.mrb[0].mxu0
        %3483 = vmatprep.mubr.f32.mxu0 0.0
        %v3484 = vand.u32 %v2898, 4294901760
        %3485 = vmatmul.mubr.f32.gmra.mrb[0].mxu0 %v3484
        %v3486 = vpop.f32.mrb[0].mxu0
        %v3487 = vadd.f32 %v3362, %v3486
        %v3488 = vpop.f32.mrb[0].mxu0
        %3489 = vdwg.mxu0
        %3490 = vmatprep.subr.mxu0 0.0
        %v3491 = vand.u32 %v1445, 4294901760
        %3492 = vmatpush1.msra.mxu0 %v3491
        %3493 = vmatprep.subr.mxu0 0.0
        %v3494 = vand.u32 %v1446, 4294901760
        %3495 = vmatpush1.msra.mxu0 %v3494
        %3496 = vmatprep.subr.mxu0 0.0
        %v3497 = vand.u32 %v1447, 4294901760
        %3498 = vmatpush1.msra.mxu0 %v3497
        %3499 = vmatprep.subr.mxu0 0.0
        %v3500 = vand.u32 %v1448, 4294901760
        %3501 = vmatpush1.msra.mxu0 %v3500
        %3502 = vmatprep.subr.mxu0 0.0
        %v3503 = vand.u32 %v1449, 4294901760
        %3504 = vmatpush1.msra.mxu0 %v3503
        %3505 = vmatprep.subr.mxu0 0.0
        %v3506 = vand.u32 %v1450, 4294901760
        %3507 = vmatpush1.msra.mxu0 %v3506
        %3508 = vmatprep.subr.mxu0 0.0
        %v3509 = vand.u32 %v1451, 4294901760
        %3510 = vmatpush1.msra.mxu0 %v3509
        %3511 = vmatprep.subr.mxu0 0.0
        %v3512 = vand.u32 %v1452, 4294901760
        %3513 = vmatpush1.msra.mxu0 %v3512
        %3514 = vmatprep.subr.mxu0 0.0
        %v3515 = vand.u32 %v1453, 4294901760
        %3516 = vmatpush1.msra.mxu0 %v3515
        %3517 = vmatprep.subr.mxu0 0.0
        %v3518 = vand.u32 %v1454, 4294901760
        %3519 = vmatpush1.msra.mxu0 %v3518
        %3520 = vmatprep.subr.mxu0 0.0
        %v3521 = vand.u32 %v1455, 4294901760
        %3522 = vmatpush1.msra.mxu0 %v3521
        %3523 = vmatprep.subr.mxu0 0.0
        %v3524 = vand.u32 %v1456, 4294901760
        %3525 = vmatpush1.msra.mxu0 %v3524
        %3526 = vmatprep.subr.mxu0 0.0
        %v3527 = vand.u32 %v1457, 4294901760
        %3528 = vmatpush1.msra.mxu0 %v3527
        %3529 = vmatprep.subr.mxu0 0.0
        %v3530 = vand.u32 %v1458, 4294901760
        %3531 = vmatpush1.msra.mxu0 %v3530
        %3532 = vmatprep.subr.mxu0 0.0
        %v3533 = vand.u32 %v1459, 4294901760
        %3534 = vmatpush1.msra.mxu0 %v3533
        %3535 = vmatprep.subr.mxu0 0.0
        %v3536 = vand.u32 %v1460, 4294901760
        %3537 = vmatpush1.msra.mxu0 %v3536
        %3538 = vmatprep.subr.mxu0 0.0
        %3539 = vmatpush1.msra.mxu0 0.0
        %3540 = vmatprep.subr.mxu0 0.0
        %3541 = vmatpush1.msra.mxu0 0.0
        %3542 = vmatprep.subr.mxu0 0.0
        %3543 = vmatpush1.msra.mxu0 0.0
        %3544 = vmatprep.subr.mxu0 0.0
        %3545 = vmatpush1.msra.mxu0 0.0
        %3546 = vmatprep.subr.mxu0 0.0
        %3547 = vmatpush1.msra.mxu0 0.0
        %3548 = vmatprep.subr.mxu0 0.0
        %3549 = vmatpush1.msra.mxu0 0.0
        %3550 = vmatprep.subr.mxu0 0.0
        %3551 = vmatpush1.msra.mxu0 0.0
        %3552 = vmatprep.subr.mxu0 0.0
        %3553 = vmatpush1.msra.mxu0 0.0
        %3554 = vmatprep.subr.mxu0 0.0
        %3555 = vmatpush1.msra.mxu0 0.0
        %3556 = vmatprep.subr.mxu0 0.0
        %3557 = vmatpush1.msra.mxu0 0.0
        %3558 = vmatprep.subr.mxu0 0.0
        %3559 = vmatpush1.msra.mxu0 0.0
        %3560 = vmatprep.subr.mxu0 0.0
        %3561 = vmatpush1.msra.mxu0 0.0
        %3562 = vmatprep.subr.mxu0 0.0
        %3563 = vmatpush1.msra.mxu0 0.0
        %3564 = vmatprep.subr.mxu0 0.0
        %3565 = vmatpush1.msra.mxu0 0.0
        %3566 = vmatprep.subr.mxu0 0.0
        %3567 = vmatpush1.msra.mxu0 0.0
        %3568 = vmatprep.subr.mxu0 0.0
        %3569 = vmatpush1.msra.mxu0 0.0
        %3570 = vmatprep.mubr.f32.mxu0 0.0
        %v3571 = vand.u32 %v2897, 4294901760
        %3572 = vmatmul.mubr.f32.gmra.mrb[0].mxu0 %v3571
        %v3573 = vpop.f32.mrb[0].mxu0
        %v3574 = vadd.f32 %v3481, %v3573
        %v3575 = vpop.f32.mrb[0].mxu0
        %3576 = vmatprep.mubr.f32.mxu0 0.0
        %v3577 = vand.u32 %v2898, 4294901760
        %3578 = vmatmul.mubr.f32.gmra.mrb[0].mxu0 %v3577
        %v3579 = vpop.f32.mrb[0].mxu0
        %v3580 = vadd.f32 %v3487, %v3579
        %v3581 = vpop.f32.mrb[0].mxu0
        %3582 = vdwg.mxu0
        %v3583 = vadd.f32 %v2895, %v3574
        %v3584 = vadd.f32 %v2896, %v3580
        %v3585 = vld [vmem:[#allocation4] sm:$0xff]
        %v3586 = vld [vmem:[#allocation4 + $0x8] sm:$0xff]
        %v3587 = vmul.f32 %v2159, %v3585
        %v3588 = vmul.f32 %v2159, %v3586
        %v3589 = vmul.f32 %v2167, %v3583
        %v3590 = vmul.f32 %v2167, %v3584
        %v3591 = vadd.f32 %v3587, %v3589
        %v3592 = vadd.f32 %v3588, %v3590
        %v3593 = vtanh.pop %v3591
        %v3594 = vtanh.pop %v3592
        %3595 = vst [vmem:[#allocation3] sm:$0xff] %v3593
        %3596 = vst [vmem:[#allocation3 + $0x8] sm:$0xff] %v3594
        %3597 = vst [vmem:[#allocation4] sm:$0xff] %v3591
        %3598 = vst [vmem:[#allocation4 + $0x8] sm:$0xff] %v3592
        %s3599 = scalar_lea.vmem %s406, 32 [#allocation14]
        %3600 = vst [vmem:[%s3599] sm:$0xff] %v3593
        %3601 = vst [vmem:[%s3599 + $0x8] sm:$0xff] %v3594
        %s3602 = scalar_lea.vmem %s413, 32 [#allocation15]
        %3603 = vst [vmem:[%s3602] sm:$0xff] %v3591
        %3604 = vst [vmem:[%s3602 + $0x8] sm:$0xff] %v3592
        %s3605 = scalar_lea.vmem [#allocation2], 48
        %v3606 = vld [vmem:[%s3605] sm:$0xff]
        %v3607 = vld [vmem:[%s3605 + $0x8] sm:$0xff]
        %v3608 = vld [vmem:[#allocation3] sm:$0xff]
        %v3609 = vld [vmem:[#allocation3 + $0x8] sm:$0xff]
        %3610 = vmatprep.subr.mxu0 0.0
        %v3611 = vand.u32 %v1445, 4294901760
        %3612 = vmatpush1.msra.mxu0 %v3611
        %3613 = vmatprep.subr.mxu0 0.0
        %v3614 = vand.u32 %v1446, 4294901760
        %3615 = vmatpush1.msra.mxu0 %v3614
        %3616 = vmatprep.subr.mxu0 0.0
        %v3617 = vand.u32 %v1447, 4294901760
        %3618 = vmatpush1.msra.mxu0 %v3617
        %3619 = vmatprep.subr.mxu0 0.0
        %v3620 = vand.u32 %v1448, 4294901760
        %3621 = vmatpush1.msra.mxu0 %v3620
        %3622 = vmatprep.subr.mxu0 0.0
        %v3623 = vand.u32 %v1449, 4294901760
        %3624 = vmatpush1.msra.mxu0 %v3623
        %3625 = vmatprep.subr.mxu0 0.0
        %v3626 = vand.u32 %v1450, 4294901760
        %3627 = vmatpush1.msra.mxu0 %v3626
        %3628 = vmatprep.subr.mxu0 0.0
        %v3629 = vand.u32 %v1451, 4294901760
        %3630 = vmatpush1.msra.mxu0 %v3629
        %3631 = vmatprep.subr.mxu0 0.0
        %v3632 = vand.u32 %v1452, 4294901760
        %3633 = vmatpush1.msra.mxu0 %v3632
        %3634 = vmatprep.subr.mxu0 0.0
        %v3635 = vand.u32 %v1453, 4294901760
        %3636 = vmatpush1.msra.mxu0 %v3635
        %3637 = vmatprep.subr.mxu0 0.0
        %v3638 = vand.u32 %v1454, 4294901760
        %3639 = vmatpush1.msra.mxu0 %v3638
        %3640 = vmatprep.subr.mxu0 0.0
        %v3641 = vand.u32 %v1455, 4294901760
        %3642 = vmatpush1.msra.mxu0 %v3641
        %3643 = vmatprep.subr.mxu0 0.0
        %v3644 = vand.u32 %v1456, 4294901760
        %3645 = vmatpush1.msra.mxu0 %v3644
        %3646 = vmatprep.subr.mxu0 0.0
        %v3647 = vand.u32 %v1457, 4294901760
        %3648 = vmatpush1.msra.mxu0 %v3647
        %3649 = vmatprep.subr.mxu0 0.0
        %v3650 = vand.u32 %v1458, 4294901760
        %3651 = vmatpush1.msra.mxu0 %v3650
        %3652 = vmatprep.subr.mxu0 0.0
        %v3653 = vand.u32 %v1459, 4294901760
        %3654 = vmatpush1.msra.mxu0 %v3653
        %3655 = vmatprep.subr.mxu0 0.0
        %v3656 = vand.u32 %v1460, 4294901760
        %3657 = vmatpush1.msra.mxu0 %v3656
        %3658 = vmatprep.subr.mxu0 0.0
        %3659 = vmatpush1.msra.mxu0 0.0
        %3660 = vmatprep.subr.mxu0 0.0
        %3661 = vmatpush1.msra.mxu0 0.0
        %3662 = vmatprep.subr.mxu0 0.0
        %3663 = vmatpush1.msra.mxu0 0.0
        %3664 = vmatprep.subr.mxu0 0.0
        %3665 = vmatpush1.msra.mxu0 0.0
        %3666 = vmatprep.subr.mxu0 0.0
        %3667 = vmatpush1.msra.mxu0 0.0
        %3668 = vmatprep.subr.mxu0 0.0
        %3669 = vmatpush1.msra.mxu0 0.0
        %3670 = vmatprep.subr.mxu0 0.0
        %3671 = vmatpush1.msra.mxu0 0.0
        %3672 = vmatprep.subr.mxu0 0.0
        %3673 = vmatpush1.msra.mxu0 0.0
        %3674 = vmatprep.subr.mxu0 0.0
        %3675 = vmatpush1.msra.mxu0 0.0
        %3676 = vmatprep.subr.mxu0 0.0
        %3677 = vmatpush1.msra.mxu0 0.0
        %3678 = vmatprep.subr.mxu0 0.0
        %3679 = vmatpush1.msra.mxu0 0.0
        %3680 = vmatprep.subr.mxu0 0.0
        %3681 = vmatpush1.msra.mxu0 0.0
        %3682 = vmatprep.subr.mxu0 0.0
        %3683 = vmatpush1.msra.mxu0 0.0
        %3684 = vmatprep.subr.mxu0 0.0
        %3685 = vmatpush1.msra.mxu0 0.0
        %3686 = vmatprep.subr.mxu0 0.0
        %3687 = vmatpush1.msra.mxu0 0.0
        %3688 = vmatprep.subr.mxu0 0.0
        %3689 = vmatpush1.msra.mxu0 0.0
        %3690 = vmatprep.mubr.f32.mxu0 0.0
        %v3691 = vand.u32 %v3608, 4294901760
        %v3692 = vsub.f32 %v3608, %v3691
        %v3693 = vand.u32 %v3692, 4294901760
        %v3694 = vsub.f32 %v3692, %v3693
        %v3695 = vand.u32 %v3694, 4294901760
        %3696 = vmatmul.mubr.f32.gmra.mrb[0].mxu0 %v3695
        %v3697 = vpop.f32.mrb[0].mxu0
        %v3698 = vadd.f32 0.0, %v3697
        %v3699 = vpop.f32.mrb[0].mxu0
        %3700 = vmatprep.mubr.f32.mxu0 0.0
        %v3701 = vand.u32 %v3609, 4294901760
        %v3702 = vsub.f32 %v3609, %v3701
        %v3703 = vand.u32 %v3702, 4294901760
        %v3704 = vsub.f32 %v3702, %v3703
        %v3705 = vand.u32 %v3704, 4294901760
        %3706 = vmatmul.mubr.f32.gmra.mrb[0].mxu0 %v3705
        %v3707 = vpop.f32.mrb[0].mxu0
        %v3708 = vadd.f32 0.0, %v3707
        %v3709 = vpop.f32.mrb[0].mxu0
        %3710 = vdwg.mxu0
        %3711 = vmatprep.subr.mxu0 0.0
        %v3712 = vand.u32 %v1445, 4294901760
        %v3713 = vsub.f32 %v1445, %v3712
        %v3714 = vand.u32 %v3713, 4294901760
        %v3715 = vsub.f32 %v3713, %v3714
        %v3716 = vand.u32 %v3715, 4294901760
        %3717 = vmatpush1.msra.mxu0 %v3716
        %3718 = vmatprep.subr.mxu0 0.0
        %v3719 = vand.u32 %v1446, 4294901760
        %v3720 = vsub.f32 %v1446, %v3719
        %v3721 = vand.u32 %v3720, 4294901760
        %v3722 = vsub.f32 %v3720, %v3721
        %v3723 = vand.u32 %v3722, 4294901760
        %3724 = vmatpush1.msra.mxu0 %v3723
        %3725 = vmatprep.subr.mxu0 0.0
        %v3726 = vand.u32 %v1447, 4294901760
        %v3727 = vsub.f32 %v1447, %v3726
        %v3728 = vand.u32 %v3727, 4294901760
        %v3729 = vsub.f32 %v3727, %v3728
        %v3730 = vand.u32 %v3729, 4294901760
        %3731 = vmatpush1.msra.mxu0 %v3730
        %3732 = vmatprep.subr.mxu0 0.0
        %v3733 = vand.u32 %v1448, 4294901760
        %v3734 = vsub.f32 %v1448, %v3733
        %v3735 = vand.u32 %v3734, 4294901760
        %v3736 = vsub.f32 %v3734, %v3735
        %v3737 = vand.u32 %v3736, 4294901760
        %3738 = vmatpush1.msra.mxu0 %v3737
        %3739 = vmatprep.subr.mxu0 0.0
        %v3740 = vand.u32 %v1449, 4294901760
        %v3741 = vsub.f32 %v1449, %v3740
        %v3742 = vand.u32 %v3741, 4294901760
        %v3743 = vsub.f32 %v3741, %v3742
        %v3744 = vand.u32 %v3743, 4294901760
        %3745 = vmatpush1.msra.mxu0 %v3744
        %3746 = vmatprep.subr.mxu0 0.0
        %v3747 = vand.u32 %v1450, 4294901760
        %v3748 = vsub.f32 %v1450, %v3747
        %v3749 = vand.u32 %v3748, 4294901760
        %v3750 = vsub.f32 %v3748, %v3749
        %v3751 = vand.u32 %v3750, 4294901760
        %3752 = vmatpush1.msra.mxu0 %v3751
        %3753 = vmatprep.subr.mxu0 0.0
        %v3754 = vand.u32 %v1451, 4294901760
        %v3755 = vsub.f32 %v1451, %v3754
        %v3756 = vand.u32 %v3755, 4294901760
        %v3757 = vsub.f32 %v3755, %v3756
        %v3758 = vand.u32 %v3757, 4294901760
        %3759 = vmatpush1.msra.mxu0 %v3758
        %3760 = vmatprep.subr.mxu0 0.0
        %v3761 = vand.u32 %v1452, 4294901760
        %v3762 = vsub.f32 %v1452, %v3761
        %v3763 = vand.u32 %v3762, 4294901760
        %v3764 = vsub.f32 %v3762, %v3763
        %v3765 = vand.u32 %v3764, 4294901760
        %3766 = vmatpush1.msra.mxu0 %v3765
        %3767 = vmatprep.subr.mxu0 0.0
        %v3768 = vand.u32 %v1453, 4294901760
        %v3769 = vsub.f32 %v1453, %v3768
        %v3770 = vand.u32 %v3769, 4294901760
        %v3771 = vsub.f32 %v3769, %v3770
        %v3772 = vand.u32 %v3771, 4294901760
        %3773 = vmatpush1.msra.mxu0 %v3772
        %3774 = vmatprep.subr.mxu0 0.0
        %v3775 = vand.u32 %v1454, 4294901760
        %v3776 = vsub.f32 %v1454, %v3775
        %v3777 = vand.u32 %v3776, 4294901760
        %v3778 = vsub.f32 %v3776, %v3777
        %v3779 = vand.u32 %v3778, 4294901760
        %3780 = vmatpush1.msra.mxu0 %v3779
        %3781 = vmatprep.subr.mxu0 0.0
        %v3782 = vand.u32 %v1455, 4294901760
        %v3783 = vsub.f32 %v1455, %v3782
        %v3784 = vand.u32 %v3783, 4294901760
        %v3785 = vsub.f32 %v3783, %v3784
        %v3786 = vand.u32 %v3785, 4294901760
        %3787 = vmatpush1.msra.mxu0 %v3786
        %3788 = vmatprep.subr.mxu0 0.0
        %v3789 = vand.u32 %v1456, 4294901760
        %v3790 = vsub.f32 %v1456, %v3789
        %v3791 = vand.u32 %v3790, 4294901760
        %v3792 = vsub.f32 %v3790, %v3791
        %v3793 = vand.u32 %v3792, 4294901760
        %3794 = vmatpush1.msra.mxu0 %v3793
        %3795 = vmatprep.subr.mxu0 0.0
        %v3796 = vand.u32 %v1457, 4294901760
        %v3797 = vsub.f32 %v1457, %v3796
        %v3798 = vand.u32 %v3797, 4294901760
        %v3799 = vsub.f32 %v3797, %v3798
        %v3800 = vand.u32 %v3799, 4294901760
        %3801 = vmatpush1.msra.mxu0 %v3800
        %3802 = vmatprep.subr.mxu0 0.0
        %v3803 = vand.u32 %v1458, 4294901760
        %v3804 = vsub.f32 %v1458, %v3803
        %v3805 = vand.u32 %v3804, 4294901760
        %v3806 = vsub.f32 %v3804, %v3805
        %v3807 = vand.u32 %v3806, 4294901760
        %3808 = vmatpush1.msra.mxu0 %v3807
        %3809 = vmatprep.subr.mxu0 0.0
        %v3810 = vand.u32 %v1459, 4294901760
        %v3811 = vsub.f32 %v1459, %v3810
        %v3812 = vand.u32 %v3811, 4294901760
        %v3813 = vsub.f32 %v3811, %v3812
        %v3814 = vand.u32 %v3813, 4294901760
        %3815 = vmatpush1.msra.mxu0 %v3814
        %3816 = vmatprep.subr.mxu0 0.0
        %v3817 = vand.u32 %v1460, 4294901760
        %v3818 = vsub.f32 %v1460, %v3817
        %v3819 = vand.u32 %v3818, 4294901760
        %v3820 = vsub.f32 %v3818, %v3819
        %v3821 = vand.u32 %v3820, 4294901760
        %3822 = vmatpush1.msra.mxu0 %v3821
        %3823 = vmatprep.subr.mxu0 0.0
        %3824 = vmatpush1.msra.mxu0 0.0
        %3825 = vmatprep.subr.mxu0 0.0
        %3826 = vmatpush1.msra.mxu0 0.0
        %3827 = vmatprep.subr.mxu0 0.0
        %3828 = vmatpush1.msra.mxu0 0.0
        %3829 = vmatprep.subr.mxu0 0.0
        %3830 = vmatpush1.msra.mxu0 0.0
        %3831 = vmatprep.subr.mxu0 0.0
        %3832 = vmatpush1.msra.mxu0 0.0
        %3833 = vmatprep.subr.mxu0 0.0
        %3834 = vmatpush1.msra.mxu0 0.0
        %3835 = vmatprep.subr.mxu0 0.0
        %3836 = vmatpush1.msra.mxu0 0.0
        %3837 = vmatprep.subr.mxu0 0.0
        %3838 = vmatpush1.msra.mxu0 0.0
        %3839 = vmatprep.subr.mxu0 0.0
        %3840 = vmatpush1.msra.mxu0 0.0
        %3841 = vmatprep.subr.mxu0 0.0
        %3842 = vmatpush1.msra.mxu0 0.0
        %3843 = vmatprep.subr.mxu0 0.0
        %3844 = vmatpush1.msra.mxu0 0.0
        %3845 = vmatprep.subr.mxu0 0.0
        %3846 = vmatpush1.msra.mxu0 0.0
        %3847 = vmatprep.subr.mxu0 0.0
        %3848 = vmatpush1.msra.mxu0 0.0
        %3849 = vmatprep.subr.mxu0 0.0
        %3850 = vmatpush1.msra.mxu0 0.0
        %3851 = vmatprep.subr.mxu0 0.0
        %3852 = vmatpush1.msra.mxu0 0.0
        %3853 = vmatprep.subr.mxu0 0.0
        %3854 = vmatpush1.msra.mxu0 0.0
        %3855 = vmatprep.mubr.f32.mxu0 0.0
        %v3856 = vand.u32 %v3608, 4294901760
        %3857 = vmatmul.mubr.f32.gmra.mrb[0].mxu0 %v3856
        %v3858 = vpop.f32.mrb[0].mxu0
        %v3859 = vadd.f32 %v3698, %v3858
        %v3860 = vpop.f32.mrb[0].mxu0
        %3861 = vmatprep.mubr.f32.mxu0 0.0
        %v3862 = vand.u32 %v3609, 4294901760
        %3863 = vmatmul.mubr.f32.gmra.mrb[0].mxu0 %v3862
        %v3864 = vpop.f32.mrb[0].mxu0
        %v3865 = vadd.f32 %v3708, %v3864
        %v3866 = vpop.f32.mrb[0].mxu0
        %3867 = vdwg.mxu0
        %3868 = vmatprep.subr.mxu0 0.0
        %v3869 = vand.u32 %v1445, 4294901760
        %v3870 = vsub.f32 %v1445, %v3869
        %3871 = vmatpush1.msra.mxu0 %v3870
        %3872 = vmatprep.subr.mxu0 0.0
        %v3873 = vand.u32 %v1446, 4294901760
        %v3874 = vsub.f32 %v1446, %v3873
        %3875 = vmatpush1.msra.mxu0 %v3874
        %3876 = vmatprep.subr.mxu0 0.0
        %v3877 = vand.u32 %v1447, 4294901760
        %v3878 = vsub.f32 %v1447, %v3877
        %3879 = vmatpush1.msra.mxu0 %v3878
        %3880 = vmatprep.subr.mxu0 0.0
        %v3881 = vand.u32 %v1448, 4294901760
        %v3882 = vsub.f32 %v1448, %v3881
        %3883 = vmatpush1.msra.mxu0 %v3882
        %3884 = vmatprep.subr.mxu0 0.0
        %v3885 = vand.u32 %v1449, 4294901760
        %v3886 = vsub.f32 %v1449, %v3885
        %3887 = vmatpush1.msra.mxu0 %v3886
        %3888 = vmatprep.subr.mxu0 0.0
        %v3889 = vand.u32 %v1450, 4294901760
        %v3890 = vsub.f32 %v1450, %v3889
        %3891 = vmatpush1.msra.mxu0 %v3890
        %3892 = vmatprep.subr.mxu0 0.0
        %v3893 = vand.u32 %v1451, 4294901760
        %v3894 = vsub.f32 %v1451, %v3893
        %3895 = vmatpush1.msra.mxu0 %v3894
        %3896 = vmatprep.subr.mxu0 0.0
        %v3897 = vand.u32 %v1452, 4294901760
        %v3898 = vsub.f32 %v1452, %v3897
        %3899 = vmatpush1.msra.mxu0 %v3898
        %3900 = vmatprep.subr.mxu0 0.0
        %v3901 = vand.u32 %v1453, 4294901760
        %v3902 = vsub.f32 %v1453, %v3901
        %3903 = vmatpush1.msra.mxu0 %v3902
        %3904 = vmatprep.subr.mxu0 0.0
        %v3905 = vand.u32 %v1454, 4294901760
        %v3906 = vsub.f32 %v1454, %v3905
        %3907 = vmatpush1.msra.mxu0 %v3906
        %3908 = vmatprep.subr.mxu0 0.0
        %v3909 = vand.u32 %v1455, 4294901760
        %v3910 = vsub.f32 %v1455, %v3909
        %3911 = vmatpush1.msra.mxu0 %v3910
        %3912 = vmatprep.subr.mxu0 0.0
        %v3913 = vand.u32 %v1456, 4294901760
        %v3914 = vsub.f32 %v1456, %v3913
        %3915 = vmatpush1.msra.mxu0 %v3914
        %3916 = vmatprep.subr.mxu0 0.0
        %v3917 = vand.u32 %v1457, 4294901760
        %v3918 = vsub.f32 %v1457, %v3917
        %3919 = vmatpush1.msra.mxu0 %v3918
        %3920 = vmatprep.subr.mxu0 0.0
        %v3921 = vand.u32 %v1458, 4294901760
        %v3922 = vsub.f32 %v1458, %v3921
        %3923 = vmatpush1.msra.mxu0 %v3922
        %3924 = vmatprep.subr.mxu0 0.0
        %v3925 = vand.u32 %v1459, 4294901760
        %v3926 = vsub.f32 %v1459, %v3925
        %3927 = vmatpush1.msra.mxu0 %v3926
        %3928 = vmatprep.subr.mxu0 0.0
        %v3929 = vand.u32 %v1460, 4294901760
        %v3930 = vsub.f32 %v1460, %v3929
        %3931 = vmatpush1.msra.mxu0 %v3930
        %3932 = vmatprep.subr.mxu0 0.0
        %3933 = vmatpush1.msra.mxu0 0.0
        %3934 = vmatprep.subr.mxu0 0.0
        %3935 = vmatpush1.msra.mxu0 0.0
        %3936 = vmatprep.subr.mxu0 0.0
        %3937 = vmatpush1.msra.mxu0 0.0
        %3938 = vmatprep.subr.mxu0 0.0
        %3939 = vmatpush1.msra.mxu0 0.0
        %3940 = vmatprep.subr.mxu0 0.0
        %3941 = vmatpush1.msra.mxu0 0.0
        %3942 = vmatprep.subr.mxu0 0.0
        %3943 = vmatpush1.msra.mxu0 0.0
        %3944 = vmatprep.subr.mxu0 0.0
        %3945 = vmatpush1.msra.mxu0 0.0
        %3946 = vmatprep.subr.mxu0 0.0
        %3947 = vmatpush1.msra.mxu0 0.0
        %3948 = vmatprep.subr.mxu0 0.0
        %3949 = vmatpush1.msra.mxu0 0.0
        %3950 = vmatprep.subr.mxu0 0.0
        %3951 = vmatpush1.msra.mxu0 0.0
        %3952 = vmatprep.subr.mxu0 0.0
        %3953 = vmatpush1.msra.mxu0 0.0
        %3954 = vmatprep.subr.mxu0 0.0
        %3955 = vmatpush1.msra.mxu0 0.0
        %3956 = vmatprep.subr.mxu0 0.0
        %3957 = vmatpush1.msra.mxu0 0.0
        %3958 = vmatprep.subr.mxu0 0.0
        %3959 = vmatpush1.msra.mxu0 0.0
        %3960 = vmatprep.subr.mxu0 0.0
        %3961 = vmatpush1.msra.mxu0 0.0
        %3962 = vmatprep.subr.mxu0 0.0
        %3963 = vmatpush1.msra.mxu0 0.0
        %3964 = vmatprep.mubr.f32.mxu0 0.0
        %v3965 = vand.u32 %v3608, 4294901760
        %v3966 = vsub.f32 %v3608, %v3965
        %3967 = vmatmul.mubr.f32.gmra.mrb[0].mxu0 %v3966
        %v3968 = vpop.f32.mrb[0].mxu0
        %v3969 = vadd.f32 %v3859, %v3968
        %v3970 = vpop.f32.mrb[0].mxu0
        %3971 = vmatprep.mubr.f32.mxu0 0.0
        %v3972 = vand.u32 %v3609, 4294901760
        %v3973 = vsub.f32 %v3609, %v3972
        %3974 = vmatmul.mubr.f32.gmra.mrb[0].mxu0 %v3973
        %v3975 = vpop.f32.mrb[0].mxu0
        %v3976 = vadd.f32 %v3865, %v3975
        %v3977 = vpop.f32.mrb[0].mxu0
        %3978 = vdwg.mxu0
        %3979 = vmatprep.subr.mxu0 0.0
        %v3980 = vand.u32 %v1445, 4294901760
        %3981 = vmatpush1.msra.mxu0 %v3980
        %3982 = vmatprep.subr.mxu0 0.0
        %v3983 = vand.u32 %v1446, 4294901760
        %3984 = vmatpush1.msra.mxu0 %v3983
        %3985 = vmatprep.subr.mxu0 0.0
        %v3986 = vand.u32 %v1447, 4294901760
        %3987 = vmatpush1.msra.mxu0 %v3986
        %3988 = vmatprep.subr.mxu0 0.0
        %v3989 = vand.u32 %v1448, 4294901760
        %3990 = vmatpush1.msra.mxu0 %v3989
        %3991 = vmatprep.subr.mxu0 0.0
        %v3992 = vand.u32 %v1449, 4294901760
        %3993 = vmatpush1.msra.mxu0 %v3992
        %3994 = vmatprep.subr.mxu0 0.0
        %v3995 = vand.u32 %v1450, 4294901760
        %3996 = vmatpush1.msra.mxu0 %v3995
        %3997 = vmatprep.subr.mxu0 0.0
        %v3998 = vand.u32 %v1451, 4294901760
        %3999 = vmatpush1.msra.mxu0 %v3998
        %4000 = vmatprep.subr.mxu0 0.0
        %v4001 = vand.u32 %v1452, 4294901760
        %4002 = vmatpush1.msra.mxu0 %v4001
        %4003 = vmatprep.subr.mxu0 0.0
        %v4004 = vand.u32 %v1453, 4294901760
        %4005 = vmatpush1.msra.mxu0 %v4004
        %4006 = vmatprep.subr.mxu0 0.0
        %v4007 = vand.u32 %v1454, 4294901760
        %4008 = vmatpush1.msra.mxu0 %v4007
        %4009 = vmatprep.subr.mxu0 0.0
        %v4010 = vand.u32 %v1455, 4294901760
        %4011 = vmatpush1.msra.mxu0 %v4010
        %4012 = vmatprep.subr.mxu0 0.0
        %v4013 = vand.u32 %v1456, 4294901760
        %4014 = vmatpush1.msra.mxu0 %v4013
        %4015 = vmatprep.subr.mxu0 0.0
        %v4016 = vand.u32 %v1457, 4294901760
        %4017 = vmatpush1.msra.mxu0 %v4016
        %4018 = vmatprep.subr.mxu0 0.0
        %v4019 = vand.u32 %v1458, 4294901760
        %4020 = vmatpush1.msra.mxu0 %v4019
        %4021 = vmatprep.subr.mxu0 0.0
        %v4022 = vand.u32 %v1459, 4294901760
        %4023 = vmatpush1.msra.mxu0 %v4022
        %4024 = vmatprep.subr.mxu0 0.0
        %v4025 = vand.u32 %v1460, 4294901760
        %4026 = vmatpush1.msra.mxu0 %v4025
        %4027 = vmatprep.subr.mxu0 0.0
        %4028 = vmatpush1.msra.mxu0 0.0
        %4029 = vmatprep.subr.mxu0 0.0
        %4030 = vmatpush1.msra.mxu0 0.0
        %4031 = vmatprep.subr.mxu0 0.0
        %4032 = vmatpush1.msra.mxu0 0.0
        %4033 = vmatprep.subr.mxu0 0.0
        %4034 = vmatpush1.msra.mxu0 0.0
        %4035 = vmatprep.subr.mxu0 0.0
        %4036 = vmatpush1.msra.mxu0 0.0
        %4037 = vmatprep.subr.mxu0 0.0
        %4038 = vmatpush1.msra.mxu0 0.0
        %4039 = vmatprep.subr.mxu0 0.0
        %4040 = vmatpush1.msra.mxu0 0.0
        %4041 = vmatprep.subr.mxu0 0.0
        %4042 = vmatpush1.msra.mxu0 0.0
        %4043 = vmatprep.subr.mxu0 0.0
        %4044 = vmatpush1.msra.mxu0 0.0
        %4045 = vmatprep.subr.mxu0 0.0
        %4046 = vmatpush1.msra.mxu0 0.0
        %4047 = vmatprep.subr.mxu0 0.0
        %4048 = vmatpush1.msra.mxu0 0.0
        %4049 = vmatprep.subr.mxu0 0.0
        %4050 = vmatpush1.msra.mxu0 0.0
        %4051 = vmatprep.subr.mxu0 0.0
        %4052 = vmatpush1.msra.mxu0 0.0
        %4053 = vmatprep.subr.mxu0 0.0
        %4054 = vmatpush1.msra.mxu0 0.0
        %4055 = vmatprep.subr.mxu0 0.0
        %4056 = vmatpush1.msra.mxu0 0.0
        %4057 = vmatprep.subr.mxu0 0.0
        %4058 = vmatpush1.msra.mxu0 0.0
        %4059 = vmatprep.mubr.f32.mxu0 0.0
        %v4060 = vand.u32 %v3608, 4294901760
        %v4061 = vsub.f32 %v3608, %v4060
        %v4062 = vand.u32 %v4061, 4294901760
        %4063 = vmatmul.mubr.f32.gmra.mrb[0].mxu0 %v4062
        %v4064 = vpop.f32.mrb[0].mxu0
        %v4065 = vadd.f32 %v3969, %v4064
        %v4066 = vpop.f32.mrb[0].mxu0
        %4067 = vmatprep.mubr.f32.mxu0 0.0
        %v4068 = vand.u32 %v3609, 4294901760
        %v4069 = vsub.f32 %v3609, %v4068
        %v4070 = vand.u32 %v4069, 4294901760
        %4071 = vmatmul.mubr.f32.gmra.mrb[0].mxu0 %v4070
        %v4072 = vpop.f32.mrb[0].mxu0
        %v4073 = vadd.f32 %v3976, %v4072
        %v4074 = vpop.f32.mrb[0].mxu0
        %4075 = vdwg.mxu0
        %4076 = vmatprep.subr.mxu0 0.0
        %v4077 = vand.u32 %v1445, 4294901760
        %v4078 = vsub.f32 %v1445, %v4077
        %v4079 = vand.u32 %v4078, 4294901760
        %4080 = vmatpush1.msra.mxu0 %v4079
        %4081 = vmatprep.subr.mxu0 0.0
        %v4082 = vand.u32 %v1446, 4294901760
        %v4083 = vsub.f32 %v1446, %v4082
        %v4084 = vand.u32 %v4083, 4294901760
        %4085 = vmatpush1.msra.mxu0 %v4084
        %4086 = vmatprep.subr.mxu0 0.0
        %v4087 = vand.u32 %v1447, 4294901760
        %v4088 = vsub.f32 %v1447, %v4087
        %v4089 = vand.u32 %v4088, 4294901760
        %4090 = vmatpush1.msra.mxu0 %v4089
        %4091 = vmatprep.subr.mxu0 0.0
        %v4092 = vand.u32 %v1448, 4294901760
        %v4093 = vsub.f32 %v1448, %v4092
        %v4094 = vand.u32 %v4093, 4294901760
        %4095 = vmatpush1.msra.mxu0 %v4094
        %4096 = vmatprep.subr.mxu0 0.0
        %v4097 = vand.u32 %v1449, 4294901760
        %v4098 = vsub.f32 %v1449, %v4097
        %v4099 = vand.u32 %v4098, 4294901760
        %4100 = vmatpush1.msra.mxu0 %v4099
        %4101 = vmatprep.subr.mxu0 0.0
        %v4102 = vand.u32 %v1450, 4294901760
        %v4103 = vsub.f32 %v1450, %v4102
        %v4104 = vand.u32 %v4103, 4294901760
        %4105 = vmatpush1.msra.mxu0 %v4104
        %4106 = vmatprep.subr.mxu0 0.0
        %v4107 = vand.u32 %v1451, 4294901760
        %v4108 = vsub.f32 %v1451, %v4107
        %v4109 = vand.u32 %v4108, 4294901760
        %4110 = vmatpush1.msra.mxu0 %v4109
        %4111 = vmatprep.subr.mxu0 0.0
        %v4112 = vand.u32 %v1452, 4294901760
        %v4113 = vsub.f32 %v1452, %v4112
        %v4114 = vand.u32 %v4113, 4294901760
        %4115 = vmatpush1.msra.mxu0 %v4114
        %4116 = vmatprep.subr.mxu0 0.0
        %v4117 = vand.u32 %v1453, 4294901760
        %v4118 = vsub.f32 %v1453, %v4117
        %v4119 = vand.u32 %v4118, 4294901760
        %4120 = vmatpush1.msra.mxu0 %v4119
        %4121 = vmatprep.subr.mxu0 0.0
        %v4122 = vand.u32 %v1454, 4294901760
        %v4123 = vsub.f32 %v1454, %v4122
        %v4124 = vand.u32 %v4123, 4294901760
        %4125 = vmatpush1.msra.mxu0 %v4124
        %4126 = vmatprep.subr.mxu0 0.0
        %v4127 = vand.u32 %v1455, 4294901760
        %v4128 = vsub.f32 %v1455, %v4127
        %v4129 = vand.u32 %v4128, 4294901760
        %4130 = vmatpush1.msra.mxu0 %v4129
        %4131 = vmatprep.subr.mxu0 0.0
        %v4132 = vand.u32 %v1456, 4294901760
        %v4133 = vsub.f32 %v1456, %v4132
        %v4134 = vand.u32 %v4133, 4294901760
        %4135 = vmatpush1.msra.mxu0 %v4134
        %4136 = vmatprep.subr.mxu0 0.0
        %v4137 = vand.u32 %v1457, 4294901760
        %v4138 = vsub.f32 %v1457, %v4137
        %v4139 = vand.u32 %v4138, 4294901760
        %4140 = vmatpush1.msra.mxu0 %v4139
        %4141 = vmatprep.subr.mxu0 0.0
        %v4142 = vand.u32 %v1458, 4294901760
        %v4143 = vsub.f32 %v1458, %v4142
        %v4144 = vand.u32 %v4143, 4294901760
        %4145 = vmatpush1.msra.mxu0 %v4144
        %4146 = vmatprep.subr.mxu0 0.0
        %v4147 = vand.u32 %v1459, 4294901760
        %v4148 = vsub.f32 %v1459, %v4147
        %v4149 = vand.u32 %v4148, 4294901760
        %4150 = vmatpush1.msra.mxu0 %v4149
        %4151 = vmatprep.subr.mxu0 0.0
        %v4152 = vand.u32 %v1460, 4294901760
        %v4153 = vsub.f32 %v1460, %v4152
        %v4154 = vand.u32 %v4153, 4294901760
        %4155 = vmatpush1.msra.mxu0 %v4154
        %4156 = vmatprep.subr.mxu0 0.0
        %4157 = vmatpush1.msra.mxu0 0.0
        %4158 = vmatprep.subr.mxu0 0.0
        %4159 = vmatpush1.msra.mxu0 0.0
        %4160 = vmatprep.subr.mxu0 0.0
        %4161 = vmatpush1.msra.mxu0 0.0
        %4162 = vmatprep.subr.mxu0 0.0
        %4163 = vmatpush1.msra.mxu0 0.0
        %4164 = vmatprep.subr.mxu0 0.0
        %4165 = vmatpush1.msra.mxu0 0.0
        %4166 = vmatprep.subr.mxu0 0.0
        %4167 = vmatpush1.msra.mxu0 0.0
        %4168 = vmatprep.subr.mxu0 0.0
        %4169 = vmatpush1.msra.mxu0 0.0
        %4170 = vmatprep.subr.mxu0 0.0
        %4171 = vmatpush1.msra.mxu0 0.0
        %4172 = vmatprep.subr.mxu0 0.0
        %4173 = vmatpush1.msra.mxu0 0.0
        %4174 = vmatprep.subr.mxu0 0.0
        %4175 = vmatpush1.msra.mxu0 0.0
        %4176 = vmatprep.subr.mxu0 0.0
        %4177 = vmatpush1.msra.mxu0 0.0
        %4178 = vmatprep.subr.mxu0 0.0
        %4179 = vmatpush1.msra.mxu0 0.0
        %4180 = vmatprep.subr.mxu0 0.0
        %4181 = vmatpush1.msra.mxu0 0.0
        %4182 = vmatprep.subr.mxu0 0.0
        %4183 = vmatpush1.msra.mxu0 0.0
        %4184 = vmatprep.subr.mxu0 0.0
        %4185 = vmatpush1.msra.mxu0 0.0
        %4186 = vmatprep.subr.mxu0 0.0
        %4187 = vmatpush1.msra.mxu0 0.0
        %4188 = vmatprep.mubr.f32.mxu0 0.0
        %v4189 = vand.u32 %v3608, 4294901760
        %4190 = vmatmul.mubr.f32.gmra.mrb[0].mxu0 %v4189
        %v4191 = vpop.f32.mrb[0].mxu0
        %v4192 = vadd.f32 %v4065, %v4191
        %v4193 = vpop.f32.mrb[0].mxu0
        %4194 = vmatprep.mubr.f32.mxu0 0.0
        %v4195 = vand.u32 %v3609, 4294901760
        %4196 = vmatmul.mubr.f32.gmra.mrb[0].mxu0 %v4195
        %v4197 = vpop.f32.mrb[0].mxu0
        %v4198 = vadd.f32 %v4073, %v4197
        %v4199 = vpop.f32.mrb[0].mxu0
        %4200 = vdwg.mxu0
        %4201 = vmatprep.subr.mxu0 0.0
        %v4202 = vand.u32 %v1445, 4294901760
        %4203 = vmatpush1.msra.mxu0 %v4202
        %4204 = vmatprep.subr.mxu0 0.0
        %v4205 = vand.u32 %v1446, 4294901760
        %4206 = vmatpush1.msra.mxu0 %v4205
        %4207 = vmatprep.subr.mxu0 0.0
        %v4208 = vand.u32 %v1447, 4294901760
        %4209 = vmatpush1.msra.mxu0 %v4208
        %4210 = vmatprep.subr.mxu0 0.0
        %v4211 = vand.u32 %v1448, 4294901760
        %4212 = vmatpush1.msra.mxu0 %v4211
        %4213 = vmatprep.subr.mxu0 0.0
        %v4214 = vand.u32 %v1449, 4294901760
        %4215 = vmatpush1.msra.mxu0 %v4214
        %4216 = vmatprep.subr.mxu0 0.0
        %v4217 = vand.u32 %v1450, 4294901760
        %4218 = vmatpush1.msra.mxu0 %v4217
        %4219 = vmatprep.subr.mxu0 0.0
        %v4220 = vand.u32 %v1451, 4294901760
        %4221 = vmatpush1.msra.mxu0 %v4220
        %4222 = vmatprep.subr.mxu0 0.0
        %v4223 = vand.u32 %v1452, 4294901760
        %4224 = vmatpush1.msra.mxu0 %v4223
        %4225 = vmatprep.subr.mxu0 0.0
        %v4226 = vand.u32 %v1453, 4294901760
        %4227 = vmatpush1.msra.mxu0 %v4226
        %4228 = vmatprep.subr.mxu0 0.0
        %v4229 = vand.u32 %v1454, 4294901760
        %4230 = vmatpush1.msra.mxu0 %v4229
        %4231 = vmatprep.subr.mxu0 0.0
        %v4232 = vand.u32 %v1455, 4294901760
        %4233 = vmatpush1.msra.mxu0 %v4232
        %4234 = vmatprep.subr.mxu0 0.0
        %v4235 = vand.u32 %v1456, 4294901760
        %4236 = vmatpush1.msra.mxu0 %v4235
        %4237 = vmatprep.subr.mxu0 0.0
        %v4238 = vand.u32 %v1457, 4294901760
        %4239 = vmatpush1.msra.mxu0 %v4238
        %4240 = vmatprep.subr.mxu0 0.0
        %v4241 = vand.u32 %v1458, 4294901760
        %4242 = vmatpush1.msra.mxu0 %v4241
        %4243 = vmatprep.subr.mxu0 0.0
        %v4244 = vand.u32 %v1459, 4294901760
        %4245 = vmatpush1.msra.mxu0 %v4244
        %4246 = vmatprep.subr.mxu0 0.0
        %v4247 = vand.u32 %v1460, 4294901760
        %4248 = vmatpush1.msra.mxu0 %v4247
        %4249 = vmatprep.subr.mxu0 0.0
        %4250 = vmatpush1.msra.mxu0 0.0
        %4251 = vmatprep.subr.mxu0 0.0
        %4252 = vmatpush1.msra.mxu0 0.0
        %4253 = vmatprep.subr.mxu0 0.0
        %4254 = vmatpush1.msra.mxu0 0.0
        %4255 = vmatprep.subr.mxu0 0.0
        %4256 = vmatpush1.msra.mxu0 0.0
        %4257 = vmatprep.subr.mxu0 0.0
        %4258 = vmatpush1.msra.mxu0 0.0
        %4259 = vmatprep.subr.mxu0 0.0
        %4260 = vmatpush1.msra.mxu0 0.0
        %4261 = vmatprep.subr.mxu0 0.0
        %4262 = vmatpush1.msra.mxu0 0.0
        %4263 = vmatprep.subr.mxu0 0.0
        %4264 = vmatpush1.msra.mxu0 0.0
        %4265 = vmatprep.subr.mxu0 0.0
        %4266 = vmatpush1.msra.mxu0 0.0
        %4267 = vmatprep.subr.mxu0 0.0
        %4268 = vmatpush1.msra.mxu0 0.0
        %4269 = vmatprep.subr.mxu0 0.0
        %4270 = vmatpush1.msra.mxu0 0.0
        %4271 = vmatprep.subr.mxu0 0.0
        %4272 = vmatpush1.msra.mxu0 0.0
        %4273 = vmatprep.subr.mxu0 0.0
        %4274 = vmatpush1.msra.mxu0 0.0
        %4275 = vmatprep.subr.mxu0 0.0
        %4276 = vmatpush1.msra.mxu0 0.0
        %4277 = vmatprep.subr.mxu0 0.0
        %4278 = vmatpush1.msra.mxu0 0.0
        %4279 = vmatprep.subr.mxu0 0.0
        %4280 = vmatpush1.msra.mxu0 0.0
        %4281 = vmatprep.mubr.f32.mxu0 0.0
        %v4282 = vand.u32 %v3608, 4294901760
        %4283 = vmatmul.mubr.f32.gmra.mrb[0].mxu0 %v4282
        %v4284 = vpop.f32.mrb[0].mxu0
        %v4285 = vadd.f32 %v4192, %v4284
        %v4286 = vpop.f32.mrb[0].mxu0
        %4287 = vmatprep.mubr.f32.mxu0 0.0
        %v4288 = vand.u32 %v3609, 4294901760
        %4289 = vmatmul.mubr.f32.gmra.mrb[0].mxu0 %v4288
        %v4290 = vpop.f32.mrb[0].mxu0
        %v4291 = vadd.f32 %v4198, %v4290
        %v4292 = vpop.f32.mrb[0].mxu0
        %4293 = vdwg.mxu0
        %v4294 = vadd.f32 %v3606, %v4285
        %v4295 = vadd.f32 %v3607, %v4291
        %v4296 = vld [vmem:[#allocation4] sm:$0xff]
        %v4297 = vld [vmem:[#allocation4 + $0x8] sm:$0xff]
        %v4298 = vmul.f32 %v2159, %v4296
        %v4299 = vmul.f32 %v2159, %v4297
        %v4300 = vmul.f32 %v2167, %v4294
        %v4301 = vmul.f32 %v2167, %v4295
        %v4302 = vadd.f32 %v4298, %v4300
        %v4303 = vadd.f32 %v4299, %v4301
        %v4304 = vtanh.pop %v4302
        %v4305 = vtanh.pop %v4303
        %4306 = vst [vmem:[#allocation3] sm:$0xff] %v4304
        %4307 = vst [vmem:[#allocation3 + $0x8] sm:$0xff] %v4305
        %4308 = vst [vmem:[#allocation4] sm:$0xff] %v4302
        %4309 = vst [vmem:[#allocation4 + $0x8] sm:$0xff] %v4303
        %s4310 = scalar_lea.vmem %s406, 48 [#allocation14]
        %4311 = vst [vmem:[%s4310] sm:$0xff] %v4304
        %4312 = vst [vmem:[%s4310 + $0x8] sm:$0xff] %v4305
        %s4313 = scalar_lea.vmem %s413, 48 [#allocation15]
        %4314 = vst [vmem:[%s4313] sm:$0xff] %v4302
        %4315 = vst [vmem:[%s4313 + $0x8] sm:$0xff] %v4303
        %s4316 = scalar_lea.vmem [#allocation2], 64
        %v4317 = vld [vmem:[%s4316] sm:$0xff]
        %v4318 = vld [vmem:[%s4316 + $0x8] sm:$0xff]
        %v4319 = vld [vmem:[#allocation3] sm:$0xff]
        %v4320 = vld [vmem:[#allocation3 + $0x8] sm:$0xff]
        %4321 = vmatprep.subr.mxu0 0.0
        %v4322 = vand.u32 %v1445, 4294901760
        %4323 = vmatpush1.msra.mxu0 %v4322
        %4324 = vmatprep.subr.mxu0 0.0
        %v4325 = vand.u32 %v1446, 4294901760
        %4326 = vmatpush1.msra.mxu0 %v4325
        %4327 = vmatprep.subr.mxu0 0.0
        %v4328 = vand.u32 %v1447, 4294901760
        %4329 = vmatpush1.msra.mxu0 %v4328
        %4330 = vmatprep.subr.mxu0 0.0
        %v4331 = vand.u32 %v1448, 4294901760
        %4332 = vmatpush1.msra.mxu0 %v4331
        %4333 = vmatprep.subr.mxu0 0.0
        %v4334 = vand.u32 %v1449, 4294901760
        %4335 = vmatpush1.msra.mxu0 %v4334
        %4336 = vmatprep.subr.mxu0 0.0
        %v4337 = vand.u32 %v1450, 4294901760
        %4338 = vmatpush1.msra.mxu0 %v4337
        %4339 = vmatprep.subr.mxu0 0.0
        %v4340 = vand.u32 %v1451, 4294901760
        %4341 = vmatpush1.msra.mxu0 %v4340
        %4342 = vmatprep.subr.mxu0 0.0
        %v4343 = vand.u32 %v1452, 4294901760
        %4344 = vmatpush1.msra.mxu0 %v4343
        %4345 = vmatprep.subr.mxu0 0.0
        %v4346 = vand.u32 %v1453, 4294901760
        %4347 = vmatpush1.msra.mxu0 %v4346
        %4348 = vmatprep.subr.mxu0 0.0
        %v4349 = vand.u32 %v1454, 4294901760
        %4350 = vmatpush1.msra.mxu0 %v4349
        %4351 = vmatprep.subr.mxu0 0.0
        %v4352 = vand.u32 %v1455, 4294901760
        %4353 = vmatpush1.msra.mxu0 %v4352
        %4354 = vmatprep.subr.mxu0 0.0
        %v4355 = vand.u32 %v1456, 4294901760
        %4356 = vmatpush1.msra.mxu0 %v4355
        %4357 = vmatprep.subr.mxu0 0.0
        %v4358 = vand.u32 %v1457, 4294901760
        %4359 = vmatpush1.msra.mxu0 %v4358
        %4360 = vmatprep.subr.mxu0 0.0
        %v4361 = vand.u32 %v1458, 4294901760
        %4362 = vmatpush1.msra.mxu0 %v4361
        %4363 = vmatprep.subr.mxu0 0.0
        %v4364 = vand.u32 %v1459, 4294901760
        %4365 = vmatpush1.msra.mxu0 %v4364
        %4366 = vmatprep.subr.mxu0 0.0
        %v4367 = vand.u32 %v1460, 4294901760
        %4368 = vmatpush1.msra.mxu0 %v4367
        %4369 = vmatprep.subr.mxu0 0.0
        %4370 = vmatpush1.msra.mxu0 0.0
        %4371 = vmatprep.subr.mxu0 0.0
        %4372 = vmatpush1.msra.mxu0 0.0
        %4373 = vmatprep.subr.mxu0 0.0
        %4374 = vmatpush1.msra.mxu0 0.0
        %4375 = vmatprep.subr.mxu0 0.0
        %4376 = vmatpush1.msra.mxu0 0.0
        %4377 = vmatprep.subr.mxu0 0.0
        %4378 = vmatpush1.msra.mxu0 0.0
        %4379 = vmatprep.subr.mxu0 0.0
        %4380 = vmatpush1.msra.mxu0 0.0
        %4381 = vmatprep.subr.mxu0 0.0
        %4382 = vmatpush1.msra.mxu0 0.0
        %4383 = vmatprep.subr.mxu0 0.0
        %4384 = vmatpush1.msra.mxu0 0.0
        %4385 = vmatprep.subr.mxu0 0.0
        %4386 = vmatpush1.msra.mxu0 0.0
        %4387 = vmatprep.subr.mxu0 0.0
        %4388 = vmatpush1.msra.mxu0 0.0
        %4389 = vmatprep.subr.mxu0 0.0
        %4390 = vmatpush1.msra.mxu0 0.0
        %4391 = vmatprep.subr.mxu0 0.0
        %4392 = vmatpush1.msra.mxu0 0.0
        %4393 = vmatprep.subr.mxu0 0.0
        %4394 = vmatpush1.msra.mxu0 0.0
        %4395 = vmatprep.subr.mxu0 0.0
        %4396 = vmatpush1.msra.mxu0 0.0
        %4397 = vmatprep.subr.mxu0 0.0
        %4398 = vmatpush1.msra.mxu0 0.0
        %4399 = vmatprep.subr.mxu0 0.0
        %4400 = vmatpush1.msra.mxu0 0.0
        %4401 = vmatprep.mubr.f32.mxu0 0.0
        %v4402 = vand.u32 %v4319, 4294901760
        %v4403 = vsub.f32 %v4319, %v4402
        %v4404 = vand.u32 %v4403, 4294901760
        %v4405 = vsub.f32 %v4403, %v4404
        %v4406 = vand.u32 %v4405, 4294901760
        %4407 = vmatmul.mubr.f32.gmra.mrb[0].mxu0 %v4406
        %v4408 = vpop.f32.mrb[0].mxu0
        %v4409 = vadd.f32 0.0, %v4408
        %v4410 = vpop.f32.mrb[0].mxu0
        %4411 = vmatprep.mubr.f32.mxu0 0.0
        %v4412 = vand.u32 %v4320, 4294901760
        %v4413 = vsub.f32 %v4320, %v4412
        %v4414 = vand.u32 %v4413, 4294901760
        %v4415 = vsub.f32 %v4413, %v4414
        %v4416 = vand.u32 %v4415, 4294901760
        %4417 = vmatmul.mubr.f32.gmra.mrb[0].mxu0 %v4416
        %v4418 = vpop.f32.mrb[0].mxu0
        %v4419 = vadd.f32 0.0, %v4418
        %v4420 = vpop.f32.mrb[0].mxu0
        %4421 = vdwg.mxu0
        %4422 = vmatprep.subr.mxu0 0.0
        %v4423 = vand.u32 %v1445, 4294901760
        %v4424 = vsub.f32 %v1445, %v4423
        %v4425 = vand.u32 %v4424, 4294901760
        %v4426 = vsub.f32 %v4424, %v4425
        %v4427 = vand.u32 %v4426, 4294901760
        %4428 = vmatpush1.msra.mxu0 %v4427
        %4429 = vmatprep.subr.mxu0 0.0
        %v4430 = vand.u32 %v1446, 4294901760
        %v4431 = vsub.f32 %v1446, %v4430
        %v4432 = vand.u32 %v4431, 4294901760
        %v4433 = vsub.f32 %v4431, %v4432
        %v4434 = vand.u32 %v4433, 4294901760
        %4435 = vmatpush1.msra.mxu0 %v4434
        %4436 = vmatprep.subr.mxu0 0.0
        %v4437 = vand.u32 %v1447, 4294901760
        %v4438 = vsub.f32 %v1447, %v4437
        %v4439 = vand.u32 %v4438, 4294901760
        %v4440 = vsub.f32 %v4438, %v4439
        %v4441 = vand.u32 %v4440, 4294901760
        %4442 = vmatpush1.msra.mxu0 %v4441
        %4443 = vmatprep.subr.mxu0 0.0
        %v4444 = vand.u32 %v1448, 4294901760
        %v4445 = vsub.f32 %v1448, %v4444
        %v4446 = vand.u32 %v4445, 4294901760
        %v4447 = vsub.f32 %v4445, %v4446
        %v4448 = vand.u32 %v4447, 4294901760
        %4449 = vmatpush1.msra.mxu0 %v4448
        %4450 = vmatprep.subr.mxu0 0.0
        %v4451 = vand.u32 %v1449, 4294901760
        %v4452 = vsub.f32 %v1449, %v4451
        %v4453 = vand.u32 %v4452, 4294901760
        %v4454 = vsub.f32 %v4452, %v4453
        %v4455 = vand.u32 %v4454, 4294901760
        %4456 = vmatpush1.msra.mxu0 %v4455
        %4457 = vmatprep.subr.mxu0 0.0
        %v4458 = vand.u32 %v1450, 4294901760
        %v4459 = vsub.f32 %v1450, %v4458
        %v4460 = vand.u32 %v4459, 4294901760
        %v4461 = vsub.f32 %v4459, %v4460
        %v4462 = vand.u32 %v4461, 4294901760
        %4463 = vmatpush1.msra.mxu0 %v4462
        %4464 = vmatprep.subr.mxu0 0.0
        %v4465 = vand.u32 %v1451, 4294901760
        %v4466 = vsub.f32 %v1451, %v4465
        %v4467 = vand.u32 %v4466, 4294901760
        %v4468 = vsub.f32 %v4466, %v4467
        %v4469 = vand.u32 %v4468, 4294901760
        %4470 = vmatpush1.msra.mxu0 %v4469
        %4471 = vmatprep.subr.mxu0 0.0
        %v4472 = vand.u32 %v1452, 4294901760
        %v4473 = vsub.f32 %v1452, %v4472
        %v4474 = vand.u32 %v4473, 4294901760
        %v4475 = vsub.f32 %v4473, %v4474
        %v4476 = vand.u32 %v4475, 4294901760
        %4477 = vmatpush1.msra.mxu0 %v4476
        %4478 = vmatprep.subr.mxu0 0.0
        %v4479 = vand.u32 %v1453, 4294901760
        %v4480 = vsub.f32 %v1453, %v4479
        %v4481 = vand.u32 %v4480, 4294901760
        %v4482 = vsub.f32 %v4480, %v4481
        %v4483 = vand.u32 %v4482, 4294901760
        %4484 = vmatpush1.msra.mxu0 %v4483
        %4485 = vmatprep.subr.mxu0 0.0
        %v4486 = vand.u32 %v1454, 4294901760
        %v4487 = vsub.f32 %v1454, %v4486
        %v4488 = vand.u32 %v4487, 4294901760
        %v4489 = vsub.f32 %v4487, %v4488
        %v4490 = vand.u32 %v4489, 4294901760
        %4491 = vmatpush1.msra.mxu0 %v4490
        %4492 = vmatprep.subr.mxu0 0.0
        %v4493 = vand.u32 %v1455, 4294901760
        %v4494 = vsub.f32 %v1455, %v4493
        %v4495 = vand.u32 %v4494, 4294901760
        %v4496 = vsub.f32 %v4494, %v4495
        %v4497 = vand.u32 %v4496, 4294901760
        %4498 = vmatpush1.msra.mxu0 %v4497
        %4499 = vmatprep.subr.mxu0 0.0
        %v4500 = vand.u32 %v1456, 4294901760
        %v4501 = vsub.f32 %v1456, %v4500
        %v4502 = vand.u32 %v4501, 4294901760
        %v4503 = vsub.f32 %v4501, %v4502
        %v4504 = vand.u32 %v4503, 4294901760
        %4505 = vmatpush1.msra.mxu0 %v4504
        %4506 = vmatprep.subr.mxu0 0.0
        %v4507 = vand.u32 %v1457, 4294901760
        %v4508 = vsub.f32 %v1457, %v4507
        %v4509 = vand.u32 %v4508, 4294901760
        %v4510 = vsub.f32 %v4508, %v4509
        %v4511 = vand.u32 %v4510, 4294901760
        %4512 = vmatpush1.msra.mxu0 %v4511
        %4513 = vmatprep.subr.mxu0 0.0
        %v4514 = vand.u32 %v1458, 4294901760
        %v4515 = vsub.f32 %v1458, %v4514
        %v4516 = vand.u32 %v4515, 4294901760
        %v4517 = vsub.f32 %v4515, %v4516
        %v4518 = vand.u32 %v4517, 4294901760
        %4519 = vmatpush1.msra.mxu0 %v4518
        %4520 = vmatprep.subr.mxu0 0.0
        %v4521 = vand.u32 %v1459, 4294901760
        %v4522 = vsub.f32 %v1459, %v4521
        %v4523 = vand.u32 %v4522, 4294901760
        %v4524 = vsub.f32 %v4522, %v4523
        %v4525 = vand.u32 %v4524, 4294901760
        %4526 = vmatpush1.msra.mxu0 %v4525
        %4527 = vmatprep.subr.mxu0 0.0
        %v4528 = vand.u32 %v1460, 4294901760
        %v4529 = vsub.f32 %v1460, %v4528
        %v4530 = vand.u32 %v4529, 4294901760
        %v4531 = vsub.f32 %v4529, %v4530
        %v4532 = vand.u32 %v4531, 4294901760
        %4533 = vmatpush1.msra.mxu0 %v4532
        %4534 = vmatprep.subr.mxu0 0.0
        %4535 = vmatpush1.msra.mxu0 0.0
        %4536 = vmatprep.subr.mxu0 0.0
        %4537 = vmatpush1.msra.mxu0 0.0
        %4538 = vmatprep.subr.mxu0 0.0
        %4539 = vmatpush1.msra.mxu0 0.0
        %4540 = vmatprep.subr.mxu0 0.0
        %4541 = vmatpush1.msra.mxu0 0.0
        %4542 = vmatprep.subr.mxu0 0.0
        %4543 = vmatpush1.msra.mxu0 0.0
        %4544 = vmatprep.subr.mxu0 0.0
        %4545 = vmatpush1.msra.mxu0 0.0
        %4546 = vmatprep.subr.mxu0 0.0
        %4547 = vmatpush1.msra.mxu0 0.0
        %4548 = vmatprep.subr.mxu0 0.0
        %4549 = vmatpush1.msra.mxu0 0.0
        %4550 = vmatprep.subr.mxu0 0.0
        %4551 = vmatpush1.msra.mxu0 0.0
        %4552 = vmatprep.subr.mxu0 0.0
        %4553 = vmatpush1.msra.mxu0 0.0
        %4554 = vmatprep.subr.mxu0 0.0
        %4555 = vmatpush1.msra.mxu0 0.0
        %4556 = vmatprep.subr.mxu0 0.0
        %4557 = vmatpush1.msra.mxu0 0.0
        %4558 = vmatprep.subr.mxu0 0.0
        %4559 = vmatpush1.msra.mxu0 0.0
        %4560 = vmatprep.subr.mxu0 0.0
        %4561 = vmatpush1.msra.mxu0 0.0
        %4562 = vmatprep.subr.mxu0 0.0
        %4563 = vmatpush1.msra.mxu0 0.0
        %4564 = vmatprep.subr.mxu0 0.0
        %4565 = vmatpush1.msra.mxu0 0.0
        %4566 = vmatprep.mubr.f32.mxu0 0.0
        %v4567 = vand.u32 %v4319, 4294901760
        %4568 = vmatmul.mubr.f32.gmra.mrb[0].mxu0 %v4567
        %v4569 = vpop.f32.mrb[0].mxu0
        %v4570 = vadd.f32 %v4409, %v4569
        %v4571 = vpop.f32.mrb[0].mxu0
        %4572 = vmatprep.mubr.f32.mxu0 0.0
        %v4573 = vand.u32 %v4320, 4294901760
        %4574 = vmatmul.mubr.f32.gmra.mrb[0].mxu0 %v4573
        %v4575 = vpop.f32.mrb[0].mxu0
        %v4576 = vadd.f32 %v4419, %v4575
        %v4577 = vpop.f32.mrb[0].mxu0
        %4578 = vdwg.mxu0
        %4579 = vmatprep.subr.mxu0 0.0
        %v4580 = vand.u32 %v1445, 4294901760
        %v4581 = vsub.f32 %v1445, %v4580
        %4582 = vmatpush1.msra.mxu0 %v4581
        %4583 = vmatprep.subr.mxu0 0.0
        %v4584 = vand.u32 %v1446, 4294901760
        %v4585 = vsub.f32 %v1446, %v4584
        %4586 = vmatpush1.msra.mxu0 %v4585
        %4587 = vmatprep.subr.mxu0 0.0
        %v4588 = vand.u32 %v1447, 4294901760
        %v4589 = vsub.f32 %v1447, %v4588
        %4590 = vmatpush1.msra.mxu0 %v4589
        %4591 = vmatprep.subr.mxu0 0.0
        %v4592 = vand.u32 %v1448, 4294901760
        %v4593 = vsub.f32 %v1448, %v4592
        %4594 = vmatpush1.msra.mxu0 %v4593
        %4595 = vmatprep.subr.mxu0 0.0
        %v4596 = vand.u32 %v1449, 4294901760
        %v4597 = vsub.f32 %v1449, %v4596
        %4598 = vmatpush1.msra.mxu0 %v4597
        %4599 = vmatprep.subr.mxu0 0.0
        %v4600 = vand.u32 %v1450, 4294901760
        %v4601 = vsub.f32 %v1450, %v4600
        %4602 = vmatpush1.msra.mxu0 %v4601
        %4603 = vmatprep.subr.mxu0 0.0
        %v4604 = vand.u32 %v1451, 4294901760
        %v4605 = vsub.f32 %v1451, %v4604
        %4606 = vmatpush1.msra.mxu0 %v4605
        %4607 = vmatprep.subr.mxu0 0.0
        %v4608 = vand.u32 %v1452, 4294901760
        %v4609 = vsub.f32 %v1452, %v4608
        %4610 = vmatpush1.msra.mxu0 %v4609
        %4611 = vmatprep.subr.mxu0 0.0
        %v4612 = vand.u32 %v1453, 4294901760
        %v4613 = vsub.f32 %v1453, %v4612
        %4614 = vmatpush1.msra.mxu0 %v4613
        %4615 = vmatprep.subr.mxu0 0.0
        %v4616 = vand.u32 %v1454, 4294901760
        %v4617 = vsub.f32 %v1454, %v4616
        %4618 = vmatpush1.msra.mxu0 %v4617
        %4619 = vmatprep.subr.mxu0 0.0
        %v4620 = vand.u32 %v1455, 4294901760
        %v4621 = vsub.f32 %v1455, %v4620
        %4622 = vmatpush1.msra.mxu0 %v4621
        %4623 = vmatprep.subr.mxu0 0.0
        %v4624 = vand.u32 %v1456, 4294901760
        %v4625 = vsub.f32 %v1456, %v4624
        %4626 = vmatpush1.msra.mxu0 %v4625
        %4627 = vmatprep.subr.mxu0 0.0
        %v4628 = vand.u32 %v1457, 4294901760
        %v4629 = vsub.f32 %v1457, %v4628
        %4630 = vmatpush1.msra.mxu0 %v4629
        %4631 = vmatprep.subr.mxu0 0.0
        %v4632 = vand.u32 %v1458, 4294901760
        %v4633 = vsub.f32 %v1458, %v4632
        %4634 = vmatpush1.msra.mxu0 %v4633
        %4635 = vmatprep.subr.mxu0 0.0
        %v4636 = vand.u32 %v1459, 4294901760
        %v4637 = vsub.f32 %v1459, %v4636
        %4638 = vmatpush1.msra.mxu0 %v4637
        %4639 = vmatprep.subr.mxu0 0.0
        %v4640 = vand.u32 %v1460, 4294901760
        %v4641 = vsub.f32 %v1460, %v4640
        %4642 = vmatpush1.msra.mxu0 %v4641
        %4643 = vmatprep.subr.mxu0 0.0
        %4644 = vmatpush1.msra.mxu0 0.0
        %4645 = vmatprep.subr.mxu0 0.0
        %4646 = vmatpush1.msra.mxu0 0.0
        %4647 = vmatprep.subr.mxu0 0.0
        %4648 = vmatpush1.msra.mxu0 0.0
        %4649 = vmatprep.subr.mxu0 0.0
        %4650 = vmatpush1.msra.mxu0 0.0
        %4651 = vmatprep.subr.mxu0 0.0
        %4652 = vmatpush1.msra.mxu0 0.0
        %4653 = vmatprep.subr.mxu0 0.0
        %4654 = vmatpush1.msra.mxu0 0.0
        %4655 = vmatprep.subr.mxu0 0.0
        %4656 = vmatpush1.msra.mxu0 0.0
        %4657 = vmatprep.subr.mxu0 0.0
        %4658 = vmatpush1.msra.mxu0 0.0
        %4659 = vmatprep.subr.mxu0 0.0
        %4660 = vmatpush1.msra.mxu0 0.0
        %4661 = vmatprep.subr.mxu0 0.0
        %4662 = vmatpush1.msra.mxu0 0.0
        %4663 = vmatprep.subr.mxu0 0.0
        %4664 = vmatpush1.msra.mxu0 0.0
        %4665 = vmatprep.subr.mxu0 0.0
        %4666 = vmatpush1.msra.mxu0 0.0
        %4667 = vmatprep.subr.mxu0 0.0
        %4668 = vmatpush1.msra.mxu0 0.0
        %4669 = vmatprep.subr.mxu0 0.0
        %4670 = vmatpush1.msra.mxu0 0.0
        %4671 = vmatprep.subr.mxu0 0.0
        %4672 = vmatpush1.msra.mxu0 0.0
        %4673 = vmatprep.subr.mxu0 0.0
        %4674 = vmatpush1.msra.mxu0 0.0
        %4675 = vmatprep.mubr.f32.mxu0 0.0
        %v4676 = vand.u32 %v4319, 4294901760
        %v4677 = vsub.f32 %v4319, %v4676
        %4678 = vmatmul.mubr.f32.gmra.mrb[0].mxu0 %v4677
        %v4679 = vpop.f32.mrb[0].mxu0
        %v4680 = vadd.f32 %v4570, %v4679
        %v4681 = vpop.f32.mrb[0].mxu0
        %4682 = vmatprep.mubr.f32.mxu0 0.0
        %v4683 = vand.u32 %v4320, 4294901760
        %v4684 = vsub.f32 %v4320, %v4683
        %4685 = vmatmul.mubr.f32.gmra.mrb[0].mxu0 %v4684
        %v4686 = vpop.f32.mrb[0].mxu0
        %v4687 = vadd.f32 %v4576, %v4686
        %v4688 = vpop.f32.mrb[0].mxu0
        %4689 = vdwg.mxu0
        %4690 = vmatprep.subr.mxu0 0.0
        %v4691 = vand.u32 %v1445, 4294901760
        %4692 = vmatpush1.msra.mxu0 %v4691
        %4693 = vmatprep.subr.mxu0 0.0
        %v4694 = vand.u32 %v1446, 4294901760
        %4695 = vmatpush1.msra.mxu0 %v4694
        %4696 = vmatprep.subr.mxu0 0.0
        %v4697 = vand.u32 %v1447, 4294901760
        %4698 = vmatpush1.msra.mxu0 %v4697
        %4699 = vmatprep.subr.mxu0 0.0
        %v4700 = vand.u32 %v1448, 4294901760
        %4701 = vmatpush1.msra.mxu0 %v4700
        %4702 = vmatprep.subr.mxu0 0.0
        %v4703 = vand.u32 %v1449, 4294901760
        %4704 = vmatpush1.msra.mxu0 %v4703
        %4705 = vmatprep.subr.mxu0 0.0
        %v4706 = vand.u32 %v1450, 4294901760
        %4707 = vmatpush1.msra.mxu0 %v4706
        %4708 = vmatprep.subr.mxu0 0.0
        %v4709 = vand.u32 %v1451, 4294901760
        %4710 = vmatpush1.msra.mxu0 %v4709
        %4711 = vmatprep.subr.mxu0 0.0
        %v4712 = vand.u32 %v1452, 4294901760
        %4713 = vmatpush1.msra.mxu0 %v4712
        %4714 = vmatprep.subr.mxu0 0.0
        %v4715 = vand.u32 %v1453, 4294901760
        %4716 = vmatpush1.msra.mxu0 %v4715
        %4717 = vmatprep.subr.mxu0 0.0
        %v4718 = vand.u32 %v1454, 4294901760
        %4719 = vmatpush1.msra.mxu0 %v4718
        %4720 = vmatprep.subr.mxu0 0.0
        %v4721 = vand.u32 %v1455, 4294901760
        %4722 = vmatpush1.msra.mxu0 %v4721
        %4723 = vmatprep.subr.mxu0 0.0
        %v4724 = vand.u32 %v1456, 4294901760
        %4725 = vmatpush1.msra.mxu0 %v4724
        %4726 = vmatprep.subr.mxu0 0.0
        %v4727 = vand.u32 %v1457, 4294901760
        %4728 = vmatpush1.msra.mxu0 %v4727
        %4729 = vmatprep.subr.mxu0 0.0
        %v4730 = vand.u32 %v1458, 4294901760
        %4731 = vmatpush1.msra.mxu0 %v4730
        %4732 = vmatprep.subr.mxu0 0.0
        %v4733 = vand.u32 %v1459, 4294901760
        %4734 = vmatpush1.msra.mxu0 %v4733
        %4735 = vmatprep.subr.mxu0 0.0
        %v4736 = vand.u32 %v1460, 4294901760
        %4737 = vmatpush1.msra.mxu0 %v4736
        %4738 = vmatprep.subr.mxu0 0.0
        %4739 = vmatpush1.msra.mxu0 0.0
        %4740 = vmatprep.subr.mxu0 0.0
        %4741 = vmatpush1.msra.mxu0 0.0
        %4742 = vmatprep.subr.mxu0 0.0
        %4743 = vmatpush1.msra.mxu0 0.0
        %4744 = vmatprep.subr.mxu0 0.0
        %4745 = vmatpush1.msra.mxu0 0.0
        %4746 = vmatprep.subr.mxu0 0.0
        %4747 = vmatpush1.msra.mxu0 0.0
        %4748 = vmatprep.subr.mxu0 0.0
        %4749 = vmatpush1.msra.mxu0 0.0
        %4750 = vmatprep.subr.mxu0 0.0
        %4751 = vmatpush1.msra.mxu0 0.0
        %4752 = vmatprep.subr.mxu0 0.0
        %4753 = vmatpush1.msra.mxu0 0.0
        %4754 = vmatprep.subr.mxu0 0.0
        %4755 = vmatpush1.msra.mxu0 0.0
        %4756 = vmatprep.subr.mxu0 0.0
        %4757 = vmatpush1.msra.mxu0 0.0
        %4758 = vmatprep.subr.mxu0 0.0
        %4759 = vmatpush1.msra.mxu0 0.0
        %4760 = vmatprep.subr.mxu0 0.0
        %4761 = vmatpush1.msra.mxu0 0.0
        %4762 = vmatprep.subr.mxu0 0.0
        %4763 = vmatpush1.msra.mxu0 0.0
        %4764 = vmatprep.subr.mxu0 0.0
        %4765 = vmatpush1.msra.mxu0 0.0
        %4766 = vmatprep.subr.mxu0 0.0
        %4767 = vmatpush1.msra.mxu0 0.0
        %4768 = vmatprep.subr.mxu0 0.0
        %4769 = vmatpush1.msra.mxu0 0.0
        %4770 = vmatprep.mubr.f32.mxu0 0.0
        %v4771 = vand.u32 %v4319, 4294901760
        %v4772 = vsub.f32 %v4319, %v4771
        %v4773 = vand.u32 %v4772, 4294901760
        %4774 = vmatmul.mubr.f32.gmra.mrb[0].mxu0 %v4773
        %v4775 = vpop.f32.mrb[0].mxu0
        %v4776 = vadd.f32 %v4680, %v4775
        %v4777 = vpop.f32.mrb[0].mxu0
        %4778 = vmatprep.mubr.f32.mxu0 0.0
        %v4779 = vand.u32 %v4320, 4294901760
        %v4780 = vsub.f32 %v4320, %v4779
        %v4781 = vand.u32 %v4780, 4294901760
        %4782 = vmatmul.mubr.f32.gmra.mrb[0].mxu0 %v4781
        %v4783 = vpop.f32.mrb[0].mxu0
        %v4784 = vadd.f32 %v4687, %v4783
        %v4785 = vpop.f32.mrb[0].mxu0
        %4786 = vdwg.mxu0
        %4787 = vmatprep.subr.mxu0 0.0
        %v4788 = vand.u32 %v1445, 4294901760
        %v4789 = vsub.f32 %v1445, %v4788
        %v4790 = vand.u32 %v4789, 4294901760
        %4791 = vmatpush1.msra.mxu0 %v4790
        %4792 = vmatprep.subr.mxu0 0.0
        %v4793 = vand.u32 %v1446, 4294901760
        %v4794 = vsub.f32 %v1446, %v4793
        %v4795 = vand.u32 %v4794, 4294901760
        %4796 = vmatpush1.msra.mxu0 %v4795
        %4797 = vmatprep.subr.mxu0 0.0
        %v4798 = vand.u32 %v1447, 4294901760
        %v4799 = vsub.f32 %v1447, %v4798
        %v4800 = vand.u32 %v4799, 4294901760
        %4801 = vmatpush1.msra.mxu0 %v4800
        %4802 = vmatprep.subr.mxu0 0.0
        %v4803 = vand.u32 %v1448, 4294901760
        %v4804 = vsub.f32 %v1448, %v4803
        %v4805 = vand.u32 %v4804, 4294901760
        %4806 = vmatpush1.msra.mxu0 %v4805
        %4807 = vmatprep.subr.mxu0 0.0
        %v4808 = vand.u32 %v1449, 4294901760
        %v4809 = vsub.f32 %v1449, %v4808
        %v4810 = vand.u32 %v4809, 4294901760
        %4811 = vmatpush1.msra.mxu0 %v4810
        %4812 = vmatprep.subr.mxu0 0.0
        %v4813 = vand.u32 %v1450, 4294901760
        %v4814 = vsub.f32 %v1450, %v4813
        %v4815 = vand.u32 %v4814, 4294901760
        %4816 = vmatpush1.msra.mxu0 %v4815
        %4817 = vmatprep.subr.mxu0 0.0
        %v4818 = vand.u32 %v1451, 4294901760
        %v4819 = vsub.f32 %v1451, %v4818
        %v4820 = vand.u32 %v4819, 4294901760
        %4821 = vmatpush1.msra.mxu0 %v4820
        %4822 = vmatprep.subr.mxu0 0.0
        %v4823 = vand.u32 %v1452, 4294901760
        %v4824 = vsub.f32 %v1452, %v4823
        %v4825 = vand.u32 %v4824, 4294901760
        %4826 = vmatpush1.msra.mxu0 %v4825
        %4827 = vmatprep.subr.mxu0 0.0
        %v4828 = vand.u32 %v1453, 4294901760
        %v4829 = vsub.f32 %v1453, %v4828
        %v4830 = vand.u32 %v4829, 4294901760
        %4831 = vmatpush1.msra.mxu0 %v4830
        %4832 = vmatprep.subr.mxu0 0.0
        %v4833 = vand.u32 %v1454, 4294901760
        %v4834 = vsub.f32 %v1454, %v4833
        %v4835 = vand.u32 %v4834, 4294901760
        %4836 = vmatpush1.msra.mxu0 %v4835
        %4837 = vmatprep.subr.mxu0 0.0
        %v4838 = vand.u32 %v1455, 4294901760
        %v4839 = vsub.f32 %v1455, %v4838
        %v4840 = vand.u32 %v4839, 4294901760
        %4841 = vmatpush1.msra.mxu0 %v4840
        %4842 = vmatprep.subr.mxu0 0.0
        %v4843 = vand.u32 %v1456, 4294901760
        %v4844 = vsub.f32 %v1456, %v4843
        %v4845 = vand.u32 %v4844, 4294901760
        %4846 = vmatpush1.msra.mxu0 %v4845
        %4847 = vmatprep.subr.mxu0 0.0
        %v4848 = vand.u32 %v1457, 4294901760
        %v4849 = vsub.f32 %v1457, %v4848
        %v4850 = vand.u32 %v4849, 4294901760
        %4851 = vmatpush1.msra.mxu0 %v4850
        %4852 = vmatprep.subr.mxu0 0.0
        %v4853 = vand.u32 %v1458, 4294901760
        %v4854 = vsub.f32 %v1458, %v4853
        %v4855 = vand.u32 %v4854, 4294901760
        %4856 = vmatpush1.msra.mxu0 %v4855
        %4857 = vmatprep.subr.mxu0 0.0
        %v4858 = vand.u32 %v1459, 4294901760
        %v4859 = vsub.f32 %v1459, %v4858
        %v4860 = vand.u32 %v4859, 4294901760
        %4861 = vmatpush1.msra.mxu0 %v4860
        %4862 = vmatprep.subr.mxu0 0.0
        %v4863 = vand.u32 %v1460, 4294901760
        %v4864 = vsub.f32 %v1460, %v4863
        %v4865 = vand.u32 %v4864, 4294901760
        %4866 = vmatpush1.msra.mxu0 %v4865
        %4867 = vmatprep.subr.mxu0 0.0
        %4868 = vmatpush1.msra.mxu0 0.0
        %4869 = vmatprep.subr.mxu0 0.0
        %4870 = vmatpush1.msra.mxu0 0.0
        %4871 = vmatprep.subr.mxu0 0.0
        %4872 = vmatpush1.msra.mxu0 0.0
        %4873 = vmatprep.subr.mxu0 0.0
        %4874 = vmatpush1.msra.mxu0 0.0
        %4875 = vmatprep.subr.mxu0 0.0
        %4876 = vmatpush1.msra.mxu0 0.0
        %4877 = vmatprep.subr.mxu0 0.0
        %4878 = vmatpush1.msra.mxu0 0.0
        %4879 = vmatprep.subr.mxu0 0.0
        %4880 = vmatpush1.msra.mxu0 0.0
        %4881 = vmatprep.subr.mxu0 0.0
        %4882 = vmatpush1.msra.mxu0 0.0
        %4883 = vmatprep.subr.mxu0 0.0
        %4884 = vmatpush1.msra.mxu0 0.0
        %4885 = vmatprep.subr.mxu0 0.0
        %4886 = vmatpush1.msra.mxu0 0.0
        %4887 = vmatprep.subr.mxu0 0.0
        %4888 = vmatpush1.msra.mxu0 0.0
        %4889 = vmatprep.subr.mxu0 0.0
        %4890 = vmatpush1.msra.mxu0 0.0
        %4891 = vmatprep.subr.mxu0 0.0
        %4892 = vmatpush1.msra.mxu0 0.0
        %4893 = vmatprep.subr.mxu0 0.0
        %4894 = vmatpush1.msra.mxu0 0.0
        %4895 = vmatprep.subr.mxu0 0.0
        %4896 = vmatpush1.msra.mxu0 0.0
        %4897 = vmatprep.subr.mxu0 0.0
        %4898 = vmatpush1.msra.mxu0 0.0
        %4899 = vmatprep.mubr.f32.mxu0 0.0
        %v4900 = vand.u32 %v4319, 4294901760
        %4901 = vmatmul.mubr.f32.gmra.mrb[0].mxu0 %v4900
        %v4902 = vpop.f32.mrb[0].mxu0
        %v4903 = vadd.f32 %v4776, %v4902
        %v4904 = vpop.f32.mrb[0].mxu0
        %4905 = vmatprep.mubr.f32.mxu0 0.0
        %v4906 = vand.u32 %v4320, 4294901760
        %4907 = vmatmul.mubr.f32.gmra.mrb[0].mxu0 %v4906
        %v4908 = vpop.f32.mrb[0].mxu0
        %v4909 = vadd.f32 %v4784, %v4908
        %v4910 = vpop.f32.mrb[0].mxu0
        %4911 = vdwg.mxu0
        %4912 = vmatprep.subr.mxu0 0.0
        %v4913 = vand.u32 %v1445, 4294901760
        %4914 = vmatpush1.msra.mxu0 %v4913
        %4915 = vmatprep.subr.mxu0 0.0
        %v4916 = vand.u32 %v1446, 4294901760
        %4917 = vmatpush1.msra.mxu0 %v4916
        %4918 = vmatprep.subr.mxu0 0.0
        %v4919 = vand.u32 %v1447, 4294901760
        %4920 = vmatpush1.msra.mxu0 %v4919
        %4921 = vmatprep.subr.mxu0 0.0
        %v4922 = vand.u32 %v1448, 4294901760
        %4923 = vmatpush1.msra.mxu0 %v4922
        %4924 = vmatprep.subr.mxu0 0.0
        %v4925 = vand.u32 %v1449, 4294901760
        %4926 = vmatpush1.msra.mxu0 %v4925
        %4927 = vmatprep.subr.mxu0 0.0
        %v4928 = vand.u32 %v1450, 4294901760
        %4929 = vmatpush1.msra.mxu0 %v4928
        %4930 = vmatprep.subr.mxu0 0.0
        %v4931 = vand.u32 %v1451, 4294901760
        %4932 = vmatpush1.msra.mxu0 %v4931
        %4933 = vmatprep.subr.mxu0 0.0
        %v4934 = vand.u32 %v1452, 4294901760
        %4935 = vmatpush1.msra.mxu0 %v4934
        %4936 = vmatprep.subr.mxu0 0.0
        %v4937 = vand.u32 %v1453, 4294901760
        %4938 = vmatpush1.msra.mxu0 %v4937
        %4939 = vmatprep.subr.mxu0 0.0
        %v4940 = vand.u32 %v1454, 4294901760
        %4941 = vmatpush1.msra.mxu0 %v4940
        %4942 = vmatprep.subr.mxu0 0.0
        %v4943 = vand.u32 %v1455, 4294901760
        %4944 = vmatpush1.msra.mxu0 %v4943
        %4945 = vmatprep.subr.mxu0 0.0
        %v4946 = vand.u32 %v1456, 4294901760
        %4947 = vmatpush1.msra.mxu0 %v4946
        %4948 = vmatprep.subr.mxu0 0.0
        %v4949 = vand.u32 %v1457, 4294901760
        %4950 = vmatpush1.msra.mxu0 %v4949
        %4951 = vmatprep.subr.mxu0 0.0
        %v4952 = vand.u32 %v1458, 4294901760
        %4953 = vmatpush1.msra.mxu0 %v4952
        %4954 = vmatprep.subr.mxu0 0.0
        %v4955 = vand.u32 %v1459, 4294901760
        %4956 = vmatpush1.msra.mxu0 %v4955
        %4957 = vmatprep.subr.mxu0 0.0
        %v4958 = vand.u32 %v1460, 4294901760
        %4959 = vmatpush1.msra.mxu0 %v4958
        %4960 = vmatprep.subr.mxu0 0.0
        %4961 = vmatpush1.msra.mxu0 0.0
        %4962 = vmatprep.subr.mxu0 0.0
        %4963 = vmatpush1.msra.mxu0 0.0
        %4964 = vmatprep.subr.mxu0 0.0
        %4965 = vmatpush1.msra.mxu0 0.0
        %4966 = vmatprep.subr.mxu0 0.0
        %4967 = vmatpush1.msra.mxu0 0.0
        %4968 = vmatprep.subr.mxu0 0.0
        %4969 = vmatpush1.msra.mxu0 0.0
        %4970 = vmatprep.subr.mxu0 0.0
        %4971 = vmatpush1.msra.mxu0 0.0
        %4972 = vmatprep.subr.mxu0 0.0
        %4973 = vmatpush1.msra.mxu0 0.0
        %4974 = vmatprep.subr.mxu0 0.0
        %4975 = vmatpush1.msra.mxu0 0.0
        %4976 = vmatprep.subr.mxu0 0.0
        %4977 = vmatpush1.msra.mxu0 0.0
        %4978 = vmatprep.subr.mxu0 0.0
        %4979 = vmatpush1.msra.mxu0 0.0
        %4980 = vmatprep.subr.mxu0 0.0
        %4981 = vmatpush1.msra.mxu0 0.0
        %4982 = vmatprep.subr.mxu0 0.0
        %4983 = vmatpush1.msra.mxu0 0.0
        %4984 = vmatprep.subr.mxu0 0.0
        %4985 = vmatpush1.msra.mxu0 0.0
        %4986 = vmatprep.subr.mxu0 0.0
        %4987 = vmatpush1.msra.mxu0 0.0
        %4988 = vmatprep.subr.mxu0 0.0
        %4989 = vmatpush1.msra.mxu0 0.0
        %4990 = vmatprep.subr.mxu0 0.0
        %4991 = vmatpush1.msra.mxu0 0.0
        %4992 = vmatprep.mubr.f32.mxu0 0.0
        %v4993 = vand.u32 %v4319, 4294901760
        %4994 = vmatmul.mubr.f32.gmra.mrb[0].mxu0 %v4993
        %v4995 = vpop.f32.mrb[0].mxu0
        %v4996 = vadd.f32 %v4903, %v4995
        %v4997 = vpop.f32.mrb[0].mxu0
        %4998 = vmatprep.mubr.f32.mxu0 0.0
        %v4999 = vand.u32 %v4320, 4294901760
        %5000 = vmatmul.mubr.f32.gmra.mrb[0].mxu0 %v4999
        %v5001 = vpop.f32.mrb[0].mxu0
        %v5002 = vadd.f32 %v4909, %v5001
        %v5003 = vpop.f32.mrb[0].mxu0
        %5004 = vdwg.mxu0
        %v5005 = vadd.f32 %v4317, %v4996
        %v5006 = vadd.f32 %v4318, %v5002
        %v5007 = vld [vmem:[#allocation4] sm:$0xff]
        %v5008 = vld [vmem:[#allocation4 + $0x8] sm:$0xff]
        %v5009 = vmul.f32 %v2159, %v5007
        %v5010 = vmul.f32 %v2159, %v5008
        %v5011 = vmul.f32 %v2167, %v5005
        %v5012 = vmul.f32 %v2167, %v5006
        %v5013 = vadd.f32 %v5009, %v5011
        %v5014 = vadd.f32 %v5010, %v5012
        %v5015 = vtanh.pop %v5013
        %v5016 = vtanh.pop %v5014
        %5017 = vst [vmem:[#allocation3] sm:$0xff] %v5015
        %5018 = vst [vmem:[#allocation3 + $0x8] sm:$0xff] %v5016
        %5019 = vst [vmem:[#allocation4] sm:$0xff] %v5013
        %5020 = vst [vmem:[#allocation4 + $0x8] sm:$0xff] %v5014
        %s5021 = scalar_lea.vmem %s406, 64 [#allocation14]
        %5022 = vst [vmem:[%s5021] sm:$0xff] %v5015
        %5023 = vst [vmem:[%s5021 + $0x8] sm:$0xff] %v5016
        %s5024 = scalar_lea.vmem %s413, 64 [#allocation15]
        %5025 = vst [vmem:[%s5024] sm:$0xff] %v5013
        %5026 = vst [vmem:[%s5024 + $0x8] sm:$0xff] %v5014
        %s5027 = scalar_lea.vmem [#allocation2], 80
        %v5028 = vld [vmem:[%s5027] sm:$0xff]
        %v5029 = vld [vmem:[%s5027 + $0x8] sm:$0xff]
        %v5030 = vld [vmem:[#allocation3] sm:$0xff]
        %v5031 = vld [vmem:[#allocation3 + $0x8] sm:$0xff]
        %5032 = vmatprep.subr.mxu0 0.0
        %v5033 = vand.u32 %v1445, 4294901760
        %5034 = vmatpush1.msra.mxu0 %v5033
        %5035 = vmatprep.subr.mxu0 0.0
        %v5036 = vand.u32 %v1446, 4294901760
        %5037 = vmatpush1.msra.mxu0 %v5036
        %5038 = vmatprep.subr.mxu0 0.0
        %v5039 = vand.u32 %v1447, 4294901760
        %5040 = vmatpush1.msra.mxu0 %v5039
        %5041 = vmatprep.subr.mxu0 0.0
        %v5042 = vand.u32 %v1448, 4294901760
        %5043 = vmatpush1.msra.mxu0 %v5042
        %5044 = vmatprep.subr.mxu0 0.0
        %v5045 = vand.u32 %v1449, 4294901760
        %5046 = vmatpush1.msra.mxu0 %v5045
        %5047 = vmatprep.subr.mxu0 0.0
        %v5048 = vand.u32 %v1450, 4294901760
        %5049 = vmatpush1.msra.mxu0 %v5048
        %5050 = vmatprep.subr.mxu0 0.0
        %v5051 = vand.u32 %v1451, 4294901760
        %5052 = vmatpush1.msra.mxu0 %v5051
        %5053 = vmatprep.subr.mxu0 0.0
        %v5054 = vand.u32 %v1452, 4294901760
        %5055 = vmatpush1.msra.mxu0 %v5054
        %5056 = vmatprep.subr.mxu0 0.0
        %v5057 = vand.u32 %v1453, 4294901760
        %5058 = vmatpush1.msra.mxu0 %v5057
        %5059 = vmatprep.subr.mxu0 0.0
        %v5060 = vand.u32 %v1454, 4294901760
        %5061 = vmatpush1.msra.mxu0 %v5060
        %5062 = vmatprep.subr.mxu0 0.0
        %v5063 = vand.u32 %v1455, 4294901760
        %5064 = vmatpush1.msra.mxu0 %v5063
        %5065 = vmatprep.subr.mxu0 0.0
        %v5066 = vand.u32 %v1456, 4294901760
        %5067 = vmatpush1.msra.mxu0 %v5066
        %5068 = vmatprep.subr.mxu0 0.0
        %v5069 = vand.u32 %v1457, 4294901760
        %5070 = vmatpush1.msra.mxu0 %v5069
        %5071 = vmatprep.subr.mxu0 0.0
        %v5072 = vand.u32 %v1458, 4294901760
        %5073 = vmatpush1.msra.mxu0 %v5072
        %5074 = vmatprep.subr.mxu0 0.0
        %v5075 = vand.u32 %v1459, 4294901760
        %5076 = vmatpush1.msra.mxu0 %v5075
        %5077 = vmatprep.subr.mxu0 0.0
        %v5078 = vand.u32 %v1460, 4294901760
        %5079 = vmatpush1.msra.mxu0 %v5078
        %5080 = vmatprep.subr.mxu0 0.0
        %5081 = vmatpush1.msra.mxu0 0.0
        %5082 = vmatprep.subr.mxu0 0.0
        %5083 = vmatpush1.msra.mxu0 0.0
        %5084 = vmatprep.subr.mxu0 0.0
        %5085 = vmatpush1.msra.mxu0 0.0
        %5086 = vmatprep.subr.mxu0 0.0
        %5087 = vmatpush1.msra.mxu0 0.0
        %5088 = vmatprep.subr.mxu0 0.0
        %5089 = vmatpush1.msra.mxu0 0.0
        %5090 = vmatprep.subr.mxu0 0.0
        %5091 = vmatpush1.msra.mxu0 0.0
        %5092 = vmatprep.subr.mxu0 0.0
        %5093 = vmatpush1.msra.mxu0 0.0
        %5094 = vmatprep.subr.mxu0 0.0
        %5095 = vmatpush1.msra.mxu0 0.0
        %5096 = vmatprep.subr.mxu0 0.0
        %5097 = vmatpush1.msra.mxu0 0.0
        %5098 = vmatprep.subr.mxu0 0.0
        %5099 = vmatpush1.msra.mxu0 0.0
        %5100 = vmatprep.subr.mxu0 0.0
        %5101 = vmatpush1.msra.mxu0 0.0
        %5102 = vmatprep.subr.mxu0 0.0
        %5103 = vmatpush1.msra.mxu0 0.0
        %5104 = vmatprep.subr.mxu0 0.0
        %5105 = vmatpush1.msra.mxu0 0.0
        %5106 = vmatprep.subr.mxu0 0.0
        %5107 = vmatpush1.msra.mxu0 0.0
        %5108 = vmatprep.subr.mxu0 0.0
        %5109 = vmatpush1.msra.mxu0 0.0
        %5110 = vmatprep.subr.mxu0 0.0
        %5111 = vmatpush1.msra.mxu0 0.0
        %5112 = vmatprep.mubr.f32.mxu0 0.0
        %v5113 = vand.u32 %v5030, 4294901760
        %v5114 = vsub.f32 %v5030, %v5113
        %v5115 = vand.u32 %v5114, 4294901760
        %v5116 = vsub.f32 %v5114, %v5115
        %v5117 = vand.u32 %v5116, 4294901760
        %5118 = vmatmul.mubr.f32.gmra.mrb[0].mxu0 %v5117
        %v5119 = vpop.f32.mrb[0].mxu0
        %v5120 = vadd.f32 0.0, %v5119
        %v5121 = vpop.f32.mrb[0].mxu0
        %5122 = vmatprep.mubr.f32.mxu0 0.0
        %v5123 = vand.u32 %v5031, 4294901760
        %v5124 = vsub.f32 %v5031, %v5123
        %v5125 = vand.u32 %v5124, 4294901760
        %v5126 = vsub.f32 %v5124, %v5125
        %v5127 = vand.u32 %v5126, 4294901760
        %5128 = vmatmul.mubr.f32.gmra.mrb[0].mxu0 %v5127
        %v5129 = vpop.f32.mrb[0].mxu0
        %v5130 = vadd.f32 0.0, %v5129
        %v5131 = vpop.f32.mrb[0].mxu0
        %5132 = vdwg.mxu0
        %5133 = vmatprep.subr.mxu0 0.0
        %v5134 = vand.u32 %v1445, 4294901760
        %v5135 = vsub.f32 %v1445, %v5134
        %v5136 = vand.u32 %v5135, 4294901760
        %v5137 = vsub.f32 %v5135, %v5136
        %v5138 = vand.u32 %v5137, 4294901760
        %5139 = vmatpush1.msra.mxu0 %v5138
        %5140 = vmatprep.subr.mxu0 0.0
        %v5141 = vand.u32 %v1446, 4294901760
        %v5142 = vsub.f32 %v1446, %v5141
        %v5143 = vand.u32 %v5142, 4294901760
        %v5144 = vsub.f32 %v5142, %v5143
        %v5145 = vand.u32 %v5144, 4294901760
        %5146 = vmatpush1.msra.mxu0 %v5145
        %5147 = vmatprep.subr.mxu0 0.0
        %v5148 = vand.u32 %v1447, 4294901760
        %v5149 = vsub.f32 %v1447, %v5148
        %v5150 = vand.u32 %v5149, 4294901760
        %v5151 = vsub.f32 %v5149, %v5150
        %v5152 = vand.u32 %v5151, 4294901760
        %5153 = vmatpush1.msra.mxu0 %v5152
        %5154 = vmatprep.subr.mxu0 0.0
        %v5155 = vand.u32 %v1448, 4294901760
        %v5156 = vsub.f32 %v1448, %v5155
        %v5157 = vand.u32 %v5156, 4294901760
        %v5158 = vsub.f32 %v5156, %v5157
        %v5159 = vand.u32 %v5158, 4294901760
        %5160 = vmatpush1.msra.mxu0 %v5159
        %5161 = vmatprep.subr.mxu0 0.0
        %v5162 = vand.u32 %v1449, 4294901760
        %v5163 = vsub.f32 %v1449, %v5162
        %v5164 = vand.u32 %v5163, 4294901760
        %v5165 = vsub.f32 %v5163, %v5164
        %v5166 = vand.u32 %v5165, 4294901760
        %5167 = vmatpush1.msra.mxu0 %v5166
        %5168 = vmatprep.subr.mxu0 0.0
        %v5169 = vand.u32 %v1450, 4294901760
        %v5170 = vsub.f32 %v1450, %v5169
        %v5171 = vand.u32 %v5170, 4294901760
        %v5172 = vsub.f32 %v5170, %v5171
        %v5173 = vand.u32 %v5172, 4294901760
        %5174 = vmatpush1.msra.mxu0 %v5173
        %5175 = vmatprep.subr.mxu0 0.0
        %v5176 = vand.u32 %v1451, 4294901760
        %v5177 = vsub.f32 %v1451, %v5176
        %v5178 = vand.u32 %v5177, 4294901760
        %v5179 = vsub.f32 %v5177, %v5178
        %v5180 = vand.u32 %v5179, 4294901760
        %5181 = vmatpush1.msra.mxu0 %v5180
        %5182 = vmatprep.subr.mxu0 0.0
        %v5183 = vand.u32 %v1452, 4294901760
        %v5184 = vsub.f32 %v1452, %v5183
        %v5185 = vand.u32 %v5184, 4294901760
        %v5186 = vsub.f32 %v5184, %v5185
        %v5187 = vand.u32 %v5186, 4294901760
        %5188 = vmatpush1.msra.mxu0 %v5187
        %5189 = vmatprep.subr.mxu0 0.0
        %v5190 = vand.u32 %v1453, 4294901760
        %v5191 = vsub.f32 %v1453, %v5190
        %v5192 = vand.u32 %v5191, 4294901760
        %v5193 = vsub.f32 %v5191, %v5192
        %v5194 = vand.u32 %v5193, 4294901760
        %5195 = vmatpush1.msra.mxu0 %v5194
        %5196 = vmatprep.subr.mxu0 0.0
        %v5197 = vand.u32 %v1454, 4294901760
        %v5198 = vsub.f32 %v1454, %v5197
        %v5199 = vand.u32 %v5198, 4294901760
        %v5200 = vsub.f32 %v5198, %v5199
        %v5201 = vand.u32 %v5200, 4294901760
        %5202 = vmatpush1.msra.mxu0 %v5201
        %5203 = vmatprep.subr.mxu0 0.0
        %v5204 = vand.u32 %v1455, 4294901760
        %v5205 = vsub.f32 %v1455, %v5204
        %v5206 = vand.u32 %v5205, 4294901760
        %v5207 = vsub.f32 %v5205, %v5206
        %v5208 = vand.u32 %v5207, 4294901760
        %5209 = vmatpush1.msra.mxu0 %v5208
        %5210 = vmatprep.subr.mxu0 0.0
        %v5211 = vand.u32 %v1456, 4294901760
        %v5212 = vsub.f32 %v1456, %v5211
        %v5213 = vand.u32 %v5212, 4294901760
        %v5214 = vsub.f32 %v5212, %v5213
        %v5215 = vand.u32 %v5214, 4294901760
        %5216 = vmatpush1.msra.mxu0 %v5215
        %5217 = vmatprep.subr.mxu0 0.0
        %v5218 = vand.u32 %v1457, 4294901760
        %v5219 = vsub.f32 %v1457, %v5218
        %v5220 = vand.u32 %v5219, 4294901760
        %v5221 = vsub.f32 %v5219, %v5220
        %v5222 = vand.u32 %v5221, 4294901760
        %5223 = vmatpush1.msra.mxu0 %v5222
        %5224 = vmatprep.subr.mxu0 0.0
        %v5225 = vand.u32 %v1458, 4294901760
        %v5226 = vsub.f32 %v1458, %v5225
        %v5227 = vand.u32 %v5226, 4294901760
        %v5228 = vsub.f32 %v5226, %v5227
        %v5229 = vand.u32 %v5228, 4294901760
        %5230 = vmatpush1.msra.mxu0 %v5229
        %5231 = vmatprep.subr.mxu0 0.0
        %v5232 = vand.u32 %v1459, 4294901760
        %v5233 = vsub.f32 %v1459, %v5232
        %v5234 = vand.u32 %v5233, 4294901760
        %v5235 = vsub.f32 %v5233, %v5234
        %v5236 = vand.u32 %v5235, 4294901760
        %5237 = vmatpush1.msra.mxu0 %v5236
        %5238 = vmatprep.subr.mxu0 0.0
        %v5239 = vand.u32 %v1460, 4294901760
        %v5240 = vsub.f32 %v1460, %v5239
        %v5241 = vand.u32 %v5240, 4294901760
        %v5242 = vsub.f32 %v5240, %v5241
        %v5243 = vand.u32 %v5242, 4294901760
        %5244 = vmatpush1.msra.mxu0 %v5243
        %5245 = vmatprep.subr.mxu0 0.0
        %5246 = vmatpush1.msra.mxu0 0.0
        %5247 = vmatprep.subr.mxu0 0.0
        %5248 = vmatpush1.msra.mxu0 0.0
        %5249 = vmatprep.subr.mxu0 0.0
        %5250 = vmatpush1.msra.mxu0 0.0
        %5251 = vmatprep.subr.mxu0 0.0
        %5252 = vmatpush1.msra.mxu0 0.0
        %5253 = vmatprep.subr.mxu0 0.0
        %5254 = vmatpush1.msra.mxu0 0.0
        %5255 = vmatprep.subr.mxu0 0.0
        %5256 = vmatpush1.msra.mxu0 0.0
        %5257 = vmatprep.subr.mxu0 0.0
        %5258 = vmatpush1.msra.mxu0 0.0
        %5259 = vmatprep.subr.mxu0 0.0
        %5260 = vmatpush1.msra.mxu0 0.0
        %5261 = vmatprep.subr.mxu0 0.0
        %5262 = vmatpush1.msra.mxu0 0.0
        %5263 = vmatprep.subr.mxu0 0.0
        %5264 = vmatpush1.msra.mxu0 0.0
        %5265 = vmatprep.subr.mxu0 0.0
        %5266 = vmatpush1.msra.mxu0 0.0
        %5267 = vmatprep.subr.mxu0 0.0
        %5268 = vmatpush1.msra.mxu0 0.0
        %5269 = vmatprep.subr.mxu0 0.0
        %5270 = vmatpush1.msra.mxu0 0.0
        %5271 = vmatprep.subr.mxu0 0.0
        %5272 = vmatpush1.msra.mxu0 0.0
        %5273 = vmatprep.subr.mxu0 0.0
        %5274 = vmatpush1.msra.mxu0 0.0
        %5275 = vmatprep.subr.mxu0 0.0
        %5276 = vmatpush1.msra.mxu0 0.0
        %5277 = vmatprep.mubr.f32.mxu0 0.0
        %v5278 = vand.u32 %v5030, 4294901760
        %5279 = vmatmul.mubr.f32.gmra.mrb[0].mxu0 %v5278
        %v5280 = vpop.f32.mrb[0].mxu0
        %v5281 = vadd.f32 %v5120, %v5280
        %v5282 = vpop.f32.mrb[0].mxu0
        %5283 = vmatprep.mubr.f32.mxu0 0.0
        %v5284 = vand.u32 %v5031, 4294901760
        %5285 = vmatmul.mubr.f32.gmra.mrb[0].mxu0 %v5284
        %v5286 = vpop.f32.mrb[0].mxu0
        %v5287 = vadd.f32 %v5130, %v5286
        %v5288 = vpop.f32.mrb[0].mxu0
        %5289 = vdwg.mxu0
        %5290 = vmatprep.subr.mxu0 0.0
        %v5291 = vand.u32 %v1445, 4294901760
        %v5292 = vsub.f32 %v1445, %v5291
        %5293 = vmatpush1.msra.mxu0 %v5292
        %5294 = vmatprep.subr.mxu0 0.0
        %v5295 = vand.u32 %v1446, 4294901760
        %v5296 = vsub.f32 %v1446, %v5295
        %5297 = vmatpush1.msra.mxu0 %v5296
        %5298 = vmatprep.subr.mxu0 0.0
        %v5299 = vand.u32 %v1447, 4294901760
        %v5300 = vsub.f32 %v1447, %v5299
        %5301 = vmatpush1.msra.mxu0 %v5300
        %5302 = vmatprep.subr.mxu0 0.0
        %v5303 = vand.u32 %v1448, 4294901760
        %v5304 = vsub.f32 %v1448, %v5303
        %5305 = vmatpush1.msra.mxu0 %v5304
        %5306 = vmatprep.subr.mxu0 0.0
        %v5307 = vand.u32 %v1449, 4294901760
        %v5308 = vsub.f32 %v1449, %v5307
        %5309 = vmatpush1.msra.mxu0 %v5308
        %5310 = vmatprep.subr.mxu0 0.0
        %v5311 = vand.u32 %v1450, 4294901760
        %v5312 = vsub.f32 %v1450, %v5311
        %5313 = vmatpush1.msra.mxu0 %v5312
        %5314 = vmatprep.subr.mxu0 0.0
        %v5315 = vand.u32 %v1451, 4294901760
        %v5316 = vsub.f32 %v1451, %v5315
        %5317 = vmatpush1.msra.mxu0 %v5316
        %5318 = vmatprep.subr.mxu0 0.0
        %v5319 = vand.u32 %v1452, 4294901760
        %v5320 = vsub.f32 %v1452, %v5319
        %5321 = vmatpush1.msra.mxu0 %v5320
        %5322 = vmatprep.subr.mxu0 0.0
        %v5323 = vand.u32 %v1453, 4294901760
        %v5324 = vsub.f32 %v1453, %v5323
        %5325 = vmatpush1.msra.mxu0 %v5324
        %5326 = vmatprep.subr.mxu0 0.0
        %v5327 = vand.u32 %v1454, 4294901760
        %v5328 = vsub.f32 %v1454, %v5327
        %5329 = vmatpush1.msra.mxu0 %v5328
        %5330 = vmatprep.subr.mxu0 0.0
        %v5331 = vand.u32 %v1455, 4294901760
        %v5332 = vsub.f32 %v1455, %v5331
        %5333 = vmatpush1.msra.mxu0 %v5332
        %5334 = vmatprep.subr.mxu0 0.0
        %v5335 = vand.u32 %v1456, 4294901760
        %v5336 = vsub.f32 %v1456, %v5335
        %5337 = vmatpush1.msra.mxu0 %v5336
        %5338 = vmatprep.subr.mxu0 0.0
        %v5339 = vand.u32 %v1457, 4294901760
        %v5340 = vsub.f32 %v1457, %v5339
        %5341 = vmatpush1.msra.mxu0 %v5340
        %5342 = vmatprep.subr.mxu0 0.0
        %v5343 = vand.u32 %v1458, 4294901760
        %v5344 = vsub.f32 %v1458, %v5343
        %5345 = vmatpush1.msra.mxu0 %v5344
        %5346 = vmatprep.subr.mxu0 0.0
        %v5347 = vand.u32 %v1459, 4294901760
        %v5348 = vsub.f32 %v1459, %v5347
        %5349 = vmatpush1.msra.mxu0 %v5348
        %5350 = vmatprep.subr.mxu0 0.0
        %v5351 = vand.u32 %v1460, 4294901760
        %v5352 = vsub.f32 %v1460, %v5351
        %5353 = vmatpush1.msra.mxu0 %v5352
        %5354 = vmatprep.subr.mxu0 0.0
        %5355 = vmatpush1.msra.mxu0 0.0
        %5356 = vmatprep.subr.mxu0 0.0
        %5357 = vmatpush1.msra.mxu0 0.0
        %5358 = vmatprep.subr.mxu0 0.0
        %5359 = vmatpush1.msra.mxu0 0.0
        %5360 = vmatprep.subr.mxu0 0.0
        %5361 = vmatpush1.msra.mxu0 0.0
        %5362 = vmatprep.subr.mxu0 0.0
        %5363 = vmatpush1.msra.mxu0 0.0
        %5364 = vmatprep.subr.mxu0 0.0
        %5365 = vmatpush1.msra.mxu0 0.0
        %5366 = vmatprep.subr.mxu0 0.0
        %5367 = vmatpush1.msra.mxu0 0.0
        %5368 = vmatprep.subr.mxu0 0.0
        %5369 = vmatpush1.msra.mxu0 0.0
        %5370 = vmatprep.subr.mxu0 0.0
        %5371 = vmatpush1.msra.mxu0 0.0
        %5372 = vmatprep.subr.mxu0 0.0
        %5373 = vmatpush1.msra.mxu0 0.0
        %5374 = vmatprep.subr.mxu0 0.0
        %5375 = vmatpush1.msra.mxu0 0.0
        %5376 = vmatprep.subr.mxu0 0.0
        %5377 = vmatpush1.msra.mxu0 0.0
        %5378 = vmatprep.subr.mxu0 0.0
        %5379 = vmatpush1.msra.mxu0 0.0
        %5380 = vmatprep.subr.mxu0 0.0
        %5381 = vmatpush1.msra.mxu0 0.0
        %5382 = vmatprep.subr.mxu0 0.0
        %5383 = vmatpush1.msra.mxu0 0.0
        %5384 = vmatprep.subr.mxu0 0.0
        %5385 = vmatpush1.msra.mxu0 0.0
        %5386 = vmatprep.mubr.f32.mxu0 0.0
        %v5387 = vand.u32 %v5030, 4294901760
        %v5388 = vsub.f32 %v5030, %v5387
        %5389 = vmatmul.mubr.f32.gmra.mrb[0].mxu0 %v5388
        %v5390 = vpop.f32.mrb[0].mxu0
        %v5391 = vadd.f32 %v5281, %v5390
        %v5392 = vpop.f32.mrb[0].mxu0
        %5393 = vmatprep.mubr.f32.mxu0 0.0
        %v5394 = vand.u32 %v5031, 4294901760
        %v5395 = vsub.f32 %v5031, %v5394
        %5396 = vmatmul.mubr.f32.gmra.mrb[0].mxu0 %v5395
        %v5397 = vpop.f32.mrb[0].mxu0
        %v5398 = vadd.f32 %v5287, %v5397
        %v5399 = vpop.f32.mrb[0].mxu0
        %5400 = vdwg.mxu0
        %5401 = vmatprep.subr.mxu0 0.0
        %v5402 = vand.u32 %v1445, 4294901760
        %5403 = vmatpush1.msra.mxu0 %v5402
        %5404 = vmatprep.subr.mxu0 0.0
        %v5405 = vand.u32 %v1446, 4294901760
        %5406 = vmatpush1.msra.mxu0 %v5405
        %5407 = vmatprep.subr.mxu0 0.0
        %v5408 = vand.u32 %v1447, 4294901760
        %5409 = vmatpush1.msra.mxu0 %v5408
        %5410 = vmatprep.subr.mxu0 0.0
        %v5411 = vand.u32 %v1448, 4294901760
        %5412 = vmatpush1.msra.mxu0 %v5411
        %5413 = vmatprep.subr.mxu0 0.0
        %v5414 = vand.u32 %v1449, 4294901760
        %5415 = vmatpush1.msra.mxu0 %v5414
        %5416 = vmatprep.subr.mxu0 0.0
        %v5417 = vand.u32 %v1450, 4294901760
        %5418 = vmatpush1.msra.mxu0 %v5417
        %5419 = vmatprep.subr.mxu0 0.0
        %v5420 = vand.u32 %v1451, 4294901760
        %5421 = vmatpush1.msra.mxu0 %v5420
        %5422 = vmatprep.subr.mxu0 0.0
        %v5423 = vand.u32 %v1452, 4294901760
        %5424 = vmatpush1.msra.mxu0 %v5423
        %5425 = vmatprep.subr.mxu0 0.0
        %v5426 = vand.u32 %v1453, 4294901760
        %5427 = vmatpush1.msra.mxu0 %v5426
        %5428 = vmatprep.subr.mxu0 0.0
        %v5429 = vand.u32 %v1454, 4294901760
        %5430 = vmatpush1.msra.mxu0 %v5429
        %5431 = vmatprep.subr.mxu0 0.0
        %v5432 = vand.u32 %v1455, 4294901760
        %5433 = vmatpush1.msra.mxu0 %v5432
        %5434 = vmatprep.subr.mxu0 0.0
        %v5435 = vand.u32 %v1456, 4294901760
        %5436 = vmatpush1.msra.mxu0 %v5435
        %5437 = vmatprep.subr.mxu0 0.0
        %v5438 = vand.u32 %v1457, 4294901760
        %5439 = vmatpush1.msra.mxu0 %v5438
        %5440 = vmatprep.subr.mxu0 0.0
        %v5441 = vand.u32 %v1458, 4294901760
        %5442 = vmatpush1.msra.mxu0 %v5441
        %5443 = vmatprep.subr.mxu0 0.0
        %v5444 = vand.u32 %v1459, 4294901760
        %5445 = vmatpush1.msra.mxu0 %v5444
        %5446 = vmatprep.subr.mxu0 0.0
        %v5447 = vand.u32 %v1460, 4294901760
        %5448 = vmatpush1.msra.mxu0 %v5447
        %5449 = vmatprep.subr.mxu0 0.0
        %5450 = vmatpush1.msra.mxu0 0.0
        %5451 = vmatprep.subr.mxu0 0.0
        %5452 = vmatpush1.msra.mxu0 0.0
        %5453 = vmatprep.subr.mxu0 0.0
        %5454 = vmatpush1.msra.mxu0 0.0
        %5455 = vmatprep.subr.mxu0 0.0
        %5456 = vmatpush1.msra.mxu0 0.0
        %5457 = vmatprep.subr.mxu0 0.0
        %5458 = vmatpush1.msra.mxu0 0.0
        %5459 = vmatprep.subr.mxu0 0.0
        %5460 = vmatpush1.msra.mxu0 0.0
        %5461 = vmatprep.subr.mxu0 0.0
        %5462 = vmatpush1.msra.mxu0 0.0
        %5463 = vmatprep.subr.mxu0 0.0
        %5464 = vmatpush1.msra.mxu0 0.0
        %5465 = vmatprep.subr.mxu0 0.0
        %5466 = vmatpush1.msra.mxu0 0.0
        %5467 = vmatprep.subr.mxu0 0.0
        %5468 = vmatpush1.msra.mxu0 0.0
        %5469 = vmatprep.subr.mxu0 0.0
        %5470 = vmatpush1.msra.mxu0 0.0
        %5471 = vmatprep.subr.mxu0 0.0
        %5472 = vmatpush1.msra.mxu0 0.0
        %5473 = vmatprep.subr.mxu0 0.0
        %5474 = vmatpush1.msra.mxu0 0.0
        %5475 = vmatprep.subr.mxu0 0.0
        %5476 = vmatpush1.msra.mxu0 0.0
        %5477 = vmatprep.subr.mxu0 0.0
        %5478 = vmatpush1.msra.mxu0 0.0
        %5479 = vmatprep.subr.mxu0 0.0
        %5480 = vmatpush1.msra.mxu0 0.0
        %5481 = vmatprep.mubr.f32.mxu0 0.0
        %v5482 = vand.u32 %v5030, 4294901760
        %v5483 = vsub.f32 %v5030, %v5482
        %v5484 = vand.u32 %v5483, 4294901760
        %5485 = vmatmul.mubr.f32.gmra.mrb[0].mxu0 %v5484
        %v5486 = vpop.f32.mrb[0].mxu0
        %v5487 = vadd.f32 %v5391, %v5486
        %v5488 = vpop.f32.mrb[0].mxu0
        %5489 = vmatprep.mubr.f32.mxu0 0.0
        %v5490 = vand.u32 %v5031, 4294901760
        %v5491 = vsub.f32 %v5031, %v5490
        %v5492 = vand.u32 %v5491, 4294901760
        %5493 = vmatmul.mubr.f32.gmra.mrb[0].mxu0 %v5492
        %v5494 = vpop.f32.mrb[0].mxu0
        %v5495 = vadd.f32 %v5398, %v5494
        %v5496 = vpop.f32.mrb[0].mxu0
        %5497 = vdwg.mxu0
        %5498 = vmatprep.subr.mxu0 0.0
        %v5499 = vand.u32 %v1445, 4294901760
        %v5500 = vsub.f32 %v1445, %v5499
        %v5501 = vand.u32 %v5500, 4294901760
        %5502 = vmatpush1.msra.mxu0 %v5501
        %5503 = vmatprep.subr.mxu0 0.0
        %v5504 = vand.u32 %v1446, 4294901760
        %v5505 = vsub.f32 %v1446, %v5504
        %v5506 = vand.u32 %v5505, 4294901760
        %5507 = vmatpush1.msra.mxu0 %v5506
        %5508 = vmatprep.subr.mxu0 0.0
        %v5509 = vand.u32 %v1447, 4294901760
        %v5510 = vsub.f32 %v1447, %v5509
        %v5511 = vand.u32 %v5510, 4294901760
        %5512 = vmatpush1.msra.mxu0 %v5511
        %5513 = vmatprep.subr.mxu0 0.0
        %v5514 = vand.u32 %v1448, 4294901760
        %v5515 = vsub.f32 %v1448, %v5514
        %v5516 = vand.u32 %v5515, 4294901760
        %5517 = vmatpush1.msra.mxu0 %v5516
        %5518 = vmatprep.subr.mxu0 0.0
        %v5519 = vand.u32 %v1449, 4294901760
        %v5520 = vsub.f32 %v1449, %v5519
        %v5521 = vand.u32 %v5520, 4294901760
        %5522 = vmatpush1.msra.mxu0 %v5521
        %5523 = vmatprep.subr.mxu0 0.0
        %v5524 = vand.u32 %v1450, 4294901760
        %v5525 = vsub.f32 %v1450, %v5524
        %v5526 = vand.u32 %v5525, 4294901760
        %5527 = vmatpush1.msra.mxu0 %v5526
        %5528 = vmatprep.subr.mxu0 0.0
        %v5529 = vand.u32 %v1451, 4294901760
        %v5530 = vsub.f32 %v1451, %v5529
        %v5531 = vand.u32 %v5530, 4294901760
        %5532 = vmatpush1.msra.mxu0 %v5531
        %5533 = vmatprep.subr.mxu0 0.0
        %v5534 = vand.u32 %v1452, 4294901760
        %v5535 = vsub.f32 %v1452, %v5534
        %v5536 = vand.u32 %v5535, 4294901760
        %5537 = vmatpush1.msra.mxu0 %v5536
        %5538 = vmatprep.subr.mxu0 0.0
        %v5539 = vand.u32 %v1453, 4294901760
        %v5540 = vsub.f32 %v1453, %v5539
        %v5541 = vand.u32 %v5540, 4294901760
        %5542 = vmatpush1.msra.mxu0 %v5541
        %5543 = vmatprep.subr.mxu0 0.0
        %v5544 = vand.u32 %v1454, 4294901760
        %v5545 = vsub.f32 %v1454, %v5544
        %v5546 = vand.u32 %v5545, 4294901760
        %5547 = vmatpush1.msra.mxu0 %v5546
        %5548 = vmatprep.subr.mxu0 0.0
        %v5549 = vand.u32 %v1455, 4294901760
        %v5550 = vsub.f32 %v1455, %v5549
        %v5551 = vand.u32 %v5550, 4294901760
        %5552 = vmatpush1.msra.mxu0 %v5551
        %5553 = vmatprep.subr.mxu0 0.0
        %v5554 = vand.u32 %v1456, 4294901760
        %v5555 = vsub.f32 %v1456, %v5554
        %v5556 = vand.u32 %v5555, 4294901760
        %5557 = vmatpush1.msra.mxu0 %v5556
        %5558 = vmatprep.subr.mxu0 0.0
        %v5559 = vand.u32 %v1457, 4294901760
        %v5560 = vsub.f32 %v1457, %v5559
        %v5561 = vand.u32 %v5560, 4294901760
        %5562 = vmatpush1.msra.mxu0 %v5561
        %5563 = vmatprep.subr.mxu0 0.0
        %v5564 = vand.u32 %v1458, 4294901760
        %v5565 = vsub.f32 %v1458, %v5564
        %v5566 = vand.u32 %v5565, 4294901760
        %5567 = vmatpush1.msra.mxu0 %v5566
        %5568 = vmatprep.subr.mxu0 0.0
        %v5569 = vand.u32 %v1459, 4294901760
        %v5570 = vsub.f32 %v1459, %v5569
        %v5571 = vand.u32 %v5570, 4294901760
        %5572 = vmatpush1.msra.mxu0 %v5571
        %5573 = vmatprep.subr.mxu0 0.0
        %v5574 = vand.u32 %v1460, 4294901760
        %v5575 = vsub.f32 %v1460, %v5574
        %v5576 = vand.u32 %v5575, 4294901760
        %5577 = vmatpush1.msra.mxu0 %v5576
        %5578 = vmatprep.subr.mxu0 0.0
        %5579 = vmatpush1.msra.mxu0 0.0
        %5580 = vmatprep.subr.mxu0 0.0
        %5581 = vmatpush1.msra.mxu0 0.0
        %5582 = vmatprep.subr.mxu0 0.0
        %5583 = vmatpush1.msra.mxu0 0.0
        %5584 = vmatprep.subr.mxu0 0.0
        %5585 = vmatpush1.msra.mxu0 0.0
        %5586 = vmatprep.subr.mxu0 0.0
        %5587 = vmatpush1.msra.mxu0 0.0
        %5588 = vmatprep.subr.mxu0 0.0
        %5589 = vmatpush1.msra.mxu0 0.0
        %5590 = vmatprep.subr.mxu0 0.0
        %5591 = vmatpush1.msra.mxu0 0.0
        %5592 = vmatprep.subr.mxu0 0.0
        %5593 = vmatpush1.msra.mxu0 0.0
        %5594 = vmatprep.subr.mxu0 0.0
        %5595 = vmatpush1.msra.mxu0 0.0
        %5596 = vmatprep.subr.mxu0 0.0
        %5597 = vmatpush1.msra.mxu0 0.0
        %5598 = vmatprep.subr.mxu0 0.0
        %5599 = vmatpush1.msra.mxu0 0.0
        %5600 = vmatprep.subr.mxu0 0.0
        %5601 = vmatpush1.msra.mxu0 0.0
        %5602 = vmatprep.subr.mxu0 0.0
        %5603 = vmatpush1.msra.mxu0 0.0
        %5604 = vmatprep.subr.mxu0 0.0
        %5605 = vmatpush1.msra.mxu0 0.0
        %5606 = vmatprep.subr.mxu0 0.0
        %5607 = vmatpush1.msra.mxu0 0.0
        %5608 = vmatprep.subr.mxu0 0.0
        %5609 = vmatpush1.msra.mxu0 0.0
        %5610 = vmatprep.mubr.f32.mxu0 0.0
        %v5611 = vand.u32 %v5030, 4294901760
        %5612 = vmatmul.mubr.f32.gmra.mrb[0].mxu0 %v5611
        %v5613 = vpop.f32.mrb[0].mxu0
        %v5614 = vadd.f32 %v5487, %v5613
        %v5615 = vpop.f32.mrb[0].mxu0
        %5616 = vmatprep.mubr.f32.mxu0 0.0
        %v5617 = vand.u32 %v5031, 4294901760
        %5618 = vmatmul.mubr.f32.gmra.mrb[0].mxu0 %v5617
        %v5619 = vpop.f32.mrb[0].mxu0
        %v5620 = vadd.f32 %v5495, %v5619
        %v5621 = vpop.f32.mrb[0].mxu0
        %5622 = vdwg.mxu0
        %5623 = vmatprep.subr.mxu0 0.0
        %v5624 = vand.u32 %v1445, 4294901760
        %5625 = vmatpush1.msra.mxu0 %v5624
        %5626 = vmatprep.subr.mxu0 0.0
        %v5627 = vand.u32 %v1446, 4294901760
        %5628 = vmatpush1.msra.mxu0 %v5627
        %5629 = vmatprep.subr.mxu0 0.0
        %v5630 = vand.u32 %v1447, 4294901760
        %5631 = vmatpush1.msra.mxu0 %v5630
        %5632 = vmatprep.subr.mxu0 0.0
        %v5633 = vand.u32 %v1448, 4294901760
        %5634 = vmatpush1.msra.mxu0 %v5633
        %5635 = vmatprep.subr.mxu0 0.0
        %v5636 = vand.u32 %v1449, 4294901760
        %5637 = vmatpush1.msra.mxu0 %v5636
        %5638 = vmatprep.subr.mxu0 0.0
        %v5639 = vand.u32 %v1450, 4294901760
        %5640 = vmatpush1.msra.mxu0 %v5639
        %5641 = vmatprep.subr.mxu0 0.0
        %v5642 = vand.u32 %v1451, 4294901760
        %5643 = vmatpush1.msra.mxu0 %v5642
        %5644 = vmatprep.subr.mxu0 0.0
        %v5645 = vand.u32 %v1452, 4294901760
        %5646 = vmatpush1.msra.mxu0 %v5645
        %5647 = vmatprep.subr.mxu0 0.0
        %v5648 = vand.u32 %v1453, 4294901760
        %5649 = vmatpush1.msra.mxu0 %v5648
        %5650 = vmatprep.subr.mxu0 0.0
        %v5651 = vand.u32 %v1454, 4294901760
        %5652 = vmatpush1.msra.mxu0 %v5651
        %5653 = vmatprep.subr.mxu0 0.0
        %v5654 = vand.u32 %v1455, 4294901760
        %5655 = vmatpush1.msra.mxu0 %v5654
        %5656 = vmatprep.subr.mxu0 0.0
        %v5657 = vand.u32 %v1456, 4294901760
        %5658 = vmatpush1.msra.mxu0 %v5657
        %5659 = vmatprep.subr.mxu0 0.0
        %v5660 = vand.u32 %v1457, 4294901760
        %5661 = vmatpush1.msra.mxu0 %v5660
        %5662 = vmatprep.subr.mxu0 0.0
        %v5663 = vand.u32 %v1458, 4294901760
        %5664 = vmatpush1.msra.mxu0 %v5663
        %5665 = vmatprep.subr.mxu0 0.0
        %v5666 = vand.u32 %v1459, 4294901760
        %5667 = vmatpush1.msra.mxu0 %v5666
        %5668 = vmatprep.subr.mxu0 0.0
        %v5669 = vand.u32 %v1460, 4294901760
        %5670 = vmatpush1.msra.mxu0 %v5669
        %5671 = vmatprep.subr.mxu0 0.0
        %5672 = vmatpush1.msra.mxu0 0.0
        %5673 = vmatprep.subr.mxu0 0.0
        %5674 = vmatpush1.msra.mxu0 0.0
        %5675 = vmatprep.subr.mxu0 0.0
        %5676 = vmatpush1.msra.mxu0 0.0
        %5677 = vmatprep.subr.mxu0 0.0
        %5678 = vmatpush1.msra.mxu0 0.0
        %5679 = vmatprep.subr.mxu0 0.0
        %5680 = vmatpush1.msra.mxu0 0.0
        %5681 = vmatprep.subr.mxu0 0.0
        %5682 = vmatpush1.msra.mxu0 0.0
        %5683 = vmatprep.subr.mxu0 0.0
        %5684 = vmatpush1.msra.mxu0 0.0
        %5685 = vmatprep.subr.mxu0 0.0
        %5686 = vmatpush1.msra.mxu0 0.0
        %5687 = vmatprep.subr.mxu0 0.0
        %5688 = vmatpush1.msra.mxu0 0.0
        %5689 = vmatprep.subr.mxu0 0.0
        %5690 = vmatpush1.msra.mxu0 0.0
        %5691 = vmatprep.subr.mxu0 0.0
        %5692 = vmatpush1.msra.mxu0 0.0
        %5693 = vmatprep.subr.mxu0 0.0
        %5694 = vmatpush1.msra.mxu0 0.0
        %5695 = vmatprep.subr.mxu0 0.0
        %5696 = vmatpush1.msra.mxu0 0.0
        %5697 = vmatprep.subr.mxu0 0.0
        %5698 = vmatpush1.msra.mxu0 0.0
        %5699 = vmatprep.subr.mxu0 0.0
        %5700 = vmatpush1.msra.mxu0 0.0
        %5701 = vmatprep.subr.mxu0 0.0
        %5702 = vmatpush1.msra.mxu0 0.0
        %5703 = vmatprep.mubr.f32.mxu0 0.0
        %v5704 = vand.u32 %v5030, 4294901760
        %5705 = vmatmul.mubr.f32.gmra.mrb[0].mxu0 %v5704
        %v5706 = vpop.f32.mrb[0].mxu0
        %v5707 = vadd.f32 %v5614, %v5706
        %v5708 = vpop.f32.mrb[0].mxu0
        %5709 = vmatprep.mubr.f32.mxu0 0.0
        %v5710 = vand.u32 %v5031, 4294901760
        %5711 = vmatmul.mubr.f32.gmra.mrb[0].mxu0 %v5710
        %v5712 = vpop.f32.mrb[0].mxu0
        %v5713 = vadd.f32 %v5620, %v5712
        %v5714 = vpop.f32.mrb[0].mxu0
        %5715 = vdwg.mxu0
        %v5716 = vadd.f32 %v5028, %v5707
        %v5717 = vadd.f32 %v5029, %v5713
        %v5718 = vld [vmem:[#allocation4] sm:$0xff]
        %v5719 = vld [vmem:[#allocation4 + $0x8] sm:$0xff]
        %v5720 = vmul.f32 %v2159, %v5718
        %v5721 = vmul.f32 %v2159, %v5719
        %v5722 = vmul.f32 %v2167, %v5716
        %v5723 = vmul.f32 %v2167, %v5717
        %v5724 = vadd.f32 %v5720, %v5722
        %v5725 = vadd.f32 %v5721, %v5723
        %v5726 = vtanh.pop %v5724
        %v5727 = vtanh.pop %v5725
        %5728 = vst [vmem:[#allocation3] sm:$0xff] %v5726
        %5729 = vst [vmem:[#allocation3 + $0x8] sm:$0xff] %v5727
        %5730 = vst [vmem:[#allocation4] sm:$0xff] %v5724
        %5731 = vst [vmem:[#allocation4 + $0x8] sm:$0xff] %v5725
        %s5732 = scalar_lea.vmem %s406, 80 [#allocation14]
        %5733 = vst [vmem:[%s5732] sm:$0xff] %v5726
        %5734 = vst [vmem:[%s5732 + $0x8] sm:$0xff] %v5727
        %s5735 = scalar_lea.vmem %s413, 80 [#allocation15]
        %5736 = vst [vmem:[%s5735] sm:$0xff] %v5724
        %5737 = vst [vmem:[%s5735 + $0x8] sm:$0xff] %v5725
        %s5738 = sand.u32 %s181, 1
        %s5739 = scalar_lea.sflag [#allocation7], %s5738
        %s5740 = sand.u32 %s181, 1
        %s5741 = smul.addr %s5740, 96
        %s5742 = scalar_lea.vmem [#allocation14], %s5741
        %s5743 = sand.u32 %s207, 1
        %s5744 = scalar_lea.sflag [#allocation16], %s5743
        %s5745 = sand.u32 %s207, 1
        %s5746 = smul.addr %s5745, 96
        %s5747 = scalar_lea.vmem [#allocation15], %s5746
        // Predicated region
        $region65: #{tpu_custom_call.1} parent=43 // pred_check
          %p5748 = pneg %p191
        $region66: #{tpu_custom_call.1} parent=43 // pred_check_branch
          %5750 = sbr.rel (%p5748) target = $region68
        $region67: #{tpu_custom_call.1} parent=43 // pred_region
          %s5752 = ssub.s32 1536, 1536
          %5753 = vsyncadd %s5739, %s5752
          %s5754 = smul.addr %s32, 12
          %s5755 = smul.addr %s5754, 128
          %s5756 = scalar_lea.hbm %s6, %s5755
          %s5757 = sshll.u32 %s5742, 4
          %s5758 = int_to_ptr.vmem [resolvable:$true] %s5757
          %5763 = dma.vmem_to_hbm [thread:$0]  %s5758, 1536, %s5756, %s5739, 128, 128, 8
        $region68: #{tpu_custom_call.1} parent=43 // pred_fallthru
          _
        // Predicated region
        $region69: #{tpu_custom_call.1} parent=43 // pred_check
          %p5764 = pneg %p217
        $region70: #{tpu_custom_call.1} parent=43 // pred_check_branch
          %5766 = sbr.rel (%p5764) target = $region72
        $region71: #{tpu_custom_call.1} parent=43 // pred_region
          %s5768 = ssub.s32 1536, 1536
          %5769 = vsyncadd %s5744, %s5768
          %s5770 = smul.addr %s32, 12
          %s5771 = smul.addr %s5770, 128
          %s5772 = scalar_lea.hbm %s7, %s5771
          %s5773 = sshll.u32 %s5747, 4
          %s5774 = int_to_ptr.vmem [resolvable:$true] %s5773
          %5779 = dma.vmem_to_hbm [thread:$0]  %s5774, 1536, %s5772, %s5744, 128, 128, 8
        $region72: #{tpu_custom_call.1} parent=43 // pred_fallthru
          _
      $region44: #{tpu_custom_call.1} parent=5 // pred_fallthru
        _
      %p5780 = scmp.le.s32.totalorder 2, %s27
      // Predicated region
      $region73: #{tpu_custom_call.1} parent=5 // pred_check
        %p5781 = pneg %p5780
      $region74: #{tpu_custom_call.1} parent=5 // pred_check_branch
        %5783 = sbr.rel (%p5781) target = $region76
      $region75: #{tpu_custom_call.1} parent=5 // pred_region
        %s5784 = ssub.s32 %s27, 2
        // Predicated region
        $region77: #{tpu_custom_call.1} parent=75 // pred_check
          %p5785 = pneg %p197
        $region78: #{tpu_custom_call.1} parent=75 // pred_check_branch
          %5787 = sbr.rel (%p5785) target = $region80
        $region79: #{tpu_custom_call.1} parent=75 // pred_region
          %s5788 = sand.u32 %s182, 1
          %s5789 = scalar_lea.sflag [#allocation7], %s5788
          %s5790 = sand.u32 %s182, 1
          %s5791 = smul.addr %s5790, 96
          %s5792 = scalar_lea.vmem [#allocation14], %s5791
          %5793 = dma.done %s5789, 1536
        $region80: #{tpu_custom_call.1} parent=75 // pred_fallthru
          _
        // Predicated region
        $region81: #{tpu_custom_call.1} parent=75 // pred_check
          %p5794 = pneg %p223
        $region82: #{tpu_custom_call.1} parent=75 // pred_check_branch
          %5796 = sbr.rel (%p5794) target = $region84
        $region83: #{tpu_custom_call.1} parent=75 // pred_region
          %s5797 = sand.u32 %s208, 1
          %s5798 = scalar_lea.sflag [#allocation16], %s5797
          %s5799 = sand.u32 %s208, 1
          %s5800 = smul.addr %s5799, 96
          %s5801 = scalar_lea.vmem [#allocation15], %s5800
          %5802 = dma.done %s5798, 1536
        $region84: #{tpu_custom_call.1} parent=75 // pred_fallthru
          _
      $region76: #{tpu_custom_call.1} parent=5 // pred_fallthru
        _
    $region6: #{tpu_custom_call.1} parent=1 // loop_footer
      %s31 = sadd.s32 1, %s27
    $region7: #{tpu_custom_call.1} parent=1 // loop_footer_branch
      %26 = sbr.rel target = $region3
    $region8: #{tpu_custom_call.1} parent=1 // loop_exit
      _
    %5803 = vsyncpa [#allocation6], 1
    %s5804 = scalar_lea.sflag [#allocation6], 1
    %5805 = vsyncpa %s5804, 1
    %5806 = vsyncpa [#allocation9], 1
    %5807 = vsyncpa [#allocation12], 1
    %s5808 = scalar_lea.sflag [#allocation12], 1
    %5809 = vsyncpa %s5808, 1
    %5810 = vsyncpa [#allocation7], 1
    %s5811 = scalar_lea.sflag [#allocation7], 1
    %5812 = vsyncpa %s5811, 1
    %5813 = vsyncpa [#allocation16], 1
    %s5814 = scalar_lea.sflag [#allocation16], 1
    %5815 = vsyncpa %s5814, 1

</llo_original>
